<compile_context>
chip_gen: v7x
topology: tpu7x:2x2x1
jax: 0.10.0
libtpu: 0.0.40
codegen_flags: <defaults>
</compile_context>

<pallas_src>
import math

import jax
import jax.numpy as jnp
from jax.experimental import pallas as pl
from jax.experimental.pallas import tpu as pltpu


ENC_PACK_ROWS = 8    # [attn_b, l2_b, ln1_g, ln1_b, ln2_g, ln2_b, l2_scale, pad]
DEC_PACK_ROWS = 16   # [sa_b, ca_b, l2_b, ln1_g, ln1_b, ln2_g, ln2_b, ln3_g, ln3_b, l2_scale, pad..]


# ----------------------------- shared math helpers ----------------------------

def _silu(v):
    return v * jax.nn.sigmoid(v)


def _layernorm(v, g, b, eps=1e-5):
    m = jnp.mean(v, axis=-1, keepdims=True)
    var = jnp.mean((v - m) ** 2, axis=-1, keepdims=True)
    return (v - m) * jax.lax.rsqrt(var + eps) * g + b


# ------------------------------ encoder kernel --------------------------------
# grid = (batch_tiles, num_layers): one post-norm TransformerEncoderLayer / step.

def encoder_kernel(x_ref, win_ref, bin_ref,
                   aw_ref, l1q_ref, l2q_ref,
                   vecE_ref, vecF_ref,
                   wh_ref, bh_ref,
                   mu_ref, ls_ref, ld_ref, scale_ref, df_ref,
                   h_ref):
    layer = pl.program_id(1)

    @pl.when(layer == 0)
    def _():
        # x -> silu(encoder_input_fc(x))
        h_ref[...] = _silu(
            jnp.dot(x_ref[...].astype(jnp.bfloat16), win_ref[...],
                    preferred_element_type=jnp.float32) + bin_ref[...])

    packE = vecE_ref[...]                     # (ENC_PACK_ROWS, E) f32
    packF = vecF_ref[...]                     # (2, ff) f32
    ab, l2b = packE[0:1], packE[1:2]
    ln1g, ln1b = packE[2:3], packE[3:4]
    ln2g, ln2b = packE[4:5], packE[5:6]
    l2s = packE[6:7]
    l1b, l1s = packF[0:1], packF[1:2]

    h = h_ref[...]
    # self-attention with seq_len == 1: pre-fused out_proj(V(h)), bf16 weights
    attn = jnp.dot(h.astype(jnp.bfloat16), aw_ref[...],
                   preferred_element_type=jnp.float32) + ab
    h = _layernorm(h + attn, ln1g, ln1b)
    # relu feed-forward; int8 weights, per-channel scale folded into f32 accumulator
    ff = jnp.maximum(
        jnp.dot(h, l1q_ref[...].astype(jnp.float32),
                preferred_element_type=jnp.float32) * l1s + l1b, 0.0)
    ff = jnp.dot(ff, l2q_ref[...].astype(jnp.float32),
                 preferred_element_type=jnp.float32) * l2s + l2b
    h = _layernorm(h + ff, ln2g, ln2b)
    h_ref[...] = h

    @pl.when(layer == pl.num_programs(1) - 1)
    def _():
        # fused [mu | log_scale | log_df] head + in-kernel epilogue (EUP ops free)
        heads = jnp.dot(h.astype(jnp.bfloat16), wh_ref[...],
                        preferred_element_type=jnp.float32) + bh_ref[...]
        D = mu_ref.shape[-1]
        ls = heads[:, D:2 * D]
        ld = heads[:, 2 * D:3 * D]
        mu_ref[...] = heads[:, :D]
        ls_ref[...] = ls
        ld_ref[...] = ld
        scale_ref[...] = jnp.exp(ls)
        df_ref[...] = 3.0 + 27.0 * jax.nn.sigmoid(ld)


# ------------------------------ decoder kernel --------------------------------
# grid = (batch_tiles, num_layers): one post-norm TransformerDecoderLayer / step.

def decoder_kernel(z_ref, wdi_ref, bdi_ref,
                   saw_ref, caw_ref, l1q_ref, l2q_ref,
                   vecE_ref, vecF_ref,
                   wout_ref, bout_ref,
                   recon_ref,
                   mem_ref, h_ref):
    layer = pl.program_id(1)

    @pl.when(layer == 0)
    def _():
        # z -> silu(decoder_input_fc(z)); used both as tgt and memory (seq 1)
        mem0 = _silu(
            jnp.dot(z_ref[...].astype(jnp.bfloat16), wdi_ref[...],
                    preferred_element_type=jnp.float32) + bdi_ref[...])
        h_ref[...] = mem0
        mem_ref[...] = mem0.astype(jnp.bfloat16)   # only ever feeds a bf16 matmul

    packE = vecE_ref[...]                     # (DEC_PACK_ROWS, E) f32
    packF = vecF_ref[...]                     # (2, ff) f32
    sab, cab, l2b = packE[0:1], packE[1:2], packE[2:3]
    ln1g, ln1b = packE[3:4], packE[4:5]
    ln2g, ln2b = packE[5:6], packE[6:7]
    ln3g, ln3b = packE[7:8], packE[8:9]
    l2s = packE[9:10]
    l1b, l1s = packF[0:1], packF[1:2]

    h = h_ref[...]
    # self-attention (seq 1, pre-fused V@O)
    sa = jnp.dot(h.astype(jnp.bfloat16), saw_ref[...],
                 preferred_element_type=jnp.float32) + sab
    h = _layernorm(h + sa, ln1g, ln1b)
    # cross-attention on the single memory token (softmax over 1 key == 1)
    ca = jnp.dot(mem_ref[...], caw_ref[...],
                 preferred_element_type=jnp.float32) + cab
    h = _layernorm(h + ca, ln2g, ln2b)
    # relu feed-forward; int8 weights, per-channel scale folded after the dot
    ff = jnp.maximum(
        jnp.dot(h, l1q_ref[...].astype(jnp.float32),
                preferred_element_type=jnp.float32) * l1s + l1b, 0.0)
    ff = jnp.dot(ff, l2q_ref[...].astype(jnp.float32),
                 preferred_element_type=jnp.float32) * l2s + l2b
    h = _layernorm(h + ff, ln3g, ln3b)
    h_ref[...] = h

    @pl.when(layer == pl.num_programs(1) - 1)
    def _():
        recon_ref[...] = jnp.dot(h.astype(jnp.bfloat16), wout_ref[...],
                                 preferred_element_type=jnp.float32) + bout_ref[...]


# --------------------------- wrappers / pallas_call ---------------------------

def _resident_spec(arr):
    # Whole array, constant block index -> fetched once, stays resident.
    nd = arr.ndim
    return pl.BlockSpec(arr.shape, lambda b, l: (0,) * nd)


def _batch_spec(arr, bt):
    # Tiled along the leading batch dim; constant across the layer axis.
    trail = arr.ndim - 1
    return pl.BlockSpec((bt,) + arr.shape[1:], lambda b, l: (b,) + (0,) * trail)


def _layer_spec(arr):
    # Stream one layer slice of a (L, ...) stacked array per grid step.
    # Squeezed leading dim -> kernel sees the 2-D layer block directly.
    trail = arr.ndim - 1
    return pl.BlockSpec((pl.Squeezed(),) + arr.shape[1:],
                        lambda b, l: (l,) + (0,) * trail)


def _resolve_batch_tile(B, batch_tile):
    bt = B if batch_tile is None else min(batch_tile, B)
    if bt != B:
        assert B % bt == 0 and bt % 8 == 0, "batch_tile must evenly tile the batch (multiple of 8)"
    return bt, B // bt


def encode(x, enc_params, *, num_layers, embed_dim, latent_dim,
           batch_tile=None, vmem_limit_bytes=32 * 1024 * 1024):
    B = x.shape[0]
    bt, nb = _resolve_batch_tile(B, batch_tile)
    (win, bin_, aw, l1q, l2q, vecE, vecF, wh, bh) = enc_params

    in_specs = [
        _batch_spec(x, bt), _resident_spec(win), _resident_spec(bin_),
        _layer_spec(aw), _layer_spec(l1q), _layer_spec(l2q),
        _layer_spec(vecE), _layer_spec(vecF),
        _resident_spec(wh), _resident_spec(bh),
    ]
    out_shape = tuple(jax.ShapeDtypeStruct((B, latent_dim), jnp.float32)
                      for _ in range(5))
    out_specs = tuple(pl.BlockSpec((bt, latent_dim), lambda b, l: (b, 0))
                      for _ in range(5))

    # outputs: mu, log_scale, log_df, scale, df
    return pl.pallas_call(
        encoder_kernel,
        out_shape=out_shape,
        grid_spec=pltpu.PrefetchScalarGridSpec(
            num_scalar_prefetch=0,
            grid=(nb, num_layers),
            in_specs=in_specs,
            out_specs=out_specs,
            scratch_shapes=[pltpu.VMEM((bt, embed_dim), jnp.float32)],
        ),
        compiler_params=pltpu.CompilerParams(
            dimension_semantics=("parallel", "arbitrary"),
            vmem_limit_bytes=vmem_limit_bytes),
    )(x, *enc_params)


def decode(z, dec_params, *, num_layers, embed_dim, feature_dim,
           batch_tile=None, vmem_limit_bytes=32 * 1024 * 1024):
    B = z.shape[0]
    bt, nb = _resolve_batch_tile(B, batch_tile)
    (wdi, bdi, saw, caw, l1q, l2q, vecE, vecF, wout, bout) = dec_params

    in_specs = [
        _batch_spec(z, bt), _resident_spec(wdi), _resident_spec(bdi),
        _layer_spec(saw), _layer_spec(caw), _layer_spec(l1q), _layer_spec(l2q),
        _layer_spec(vecE), _layer_spec(vecF),
        _resident_spec(wout), _resident_spec(bout),
    ]
    return pl.pallas_call(
        decoder_kernel,
        out_shape=jax.ShapeDtypeStruct((B, feature_dim), jnp.float32),
        grid_spec=pltpu.PrefetchScalarGridSpec(
            num_scalar_prefetch=0,
            grid=(nb, num_layers),
            in_specs=in_specs,
            out_specs=pl.BlockSpec((bt, feature_dim), lambda b, l: (b, 0)),
            scratch_shapes=[pltpu.VMEM((bt, embed_dim), jnp.bfloat16),   # memory token
                            pltpu.VMEM((bt, embed_dim), jnp.float32)],  # hidden state
        ),
        compiler_params=pltpu.CompilerParams(
            dimension_semantics=("parallel", "arbitrary"),
            vmem_limit_bytes=vmem_limit_bytes),
    )(z, *dec_params)


def reparameterize(key, mu, scale, df):
    # Student-T rsample: loc + scale * N(0,1) * sqrt(df / Chi2(df)).
    # TODO(synk): torch's gamma rejection sampler has no clean Pallas equivalent;
    # sampling stays in JAX glue between the two pallas_calls.
    kn, kg = jax.random.split(key)
    n = jax.random.normal(kn, mu.shape, jnp.float32)
    chi2 = jax.random.gamma(kg, df * 0.5, dtype=jnp.float32) * 2.0
    return mu + scale * n * jnp.sqrt(df / chi2)


def forward(x, enc_params, dec_params, sample_key, *,
            num_layers, embed_dim, latent_dim, feature_dim, batch_tile=None):
    mu, log_scale, log_df, scale, df = encode(
        x, enc_params, num_layers=num_layers, embed_dim=embed_dim,
        latent_dim=latent_dim, batch_tile=batch_tile)
    z = reparameterize(sample_key, mu, scale, df)
    # TODO(synk): cross-call DMA future (P10) prefetching decoder layer-0 weights
    # behind this glue is not implemented; decoder weights are streamed per layer
    # (double-buffered) by the grid instead.
    recon = decode(z, dec_params, num_layers=num_layers, embed_dim=embed_dim,
                   feature_dim=feature_dim, batch_tile=batch_tile)
    return recon, (mu, log_scale, log_df)


# ----------------------------- parameter creation -----------------------------

def _init_linear(key, in_dim, out_dim):
    kw, kb = jax.random.split(key)
    bound = 1.0 / math.sqrt(in_dim)
    w_t = jax.random.uniform(kw, (in_dim, out_dim), jnp.float32, -bound, bound)
    b = jax.random.uniform(kb, (1, out_dim), jnp.float32, -bound, bound)
    return w_t, b


def _init_ln(E):
    return jnp.ones((1, E), jnp.float32), jnp.zeros((1, E), jnp.float32)


def _fuse_attention(key, E):
    # seq_len == 1  =>  MHA(x) == x @ (W_V @ W_O) + (b_V @ W_O + b_O).
    k1, k2 = jax.random.split(key)
    ipw_t, ipb = _init_linear(k1, E, 3 * E)   # packed QKV in_proj
    ow_t, ob = _init_linear(k2, E, E)
    wv_t = ipw_t[:, 2 * E:]
    bv = ipb[:, 2 * E:]
    return wv_t @ ow_t, bv @ ow_t + ob        # (E, E), (1, E) f32


def _quant_int8(w):
    # Per-output-channel symmetric int8 storage; dequantised in-kernel by folding
    # the scale into the f32 accumulator after the dot.
    amax = jnp.max(jnp.abs(w), axis=0, keepdims=True)
    scale = jnp.maximum(amax, 1e-8) / 127.0
    q = jnp.clip(jnp.round(w / scale), -127, 127).astype(jnp.int8)
    return q, scale                           # (in, out) i8, (1, out) f32


def _pack_rows(rows, n_rows):
    mat = jnp.concatenate(rows, axis=0).astype(jnp.float32)
    pad = n_rows - mat.shape[0]
    if pad:
        mat = jnp.concatenate([mat, jnp.zeros((pad, mat.shape[1]), jnp.float32)], 0)
    return mat


def _bf16(x):
    return x.astype(jnp.bfloat16)


def init_params(key, feature_dim, latent_dim, embed_dim, num_layers, ff_dim, df):
    E, L = embed_dim, num_layers
    keys = iter(jax.random.split(key, 256))

    # ---- encoder ----
    win_t, bin_ = _init_linear(next(keys), feature_dim, E)
    aw, l1q, l2q, vecE, vecF = [], [], [], [], []
    for _ in range(L):
        w_attn, b_attn = _fuse_attention(next(keys), E)
        w1, b1 = _init_linear(next(keys), E, ff_dim)
        w2, b2 = _init_linear(next(keys), ff_dim, E)
        g1, bb1 = _init_ln(E)
        g2, bb2 = _init_ln(E)
        q1, s1 = _quant_int8(w1)
        q2, s2 = _quant_int8(w2)
        aw.append(w_attn); l1q.append(q1); l2q.append(q2)
        vecE.append(_pack_rows([b_attn, b2, g1, bb1, g2, bb2, s2], ENC_PACK_ROWS))
        vecF.append(_pack_rows([b1, s1], 2))

    wmu_t, bmu = _init_linear(next(keys), E, latent_dim)
    wls_t, bls = _init_linear(next(keys), E, latent_dim)
    wld_t = jax.random.uniform(next(keys), (E, latent_dim), jnp.float32, -0.001, 0.001)
    bld = jnp.full((1, latent_dim), math.log(df - 2.0), jnp.float32)

    enc_params = (
        _bf16(win_t), bin_,
        _bf16(jnp.stack(aw)),
        jnp.stack(l1q), jnp.stack(l2q),
        jnp.stack(vecE), jnp.stack(vecF),
        _bf16(jnp.concatenate([wmu_t, wls_t, wld_t], axis=1)),   # (E, 3*latent)
        jnp.concatenate([bmu, bls, bld], axis=1),                # (1, 3*latent)
    )

    # ---- decoder ----
    wdi_t, bdi = _init_linear(next(keys), latent_dim, E)
    saw, caw, l1q, l2q, vecE, vecF = [], [], [], [], [], []
    for _ in range(L):
        ws, bs = _fuse_attention(next(keys), E)
        wc, bc = _fuse_attention(next(keys), E)
        w1, b1 = _init_linear(next(keys), E, ff_dim)
        w2, b2 = _init_linear(next(keys), ff_dim, E)
        g1, bb1 = _init_ln(E)
        g2, bb2 = _init_ln(E)
        g3, bb3 = _init_ln(E)
        q1, s1 = _quant_int8(w1)
        q2, s2 = _quant_int8(w2)
        saw.append(ws); caw.append(wc); l1q.append(q1); l2q.append(q2)
        vecE.append(_pack_rows([bs, bc, b2, g1, bb1, g2, bb2, g3, bb3, s2],
                               DEC_PACK_ROWS))
        vecF.append(_pack_rows([b1, s1], 2))
    wout_t, bout = _init_linear(next(keys), E, feature_dim)

    dec_params = (
        _bf16(wdi_t), bdi,
        _bf16(jnp.stack(saw)), _bf16(jnp.stack(caw)),
        jnp.stack(l1q), jnp.stack(l2q),
        jnp.stack(vecE), jnp.stack(vecF),
        _bf16(wout_t), bout,
    )
    return enc_params, dec_params


# --------------------------- pure-JAX f32 reference ---------------------------
# Uses the SAME effective (fused / dequantised) weights as the kernels; the only
# differences are the kernels' bf16 matmuls -> small tolerance.

def _encode_ref(x, enc_params, latent_dim):
    win, bin_, aw, l1q, l2q, vecE, vecF, wh, bh = enc_params
    h = _silu(x @ win.astype(jnp.float32) + bin_)
    for l in range(aw.shape[0]):
        ab, l2b, ln1g, ln1b, ln2g, ln2b, l2s = (vecE[l, i:i + 1] for i in range(7))
        l1b, l1s = vecF[l, 0:1], vecF[l, 1:2]
        h = _layernorm(h + (h @ aw[l].astype(jnp.float32) + ab), ln1g, ln1b)
        ff = jnp.maximum((h @ l1q[l].astype(jnp.float32)) * l1s + l1b, 0.0)
        ff = (ff @ l2q[l].astype(jnp.float32)) * l2s + l2b
        h = _layernorm(h + ff, ln2g, ln2b)
    heads = h @ wh.astype(jnp.float32) + bh
    D = latent_dim
    return heads[:, :D], heads[:, D:2 * D], heads[:, 2 * D:3 * D]


def _decode_ref(z, dec_params):
    wdi, bdi, saw, caw, l1q, l2q, vecE, vecF, wout, bout = dec_params
    mem = _silu(z @ wdi.astype(jnp.float32) + bdi)
    h = mem
    for l in range(saw.shape[0]):
        sab, cab, l2b = vecE[l, 0:1], vecE[l, 1:2], vecE[l, 2:3]
        ln1g, ln1b = vecE[l, 3:4], vecE[l, 4:5]
        ln2g, ln2b = vecE[l, 5:6], vecE[l, 6:7]
        ln3g, ln3b = vecE[l, 7:8], vecE[l, 8:9]
        l2s = vecE[l, 9:10]
        l1b, l1s = vecF[l, 0:1], vecF[l, 1:2]
        h = _layernorm(h + (h @ saw[l].astype(jnp.float32) + sab), ln1g, ln1b)
        h = _layernorm(h + (mem @ caw[l].astype(jnp.float32) + cab), ln2g, ln2b)
        ff = jnp.maximum((h @ l1q[l].astype(jnp.float32)) * l1s + l1b, 0.0)
        ff = (ff @ l2q[l].astype(jnp.float32)) * l2s + l2b
        h = _layernorm(h + ff, ln3g, ln3b)
    return h @ wout.astype(jnp.float32) + bout


# ------------------------------------ main ------------------------------------

if __name__ == "__main__":
    # Small shapes consistent with the module's forward (x: [batch, feature_dim]).
    B = 8
    feature_dim = 16
    latent_dim = 8
    embed_dim = 64      # module default
    num_layers = 3
    ff_dim = 2048       # PyTorch TransformerEncoder/DecoderLayer default dim_feedforward
    df0 = 5.0
    # nhead=4 is irrelevant at seq_len == 1 (softmax over one key == 1 per head).

    key = jax.random.PRNGKey(0)
    kparam, kx, ksample = jax.random.split(key, 3)
    enc_params, dec_params = init_params(kparam, feature_dim, latent_dim,
                                         embed_dim, num_layers, ff_dim, df0)
    x = jax.random.normal(kx, (B, feature_dim), jnp.float32)

    recon, (mu, log_scale, log_df) = forward(
        x, enc_params, dec_params, ksample,
        num_layers=num_layers, embed_dim=embed_dim,
        latent_dim=latent_dim, feature_dim=feature_dim)
    jax.block_until_ready((recon, mu, log_scale, log_df))

    assert recon.shape == (B, feature_dim)
    assert mu.shape == (B, latent_dim)
    assert log_scale.shape == (B, latent_dim)
    assert log_df.shape == (B, latent_dim)
    assert bool(jnp.all(jnp.isfinite(recon)))
    assert bool(jnp.all(jnp.isfinite(mu)))

    # ---- correctness vs pure-JAX reference on the same effective weights ----
    mu_r, ls_r, ld_r = _encode_ref(x, enc_params, latent_dim)
    assert bool(jnp.allclose(mu, mu_r, atol=5e-2, rtol=5e-2))
    assert bool(jnp.allclose(log_scale, ls_r, atol=5e-2, rtol=5e-2))
    assert bool(jnp.allclose(log_df, ld_r, atol=5e-2, rtol=5e-2))

    scale = jnp.exp(log_scale)
    df = 3.0 + 27.0 * jax.nn.sigmoid(log_df)
    z = reparameterize(ksample, mu, scale, df)
    recon_k = decode(z, dec_params, num_layers=num_layers,
                     embed_dim=embed_dim, feature_dim=feature_dim)
    recon_r = _decode_ref(z, dec_params)
    assert bool(jnp.allclose(recon_k, recon_r, atol=5e-2, rtol=5e-2))
    assert bool(jnp.all(jnp.isfinite(recon_k)))

    print("KERNEL_OK")
</pallas_src>

<mosaic_0001>
module attributes {stable_mosaic.version = 11 : i64} {
  func.func @encoder_kernel(%arg0: i32, %arg1: i32, %arg2: memref<8x16xf32, #tpu.memory_space<vmem>>, %arg3: memref<16x64xbf16, #tpu.memory_space<vmem>>, %arg4: memref<1x64xf32, #tpu.memory_space<vmem>>, %arg5: memref<1x64x64xbf16, #tpu.memory_space<vmem>>, %arg6: memref<1x64x2048xi8, #tpu.memory_space<vmem>>, %arg7: memref<1x2048x64xi8, #tpu.memory_space<vmem>>, %arg8: memref<1x8x64xf32, #tpu.memory_space<vmem>>, %arg9: memref<1x2x2048xf32, #tpu.memory_space<vmem>>, %arg10: memref<64x24xbf16, #tpu.memory_space<vmem>>, %arg11: memref<1x24xf32, #tpu.memory_space<vmem>>, %arg12: memref<8x8xf32, #tpu.memory_space<vmem>>, %arg13: memref<8x8xf32, #tpu.memory_space<vmem>>, %arg14: memref<8x8xf32, #tpu.memory_space<vmem>>, %arg15: memref<8x8xf32, #tpu.memory_space<vmem>>, %arg16: memref<8x8xf32, #tpu.memory_space<vmem>>, %arg17: memref<8x64xf32, #tpu.memory_space<vmem>>) attributes {dimension_semantics = [#tpu.dimension_semantics<parallel>, #tpu.dimension_semantics<arbitrary>], iteration_bounds = array<i64: 1, 3>, scalar_prefetch = 0 : i64, scratch_operands = 1 : i64, tpu.core_type = #tpu.core_type<tc>, window_params = [{transform_indices = @transform_0, window_bounds = array<i64: 8, 16>}, {pipeline_mode = #tpu.pipeline_mode<synchronous>, transform_indices = @transform_1, window_bounds = array<i64: 16, 64>}, {pipeline_mode = #tpu.pipeline_mode<synchronous>, transform_indices = @transform_2, window_bounds = array<i64: 1, 64>}, {transform_indices = @transform_3, window_bounds = array<i64: 1, 64, 64>}, {transform_indices = @transform_4, window_bounds = array<i64: 1, 64, 2048>}, {transform_indices = @transform_5, window_bounds = array<i64: 1, 2048, 64>}, {transform_indices = @transform_6, window_bounds = array<i64: 1, 8, 64>}, {transform_indices = @transform_7, window_bounds = array<i64: 1, 2, 2048>}, {pipeline_mode = #tpu.pipeline_mode<synchronous>, transform_indices = @transform_8, window_bounds = array<i64: 64, 24>}, {pipeline_mode = #tpu.pipeline_mode<synchronous>, transform_indices = @transform_9, window_bounds = array<i64: 1, 24>}, {transform_indices = @transform_10, window_bounds = array<i64: 8, 8>}, {transform_indices = @transform_11, window_bounds = array<i64: 8, 8>}, {transform_indices = @transform_12, window_bounds = array<i64: 8, 8>}, {transform_indices = @transform_13, window_bounds = array<i64: 8, 8>}, {transform_indices = @transform_14, window_bounds = array<i64: 8, 8>}]} {
    %c0_i32 = arith.constant 0 : i32
    %0 = arith.cmpi eq, %arg1, %c0_i32 : i32
    %1 = arith.extui %0 : i1 to i32
    %c0_i32_0 = arith.constant 0 : i32
    %2 = arith.cmpi ne, %1, %c0_i32_0 : i32
    scf.if %2 {
      %c0_33 = arith.constant 0 : index
      %c0_34 = arith.constant 0 : index
      %91 = vector.load %arg2[%c0_33, %c0_34] : memref<8x16xf32, #tpu.memory_space<vmem>>, vector<8x16xf32>
      %92 = arith.truncf %91 : vector<8x16xf32> to vector<8x16xbf16>
      %c0_35 = arith.constant 0 : index
      %c0_36 = arith.constant 0 : index
      %93 = vector.load %arg3[%c0_35, %c0_36] : memref<16x64xbf16, #tpu.memory_space<vmem>>, vector<16x64xbf16>
      %cst_37 = arith.constant dense<0.000000e+00> : vector<8x64xf32>
      %94 = tpu.matmul %92, %93, %cst_37 {dimension_numbers = #tpu.dot_dimension_numbers<[1], [0], [0], [1], [0, 0, 1, 1], [], []>} : vector<8x16xbf16>, vector<16x64xbf16>, vector<8x64xf32> -> vector<8x64xf32>
      %c0_38 = arith.constant 0 : index
      %c0_39 = arith.constant 0 : index
      %95 = vector.load %arg4[%c0_38, %c0_39] : memref<1x64xf32, #tpu.memory_space<vmem>>, vector<1x64xf32>
      %96 = vector.broadcast %95 : vector<1x64xf32> to vector<8x64xf32>
      %97 = arith.addf %94, %96 : vector<8x64xf32>
      %98 = arith.negf %97 : vector<8x64xf32>
      %99 = math.exp %98 : vector<8x64xf32>
      %cst_40 = arith.constant 1.000000e+00 : f32
      %100 = vector.broadcast %cst_40 : f32 to vector<8x64xf32>
      %101 = arith.addf %100, %99 : vector<8x64xf32>
      %102 = arith.divf %100, %101 : vector<8x64xf32>
      %103 = arith.mulf %97, %102 : vector<8x64xf32>
      %c0_41 = arith.constant 0 : index
      %c0_42 = arith.constant 0 : index
      %104 = vector.load %arg17[%c0_41, %c0_42] : memref<8x64xf32, #tpu.memory_space<vmem>>, vector<8x64xf32>
      tpu.vector_store %arg17[%c0_41, %c0_42], %103 {strides = array<i32>} : memref<8x64xf32, #tpu.memory_space<vmem>>, vector<8x64xf32>,
    } else {
    }
    %c0 = arith.constant 0 : index
    %c0_1 = arith.constant 0 : index
    %c0_2 = arith.constant 0 : index
    %3 = vector.load %arg8[%c0, %c0_1, %c0_2] : memref<1x8x64xf32, #tpu.memory_space<vmem>>, vector<1x8x64xf32>
    %4 = vector.shape_cast %3 : vector<1x8x64xf32> to vector<8x64xf32>
    %c0_3 = arith.constant 0 : index
    %c0_4 = arith.constant 0 : index
    %c0_5 = arith.constant 0 : index
    %5 = vector.load %arg9[%c0_3, %c0_4, %c0_5] : memref<1x2x2048xf32, #tpu.memory_space<vmem>>, vector<1x2x2048xf32>
    %6 = vector.shape_cast %5 : vector<1x2x2048xf32> to vector<2x2048xf32>
    %7 = vector.extract_strided_slice %4 {offsets = [0, 0], sizes = [1, 64], strides = [1, 1]} : vector<8x64xf32> to vector<1x64xf32>
    %8 = vector.extract_strided_slice %4 {offsets = [1, 0], sizes = [1, 64], strides = [1, 1]} : vector<8x64xf32> to vector<1x64xf32>
    %9 = vector.extract_strided_slice %4 {offsets = [2, 0], sizes = [1, 64], strides = [1, 1]} : vector<8x64xf32> to vector<1x64xf32>
    %10 = vector.extract_strided_slice %4 {offsets = [3, 0], sizes = [1, 64], strides = [1, 1]} : vector<8x64xf32> to vector<1x64xf32>
    %11 = vector.extract_strided_slice %4 {offsets = [4, 0], sizes = [1, 64], strides = [1, 1]} : vector<8x64xf32> to vector<1x64xf32>
    %12 = vector.extract_strided_slice %4 {offsets = [5, 0], sizes = [1, 64], strides = [1, 1]} : vector<8x64xf32> to vector<1x64xf32>
    %13 = vector.extract_strided_slice %4 {offsets = [6, 0], sizes = [1, 64], strides = [1, 1]} : vector<8x64xf32> to vector<1x64xf32>
    %14 = vector.extract_strided_slice %6 {offsets = [0, 0], sizes = [1, 2048], strides = [1, 1]} : vector<2x2048xf32> to vector<1x2048xf32>
    %15 = vector.extract_strided_slice %6 {offsets = [1, 0], sizes = [1, 2048], strides = [1, 1]} : vector<2x2048xf32> to vector<1x2048xf32>
    %c0_6 = arith.constant 0 : index
    %c0_7 = arith.constant 0 : index
    %16 = vector.load %arg17[%c0_6, %c0_7] : memref<8x64xf32, #tpu.memory_space<vmem>>, vector<8x64xf32>
    %17 = arith.truncf %16 : vector<8x64xf32> to vector<8x64xbf16>
    %c0_8 = arith.constant 0 : index
    %c0_9 = arith.constant 0 : index
    %c0_10 = arith.constant 0 : index
    %18 = vector.load %arg5[%c0_8, %c0_9, %c0_10] : memref<1x64x64xbf16, #tpu.memory_space<vmem>>, vector<1x64x64xbf16>
    %19 = vector.shape_cast %18 : vector<1x64x64xbf16> to vector<64x64xbf16>
    %cst = arith.constant dense<0.000000e+00> : vector<8x64xf32>
    %20 = tpu.matmul %17, %19, %cst {dimension_numbers = #tpu.dot_dimension_numbers<[1], [0], [0], [1], [0, 0, 1, 1], [], []>} : vector<8x64xbf16>, vector<64x64xbf16>, vector<8x64xf32> -> vector<8x64xf32>
    %21 = vector.broadcast %7 : vector<1x64xf32> to vector<8x64xf32>
    %22 = arith.addf %20, %21 : vector<8x64xf32>
    %23 = arith.addf %16, %22 : vector<8x64xf32>
    %cst_11 = arith.constant dense<0.000000e+00> : vector<8xf32>
    %24 = vector.multi_reduction <add>, %23, %cst_11 [1] : vector<8x64xf32> to vector<8xf32>
    %25 = vector.shape_cast %24 : vector<8xf32> to vector<8x1xf32>
    %cst_12 = arith.constant 6.400000e+01 : f32
    %26 = vector.broadcast %cst_12 : f32 to vector<8x1xf32>
    %27 = arith.divf %25, %26 : vector<8x1xf32>
    %28 = vector.broadcast %27 : vector<8x1xf32> to vector<8x64xf32>
    %29 = arith.subf %23, %28 : vector<8x64xf32>
    %30 = arith.mulf %29, %29 : vector<8x64xf32>
    %cst_13 = arith.constant dense<0.000000e+00> : vector<8xf32>
    %31 = vector.multi_reduction <add>, %30, %cst_13 [1] : vector<8x64xf32> to vector<8xf32>
    %32 = vector.shape_cast %31 : vector<8xf32> to vector<8x1xf32>
    %cst_14 = arith.constant 6.400000e+01 : f32
    %33 = vector.broadcast %cst_14 : f32 to vector<8x1xf32>
    %34 = arith.divf %32, %33 : vector<8x1xf32>
    %35 = vector.broadcast %27 : vector<8x1xf32> to vector<8x64xf32>
    %36 = arith.subf %23, %35 : vector<8x64xf32>
    %cst_15 = arith.constant 9.99999974E-6 : f32
    %37 = vector.broadcast %cst_15 : f32 to vector<8x1xf32>
    %38 = arith.addf %34, %37 : vector<8x1xf32>
    %39 = math.rsqrt %38 : vector<8x1xf32>
    %40 = vector.broadcast %39 : vector<8x1xf32> to vector<8x64xf32>
    %41 = arith.mulf %36, %40 : vector<8x64xf32>
    %42 = vector.broadcast %9 : vector<1x64xf32> to vector<8x64xf32>
    %43 = arith.mulf %41, %42 : vector<8x64xf32>
    %44 = vector.broadcast %10 : vector<1x64xf32> to vector<8x64xf32>
    %45 = arith.addf %43, %44 : vector<8x64xf32>
    %c0_16 = arith.constant 0 : index
    %c0_17 = arith.constant 0 : index
    %c0_18 = arith.constant 0 : index
    %46 = vector.load %arg6[%c0_16, %c0_17, %c0_18] : memref<1x64x2048xi8, #tpu.memory_space<vmem>>, vector<1x64x2048xi8>
    %47 = vector.shape_cast %46 : vector<1x64x2048xi8> to vector<64x2048xi8>
    %48 = arith.sitofp %47 : vector<64x2048xi8> to vector<64x2048xf32>
    %cst_19 = arith.constant dense<0.000000e+00> : vector<8x2048xf32>
    %49 = tpu.matmul %45, %48, %cst_19 {dimension_numbers = #tpu.dot_dimension_numbers<[1], [0], [0], [1], [0, 0, 1, 1], [], []>} : vector<8x64xf32>, vector<64x2048xf32>, vector<8x2048xf32> -> vector<8x2048xf32>
    %50 = vector.broadcast %15 : vector<1x2048xf32> to vector<8x2048xf32>
    %51 = arith.mulf %49, %50 : vector<8x2048xf32>
    %52 = vector.broadcast %14 : vector<1x2048xf32> to vector<8x2048xf32>
    %53 = arith.addf %51, %52 : vector<8x2048xf32>
    %cst_20 = arith.constant 0.000000e+00 : f32
    %54 = vector.broadcast %cst_20 : f32 to vector<8x2048xf32>
    %55 = arith.maximumf %53, %54 : vector<8x2048xf32>
    %c0_21 = arith.constant 0 : index
    %c0_22 = arith.constant 0 : index
    %c0_23 = arith.constant 0 : index
    %56 = vector.load %arg7[%c0_21, %c0_22, %c0_23] : memref<1x2048x64xi8, #tpu.memory_space<vmem>>, vector<1x2048x64xi8>
    %57 = vector.shape_cast %56 : vector<1x2048x64xi8> to vector<2048x64xi8>
    %58 = arith.sitofp %57 : vector<2048x64xi8> to vector<2048x64xf32>
    %cst_24 = arith.constant dense<0.000000e+00> : vector<8x64xf32>
    %59 = tpu.matmul %55, %58, %cst_24 {dimension_numbers = #tpu.dot_dimension_numbers<[1], [0], [0], [1], [0, 0, 1, 1], [], []>} : vector<8x2048xf32>, vector<2048x64xf32>, vector<8x64xf32> -> vector<8x64xf32>
    %60 = vector.broadcast %13 : vector<1x64xf32> to vector<8x64xf32>
    %61 = arith.mulf %59, %60 : vector<8x64xf32>
    %62 = vector.broadcast %8 : vector<1x64xf32> to vector<8x64xf32>
    %63 = arith.addf %61, %62 : vector<8x64xf32>
    %64 = arith.addf %45, %63 : vector<8x64xf32>
    %cst_25 = arith.constant dense<0.000000e+00> : vector<8xf32>
    %65 = vector.multi_reduction <add>, %64, %cst_25 [1] : vector<8x64xf32> to vector<8xf32>
    %66 = vector.shape_cast %65 : vector<8xf32> to vector<8x1xf32>
    %cst_26 = arith.constant 6.400000e+01 : f32
    %67 = vector.broadcast %cst_26 : f32 to vector<8x1xf32>
    %68 = arith.divf %66, %67 : vector<8x1xf32>
    %69 = vector.broadcast %68 : vector<8x1xf32> to vector<8x64xf32>
    %70 = arith.subf %64, %69 : vector<8x64xf32>
    %71 = arith.mulf %70, %70 : vector<8x64xf32>
    %cst_27 = arith.constant dense<0.000000e+00> : vector<8xf32>
    %72 = vector.multi_reduction <add>, %71, %cst_27 [1] : vector<8x64xf32> to vector<8xf32>
    %73 = vector.shape_cast %72 : vector<8xf32> to vector<8x1xf32>
    %cst_28 = arith.constant 6.400000e+01 : f32
    %74 = vector.broadcast %cst_28 : f32 to vector<8x1xf32>
    %75 = arith.divf %73, %74 : vector<8x1xf32>
    %76 = vector.broadcast %68 : vector<8x1xf32> to vector<8x64xf32>
    %77 = arith.subf %64, %76 : vector<8x64xf32>
    %cst_29 = arith.constant 9.99999974E-6 : f32
    %78 = vector.broadcast %cst_29 : f32 to vector<8x1xf32>
    %79 = arith.addf %75, %78 : vector<8x1xf32>
    %80 = math.rsqrt %79 : vector<8x1xf32>
    %81 = vector.broadcast %80 : vector<8x1xf32> to vector<8x64xf32>
    %82 = arith.mulf %77, %81 : vector<8x64xf32>
    %83 = vector.broadcast %11 : vector<1x64xf32> to vector<8x64xf32>
    %84 = arith.mulf %82, %83 : vector<8x64xf32>
    %85 = vector.broadcast %12 : vector<1x64xf32> to vector<8x64xf32>
    %86 = arith.addf %84, %85 : vector<8x64xf32>
    %c0_30 = arith.constant 0 : index
    %c0_31 = arith.constant 0 : index
    %87 = vector.load %arg17[%c0_30, %c0_31] : memref<8x64xf32, #tpu.memory_space<vmem>>, vector<8x64xf32>
    tpu.vector_store %arg17[%c0_30, %c0_31], %86 {strides = array<i32>} : memref<8x64xf32, #tpu.memory_space<vmem>>, vector<8x64xf32>,
    %c2_i32 = arith.constant 2 : i32
    %88 = arith.cmpi eq, %arg1, %c2_i32 : i32
    %89 = arith.extui %88 : i1 to i32
    %c0_i32_32 = arith.constant 0 : i32
    %90 = arith.cmpi ne, %89, %c0_i32_32 : i32
    scf.if %90 {
      %91 = arith.truncf %86 : vector<8x64xf32> to vector<8x64xbf16>
      %c0_33 = arith.constant 0 : index
      %c0_34 = arith.constant 0 : index
      %92 = vector.load %arg10[%c0_33, %c0_34] : memref<64x24xbf16, #tpu.memory_space<vmem>>, vector<64x24xbf16>
      %cst_35 = arith.constant dense<0.000000e+00> : vector<8x24xf32>
      %93 = tpu.matmul %91, %92, %cst_35 {dimension_numbers = #tpu.dot_dimension_numbers<[1], [0], [0], [1], [0, 0, 1, 1], [], []>} : vector<8x64xbf16>, vector<64x24xbf16>, vector<8x24xf32> -> vector<8x24xf32>
      %c0_36 = arith.constant 0 : index
      %c0_37 = arith.constant 0 : index
      %94 = vector.load %arg11[%c0_36, %c0_37] : memref<1x24xf32, #tpu.memory_space<vmem>>, vector<1x24xf32>
      %95 = vector.broadcast %94 : vector<1x24xf32> to vector<8x24xf32>
      %96 = arith.addf %93, %95 : vector<8x24xf32>
      %97 = vector.extract_strided_slice %96 {offsets = [0, 8], sizes = [8, 8], strides = [1, 1]} : vector<8x24xf32> to vector<8x8xf32>
      %98 = vector.extract_strided_slice %96 {offsets = [0, 16], sizes = [8, 8], strides = [1, 1]} : vector<8x24xf32> to vector<8x8xf32>
      %99 = vector.extract_strided_slice %96 {offsets = [0, 0], sizes = [8, 8], strides = [1, 1]} : vector<8x24xf32> to vector<8x8xf32>
      %c0_38 = arith.constant 0 : index
      %c0_39 = arith.constant 0 : index
      %100 = vector.load %arg12[%c0_38, %c0_39] : memref<8x8xf32, #tpu.memory_space<vmem>>, vector<8x8xf32>
      tpu.vector_store %arg12[%c0_38, %c0_39], %99 {strides = array<i32>} : memref<8x8xf32, #tpu.memory_space<vmem>>, vector<8x8xf32>,
      %c0_40 = arith.constant 0 : index
      %c0_41 = arith.constant 0 : index
      %101 = vector.load %arg13[%c0_40, %c0_41] : memref<8x8xf32, #tpu.memory_space<vmem>>, vector<8x8xf32>
      tpu.vector_store %arg13[%c0_40, %c0_41], %97 {strides = array<i32>} : memref<8x8xf32, #tpu.memory_space<vmem>>, vector<8x8xf32>,
      %c0_42 = arith.constant 0 : index
      %c0_43 = arith.constant 0 : index
      %102 = vector.load %arg14[%c0_42, %c0_43] : memref<8x8xf32, #tpu.memory_space<vmem>>, vector<8x8xf32>
      tpu.vector_store %arg14[%c0_42, %c0_43], %98 {strides = array<i32>} : memref<8x8xf32, #tpu.memory_space<vmem>>, vector<8x8xf32>,
      %103 = math.exp %97 : vector<8x8xf32>
      %c0_44 = arith.constant 0 : index
      %c0_45 = arith.constant 0 : index
      %104 = vector.load %arg15[%c0_44, %c0_45] : memref<8x8xf32, #tpu.memory_space<vmem>>, vector<8x8xf32>
      tpu.vector_store %arg15[%c0_44, %c0_45], %103 {strides = array<i32>} : memref<8x8xf32, #tpu.memory_space<vmem>>, vector<8x8xf32>,
      %105 = arith.negf %98 : vector<8x8xf32>
      %106 = math.exp %105 : vector<8x8xf32>
      %cst_46 = arith.constant 1.000000e+00 : f32
      %107 = vector.broadcast %cst_46 : f32 to vector<8x8xf32>
      %108 = arith.addf %107, %106 : vector<8x8xf32>
      %109 = arith.divf %107, %108 : vector<8x8xf32>
      %cst_47 = arith.constant 2.700000e+01 : f32
      %110 = vector.broadcast %cst_47 : f32 to vector<8x8xf32>
      %111 = arith.mulf %110, %109 : vector<8x8xf32>
      %cst_48 = arith.constant 3.000000e+00 : f32
      %112 = vector.broadcast %cst_48 : f32 to vector<8x8xf32>
      %113 = arith.addf %112, %111 : vector<8x8xf32>
      %c0_49 = arith.constant 0 : index
      %c0_50 = arith.constant 0 : index
      %114 = vector.load %arg16[%c0_49, %c0_50] : memref<8x8xf32, #tpu.memory_space<vmem>>, vector<8x8xf32>
      tpu.vector_store %arg16[%c0_49, %c0_50], %113 {strides = array<i32>} : memref<8x8xf32, #tpu.memory_space<vmem>>, vector<8x8xf32>,
    } else {
    }
    return
  }
  func.func @transform_0(%arg0: i32, %arg1: i32) -> (i32, i32) {
    %c0_i32 = arith.constant 0 : i32
    %c0_i32_0 = arith.constant 0 : i32
    return %arg0, %c0_i32 : i32, i32
  }
  func.func @transform_1(%arg0: i32, %arg1: i32) -> (i32, i32) {
    %c0_i32 = arith.constant 0 : i32
    %c0_i32_0 = arith.constant 0 : i32
    %c0_i32_1 = arith.constant 0 : i32
    return %c0_i32, %c0_i32_0 : i32, i32
  }
  func.func @transform_2(%arg0: i32, %arg1: i32) -> (i32, i32) {
    %c0_i32 = arith.constant 0 : i32
    %c0_i32_0 = arith.constant 0 : i32
    %c0_i32_1 = arith.constant 0 : i32
    return %c0_i32, %c0_i32_0 : i32, i32
  }
  func.func @transform_3(%arg0: i32, %arg1: i32) -> (i32, i32, i32) {
    %c0_i32 = arith.constant 0 : i32
    %c0_i32_0 = arith.constant 0 : i32
    %c0_i32_1 = arith.constant 0 : i32
    return %arg1, %c0_i32, %c0_i32_0 : i32, i32, i32
  }
  func.func @transform_4(%arg0: i32, %arg1: i32) -> (i32, i32, i32) {
    %c0_i32 = arith.constant 0 : i32
    %c0_i32_0 = arith.constant 0 : i32
    %c0_i32_1 = arith.constant 0 : i32
    return %arg1, %c0_i32, %c0_i32_0 : i32, i32, i32
  }
  func.func @transform_5(%arg0: i32, %arg1: i32) -> (i32, i32, i32) {
    %c0_i32 = arith.constant 0 : i32
    %c0_i32_0 = arith.constant 0 : i32
    %c0_i32_1 = arith.constant 0 : i32
    return %arg1, %c0_i32, %c0_i32_0 : i32, i32, i32
  }
  func.func @transform_6(%arg0: i32, %arg1: i32) -> (i32, i32, i32) {
    %c0_i32 = arith.constant 0 : i32
    %c0_i32_0 = arith.constant 0 : i32
    %c0_i32_1 = arith.constant 0 : i32
    return %arg1, %c0_i32, %c0_i32_0 : i32, i32, i32
  }
  func.func @transform_7(%arg0: i32, %arg1: i32) -> (i32, i32, i32) {
    %c0_i32 = arith.constant 0 : i32
    %c0_i32_0 = arith.constant 0 : i32
    %c0_i32_1 = arith.constant 0 : i32
    return %arg1, %c0_i32, %c0_i32_0 : i32, i32, i32
  }
  func.func @transform_8(%arg0: i32, %arg1: i32) -> (i32, i32) {
    %c0_i32 = arith.constant 0 : i32
    %c0_i32_0 = arith.constant 0 : i32
    %c0_i32_1 = arith.constant 0 : i32
    return %c0_i32, %c0_i32_0 : i32, i32
  }
  func.func @transform_9(%arg0: i32, %arg1: i32) -> (i32, i32) {
    %c0_i32 = arith.constant 0 : i32
    %c0_i32_0 = arith.constant 0 : i32
    %c0_i32_1 = arith.constant 0 : i32
    return %c0_i32, %c0_i32_0 : i32, i32
  }
  func.func @transform_10(%arg0: i32, %arg1: i32) -> (i32, i32) {
    %c0_i32 = arith.constant 0 : i32
    %c0_i32_0 = arith.constant 0 : i32
    return %arg0, %c0_i32 : i32, i32
  }
  func.func @transform_11(%arg0: i32, %arg1: i32) -> (i32, i32) {
    %c0_i32 = arith.constant 0 : i32
    %c0_i32_0 = arith.constant 0 : i32
    return %arg0, %c0_i32 : i32, i32
  }
  func.func @transform_12(%arg0: i32, %arg1: i32) -> (i32, i32) {
    %c0_i32 = arith.constant 0 : i32
    %c0_i32_0 = arith.constant 0 : i32
    return %arg0, %c0_i32 : i32, i32
  }
  func.func @transform_13(%arg0: i32, %arg1: i32) -> (i32, i32) {
    %c0_i32 = arith.constant 0 : i32
    %c0_i32_0 = arith.constant 0 : i32
    return %arg0, %c0_i32 : i32, i32
  }
  func.func @transform_14(%arg0: i32, %arg1: i32) -> (i32, i32) {
    %c0_i32 = arith.constant 0 : i32
    %c0_i32_0 = arith.constant 0 : i32
    return %arg0, %c0_i32 : i32, i32
  }
}

</mosaic_0001>

<llo_original>
// kernel: tpu_custom_call.1
$region0: #{tpu_custom_call.1}
  #allocation0 [shape = 'u32[]', space=smem, size = 0x4, offset = 0x4, fixed_abs, tag = 'smem constant byte address 0x4 - core index']
  #allocation1 [shape = 'u32[144,128]{1,0:T(1,128)}', space=vmem, size = 0x12000, scoped, tag = 'internal scratch']
  #allocation2 [shape = 'f32[8,64]{1,0:T(8,128)}', space=vmem, size = 0x1000, scoped, tag = 'scratch operand']
  %s0 = inlined_call_operand.vmem [shape: f32[8,16], index: 0, kind: input, shape index: {}]
  %s1 = inlined_call_operand.vmem [shape: bf16[16,64], index: 1, kind: input, shape index: {}]
  %s2 = inlined_call_operand.vmem [shape: f32[1,64], index: 2, kind: input, shape index: {}]
  %s3 = inlined_call_operand.vmem [shape: bf16[3,64,64], index: 3, kind: input, shape index: {}]
  %s4 = inlined_call_operand.vmem [shape: s8[3,64,2048], index: 4, kind: input, shape index: {}]
  %s5 = inlined_call_operand.vmem [shape: s8[3,2048,64], index: 5, kind: input, shape index: {}]
  %s6 = inlined_call_operand.vmem [shape: f32[3,8,64], index: 6, kind: input, shape index: {}]
  %s7 = inlined_call_operand.vmem [shape: f32[3,2,2048], index: 7, kind: input, shape index: {}]
  %s8 = inlined_call_operand.vmem [shape: bf16[64,24], index: 8, kind: input, shape index: {}]
  %s9 = inlined_call_operand.vmem [shape: f32[1,24], index: 9, kind: input, shape index: {}]
  %s10 = inlined_call_operand.hbm [shape: f32[8,8], index: 10, kind: output, shape index: {0}]
  %s11 = inlined_call_operand.hbm [shape: f32[8,8], index: 11, kind: output, shape index: {1}]
  %s12 = inlined_call_operand.hbm [shape: f32[8,8], index: 12, kind: output, shape index: {2}]
  %s13 = inlined_call_operand.hbm [shape: f32[8,8], index: 13, kind: output, shape index: {3}]
  %s14 = inlined_call_operand.hbm [shape: f32[8,8], index: 14, kind: output, shape index: {4}]
  %15 = xla_tuple %s10, %s11, %s12, %s13, %s14
  %s16 = sld [smem:[#allocation0]]
  $region113: #{tpu_custom_call.1} parent=0
    _
  %s18 = ssub.s32 1, %s16
  %s19 = scalar_select 0, %s18, %s16
  $region1: #{tpu_custom_call.1} parent=0
    #allocation3 [shape = 'u8[4096]{0}', space=vmem, size = 0x1000, scoped, tag = 'output window, operand 0, single buffered']
    #allocation4 [shape = 's32[2]{0}', space=sflag, size = 0x8, scoped, tag = 'scoped memory for tpu_custom_call.1']
    #allocation5 [shape = 'u8[4096]{0}', space=vmem, size = 0x1000, scoped, tag = 'output window, operand 1, single buffered']
    #allocation6 [shape = 's32[1]{0}', space=sflag, size = 0x4, scoped, tag = 'scoped memory for tpu_custom_call.1']
    #allocation7 [shape = 'u8[4096]{0}', space=vmem, size = 0x1000, scoped, tag = 'output window, operand 2, single buffered']
    #allocation8 [shape = 'u8[4096]{0}', space=vmem, size = 0x1000, scoped, tag = 'output window, operand 3, single buffered']
    #allocation9 [shape = 's32[1]{0}', space=sflag, size = 0x4, scoped, tag = 'scoped memory for tpu_custom_call.1']
    #allocation10 [shape = 'u8[4096]{0}', space=vmem, size = 0x1000, scoped, tag = 'output window, operand 4, single buffered']
    %20 = vsyncpa [#allocation4], 0
    %21 = vsyncpa [#allocation6], 0
    %22 = vsyncpa [#allocation9], 0
    loop: start=0, step=1, limit=5
    $region2: #{tpu_custom_call.1} parent=1 // loop_pre_header
      _
    $region3: #{tpu_custom_call.1} parent=1 // loop_header
      %s24 = sphi 0, %s28
      %p25 = scmp.ge.s32.totalorder %s24, 5
      %s31 = sphi 0, %s43
      %s32 = sphi 0, %s39
      %s33 = sphi 0, %s31
      %s34 = sphi 0, %s32
      %s35 = sphi 0, %s33
      %s36 = sphi 0, %s34
      %s46 = sphi 0, %s48
      %s49 = sphi 0, %s46
      %s50 = sphi 0, %s49
      %s66 = sphi 0, %s50
      %s70 = sphi 0, %s70
      %s72 = sphi 0, %s70
      %s73 = sphi 0, %s72
      %s87 = sphi 0, %s73
      %s91 = sphi 0, %s91
      %s93 = sphi 0, %s91
      %s94 = sphi 0, %s93
      %s108 = sphi 0, %s94
      %s114 = sphi 0, %s116
      %s117 = sphi 0, %s114
      %s118 = sphi 0, %s117
      %s134 = sphi 0, %s118
      %s140 = sphi 0, %s142
      %s143 = sphi 0, %s140
      %s144 = sphi 0, %s143
      %s160 = sphi 0, %s144
      %s166 = sphi 0, %s168
      %s169 = sphi 0, %s166
      %s170 = sphi 0, %s169
      %s186 = sphi 0, %s170
      %s192 = sphi 0, %s194
      %s195 = sphi 0, %s192
      %s196 = sphi 0, %s195
      %s212 = sphi 0, %s196
      %s218 = sphi 0, %s220
      %s221 = sphi 0, %s218
      %s222 = sphi 0, %s221
      %s238 = sphi 0, %s222
      %s242 = sphi 0, %s242
      %s244 = sphi 0, %s242
      %s245 = sphi 0, %s244
      %s259 = sphi 0, %s245
      %s263 = sphi 0, %s263
      %s265 = sphi 0, %s263
      %s266 = sphi 0, %s265
      %s280 = sphi 0, %s266
      %s286 = sphi 0, %s288
      %s289 = sphi 0, %s286
      %s290 = sphi 0, %s289
      %s306 = sphi 0, %s290
      %s312 = sphi 0, %s314
      %s315 = sphi 0, %s312
      %s316 = sphi 0, %s315
      %s332 = sphi 0, %s316
      %s338 = sphi 0, %s340
      %s341 = sphi 0, %s338
      %s342 = sphi 0, %s341
      %s358 = sphi 0, %s342
      %s364 = sphi 0, %s366
      %s367 = sphi 0, %s364
      %s368 = sphi 0, %s367
      %s384 = sphi 0, %s368
      %s390 = sphi 0, %s392
      %s393 = sphi 0, %s390
      %s394 = sphi 0, %s393
      %s410 = sphi 0, %s394
    $region4: #{tpu_custom_call.1} parent=1 // loop_header_branch
      %27 = sbr.rel (%p25) target = $region8
    $region5: #{tpu_custom_call.1} parent=1 // loop_body
      %s29 = ssub.s32 %s24, 1
      %s30 = ssub.s32 %s24, 2
      %s37 = sadd.s32 1, %s32
      %p38 = scmp.ge.s32.totalorder %s37, 3
      %s39 = scalar_select %p38, 0, %s37
      %s40 = sadd.s32 1, %s31
      %s41 = scalar_select %p38, %s40, %s31
      %p42 = scmp.ge.s32.totalorder %s41, 1
      %s43 = scalar_select %p42, 0, %s41
      %s44 = ssub.s32 %s31, %s43
      %p45 = scmp.eq.s32.totalorder %s44, 0
      %s47 = sadd.s32 %s46, 1
      %s48 = scalar_select %p45, %s46, %s47
      %p51 = pneg %p45
      %p52 = scmp.eq.s32.totalorder %s24, 2
      %p53 = por %p51, %p52
      %p54 = scmp.ne.s32.totalorder %s46, %s49
      %p55 = scmp.eq.s32.totalorder %s24, 0
      %p56 = por %p54, %p55
      %p57 = scmp.ne.s32.totalorder %s46, %s49
      %p58 = scmp.eq.s32.totalorder %s29, 2
      %p59 = por %p57, %p58
      %p60 = scmp.ne.s32.totalorder %s49, %s50
      %p61 = scmp.eq.s32.totalorder %s29, 0
      %p62 = por %p60, %p61
      %p63 = scmp.ne.s32.totalorder %s49, %s50
      %p64 = scmp.eq.s32.totalorder %s30, 2
      %p65 = por %p63, %p64
      %p67 = scmp.ne.s32.totalorder %s50, %s66
      %p68 = scmp.eq.s32.totalorder %s30, 0
      %p69 = por %p67, %p68
      %s71 = sadd.s32 %s70, 1
      %p74 = scmp.eq.s32.totalorder %s24, 2
      %p75 = scmp.ne.s32.totalorder %s70, %s72
      %p76 = scmp.eq.s32.totalorder %s24, 0
      %p77 = por %p75, %p76
      %p78 = scmp.ne.s32.totalorder %s70, %s72
      %p79 = scmp.eq.s32.totalorder %s29, 2
      %p80 = por %p78, %p79
      %p81 = scmp.ne.s32.totalorder %s72, %s73
      %p82 = scmp.eq.s32.totalorder %s29, 0
      %p83 = por %p81, %p82
      %p84 = scmp.ne.s32.totalorder %s72, %s73
      %p85 = scmp.eq.s32.totalorder %s30, 2
      %p86 = por %p84, %p85
      %p88 = scmp.ne.s32.totalorder %s73, %s87
      %p89 = scmp.eq.s32.totalorder %s30, 0
      %p90 = por %p88, %p89
      %s92 = sadd.s32 %s91, 1
      %p95 = scmp.eq.s32.totalorder %s24, 2
      %p96 = scmp.ne.s32.totalorder %s91, %s93
      %p97 = scmp.eq.s32.totalorder %s24, 0
      %p98 = por %p96, %p97
      %p99 = scmp.ne.s32.totalorder %s91, %s93
      %p100 = scmp.eq.s32.totalorder %s29, 2
      %p101 = por %p99, %p100
      %p102 = scmp.ne.s32.totalorder %s93, %s94
      %p103 = scmp.eq.s32.totalorder %s29, 0
      %p104 = por %p102, %p103
      %p105 = scmp.ne.s32.totalorder %s93, %s94
      %p106 = scmp.eq.s32.totalorder %s30, 2
      %p107 = por %p105, %p106
      %p109 = scmp.ne.s32.totalorder %s94, %s108
      %p110 = scmp.eq.s32.totalorder %s30, 0
      %p111 = por %p109, %p110
      %s112 = ssub.s32 %s32, %s39
      %p113 = scmp.eq.s32.totalorder %s112, 0
      %s115 = sadd.s32 %s114, 1
      %s116 = scalar_select %p113, %s114, %s115
      %p119 = pneg %p113
      %p120 = scmp.eq.s32.totalorder %s24, 2
      %p121 = por %p119, %p120
      %p122 = scmp.ne.s32.totalorder %s114, %s117
      %p123 = scmp.eq.s32.totalorder %s24, 0
      %p124 = por %p122, %p123
      %p125 = scmp.ne.s32.totalorder %s114, %s117
      %p126 = scmp.eq.s32.totalorder %s29, 2
      %p127 = por %p125, %p126
      %p128 = scmp.ne.s32.totalorder %s117, %s118
      %p129 = scmp.eq.s32.totalorder %s29, 0
      %p130 = por %p128, %p129
      %p131 = scmp.ne.s32.totalorder %s117, %s118
      %p132 = scmp.eq.s32.totalorder %s30, 2
      %p133 = por %p131, %p132
      %p135 = scmp.ne.s32.totalorder %s118, %s134
      %p136 = scmp.eq.s32.totalorder %s30, 0
      %p137 = por %p135, %p136
      %s138 = ssub.s32 %s32, %s39
      %p139 = scmp.eq.s32.totalorder %s138, 0
      %s141 = sadd.s32 %s140, 1
      %s142 = scalar_select %p139, %s140, %s141
      %p145 = pneg %p139
      %p146 = scmp.eq.s32.totalorder %s24, 2
      %p147 = por %p145, %p146
      %p148 = scmp.ne.s32.totalorder %s140, %s143
      %p149 = scmp.eq.s32.totalorder %s24, 0
      %p150 = por %p148, %p149
      %p151 = scmp.ne.s32.totalorder %s140, %s143
      %p152 = scmp.eq.s32.totalorder %s29, 2
      %p153 = por %p151, %p152
      %p154 = scmp.ne.s32.totalorder %s143, %s144
      %p155 = scmp.eq.s32.totalorder %s29, 0
      %p156 = por %p154, %p155
      %p157 = scmp.ne.s32.totalorder %s143, %s144
      %p158 = scmp.eq.s32.totalorder %s30, 2
      %p159 = por %p157, %p158
      %p161 = scmp.ne.s32.totalorder %s144, %s160
      %p162 = scmp.eq.s32.totalorder %s30, 0
      %p163 = por %p161, %p162
      %s164 = ssub.s32 %s32, %s39
      %p165 = scmp.eq.s32.totalorder %s164, 0
      %s167 = sadd.s32 %s166, 1
      %s168 = scalar_select %p165, %s166, %s167
      %p171 = pneg %p165
      %p172 = scmp.eq.s32.totalorder %s24, 2
      %p173 = por %p171, %p172
      %p174 = scmp.ne.s32.totalorder %s166, %s169
      %p175 = scmp.eq.s32.totalorder %s24, 0
      %p176 = por %p174, %p175
      %p177 = scmp.ne.s32.totalorder %s166, %s169
      %p178 = scmp.eq.s32.totalorder %s29, 2
      %p179 = por %p177, %p178
      %p180 = scmp.ne.s32.totalorder %s169, %s170
      %p181 = scmp.eq.s32.totalorder %s29, 0
      %p182 = por %p180, %p181
      %p183 = scmp.ne.s32.totalorder %s169, %s170
      %p184 = scmp.eq.s32.totalorder %s30, 2
      %p185 = por %p183, %p184
      %p187 = scmp.ne.s32.totalorder %s170, %s186
      %p188 = scmp.eq.s32.totalorder %s30, 0
      %p189 = por %p187, %p188
      %s190 = ssub.s32 %s32, %s39
      %p191 = scmp.eq.s32.totalorder %s190, 0
      %s193 = sadd.s32 %s192, 1
      %s194 = scalar_select %p191, %s192, %s193
      %p197 = pneg %p191
      %p198 = scmp.eq.s32.totalorder %s24, 2
      %p199 = por %p197, %p198
      %p200 = scmp.ne.s32.totalorder %s192, %s195
      %p201 = scmp.eq.s32.totalorder %s24, 0
      %p202 = por %p200, %p201
      %p203 = scmp.ne.s32.totalorder %s192, %s195
      %p204 = scmp.eq.s32.totalorder %s29, 2
      %p205 = por %p203, %p204
      %p206 = scmp.ne.s32.totalorder %s195, %s196
      %p207 = scmp.eq.s32.totalorder %s29, 0
      %p208 = por %p206, %p207
      %p209 = scmp.ne.s32.totalorder %s195, %s196
      %p210 = scmp.eq.s32.totalorder %s30, 2
      %p211 = por %p209, %p210
      %p213 = scmp.ne.s32.totalorder %s196, %s212
      %p214 = scmp.eq.s32.totalorder %s30, 0
      %p215 = por %p213, %p214
      %s216 = ssub.s32 %s32, %s39
      %p217 = scmp.eq.s32.totalorder %s216, 0
      %s219 = sadd.s32 %s218, 1
      %s220 = scalar_select %p217, %s218, %s219
      %p223 = pneg %p217
      %p224 = scmp.eq.s32.totalorder %s24, 2
      %p225 = por %p223, %p224
      %p226 = scmp.ne.s32.totalorder %s218, %s221
      %p227 = scmp.eq.s32.totalorder %s24, 0
      %p228 = por %p226, %p227
      %p229 = scmp.ne.s32.totalorder %s218, %s221
      %p230 = scmp.eq.s32.totalorder %s29, 2
      %p231 = por %p229, %p230
      %p232 = scmp.ne.s32.totalorder %s221, %s222
      %p233 = scmp.eq.s32.totalorder %s29, 0
      %p234 = por %p232, %p233
      %p235 = scmp.ne.s32.totalorder %s221, %s222
      %p236 = scmp.eq.s32.totalorder %s30, 2
      %p237 = por %p235, %p236
      %p239 = scmp.ne.s32.totalorder %s222, %s238
      %p240 = scmp.eq.s32.totalorder %s30, 0
      %p241 = por %p239, %p240
      %s243 = sadd.s32 %s242, 1
      %p246 = scmp.eq.s32.totalorder %s24, 2
      %p247 = scmp.ne.s32.totalorder %s242, %s244
      %p248 = scmp.eq.s32.totalorder %s24, 0
      %p249 = por %p247, %p248
      %p250 = scmp.ne.s32.totalorder %s242, %s244
      %p251 = scmp.eq.s32.totalorder %s29, 2
      %p252 = por %p250, %p251
      %p253 = scmp.ne.s32.totalorder %s244, %s245
      %p254 = scmp.eq.s32.totalorder %s29, 0
      %p255 = por %p253, %p254
      %p256 = scmp.ne.s32.totalorder %s244, %s245
      %p257 = scmp.eq.s32.totalorder %s30, 2
      %p258 = por %p256, %p257
      %p260 = scmp.ne.s32.totalorder %s245, %s259
      %p261 = scmp.eq.s32.totalorder %s30, 0
      %p262 = por %p260, %p261
      %s264 = sadd.s32 %s263, 1
      %p267 = scmp.eq.s32.totalorder %s24, 2
      %p268 = scmp.ne.s32.totalorder %s263, %s265
      %p269 = scmp.eq.s32.totalorder %s24, 0
      %p270 = por %p268, %p269
      %p271 = scmp.ne.s32.totalorder %s263, %s265
      %p272 = scmp.eq.s32.totalorder %s29, 2
      %p273 = por %p271, %p272
      %p274 = scmp.ne.s32.totalorder %s265, %s266
      %p275 = scmp.eq.s32.totalorder %s29, 0
      %p276 = por %p274, %p275
      %p277 = scmp.ne.s32.totalorder %s265, %s266
      %p278 = scmp.eq.s32.totalorder %s30, 2
      %p279 = por %p277, %p278
      %p281 = scmp.ne.s32.totalorder %s266, %s280
      %p282 = scmp.eq.s32.totalorder %s30, 0
      %p283 = por %p281, %p282
      %s284 = ssub.s32 %s31, %s43
      %p285 = scmp.eq.s32.totalorder %s284, 0
      %s287 = sadd.s32 %s286, 1
      %s288 = scalar_select %p285, %s286, %s287
      %p291 = pneg %p285
      %p292 = scmp.eq.s32.totalorder %s24, 2
      %p293 = por %p291, %p292
      %p294 = scmp.ne.s32.totalorder %s286, %s289
      %p295 = scmp.eq.s32.totalorder %s24, 0
      %p296 = por %p294, %p295
      %p297 = scmp.ne.s32.totalorder %s286, %s289
      %p298 = scmp.eq.s32.totalorder %s29, 2
      %p299 = por %p297, %p298
      %p300 = scmp.ne.s32.totalorder %s289, %s290
      %p301 = scmp.eq.s32.totalorder %s29, 0
      %p302 = por %p300, %p301
      %p303 = scmp.ne.s32.totalorder %s289, %s290
      %p304 = scmp.eq.s32.totalorder %s30, 2
      %p305 = por %p303, %p304
      %p307 = scmp.ne.s32.totalorder %s290, %s306
      %p308 = scmp.eq.s32.totalorder %s30, 0
      %p309 = por %p307, %p308
      %s310 = ssub.s32 %s31, %s43
      %p311 = scmp.eq.s32.totalorder %s310, 0
      %s313 = sadd.s32 %s312, 1
      %s314 = scalar_select %p311, %s312, %s313
      %p317 = pneg %p311
      %p318 = scmp.eq.s32.totalorder %s24, 2
      %p319 = por %p317, %p318
      %p320 = scmp.ne.s32.totalorder %s312, %s315
      %p321 = scmp.eq.s32.totalorder %s24, 0
      %p322 = por %p320, %p321
      %p323 = scmp.ne.s32.totalorder %s312, %s315
      %p324 = scmp.eq.s32.totalorder %s29, 2
      %p325 = por %p323, %p324
      %p326 = scmp.ne.s32.totalorder %s315, %s316
      %p327 = scmp.eq.s32.totalorder %s29, 0
      %p328 = por %p326, %p327
      %p329 = scmp.ne.s32.totalorder %s315, %s316
      %p330 = scmp.eq.s32.totalorder %s30, 2
      %p331 = por %p329, %p330
      %p333 = scmp.ne.s32.totalorder %s316, %s332
      %p334 = scmp.eq.s32.totalorder %s30, 0
      %p335 = por %p333, %p334
      %s336 = ssub.s32 %s31, %s43
      %p337 = scmp.eq.s32.totalorder %s336, 0
      %s339 = sadd.s32 %s338, 1
      %s340 = scalar_select %p337, %s338, %s339
      %p343 = pneg %p337
      %p344 = scmp.eq.s32.totalorder %s24, 2
      %p345 = por %p343, %p344
      %p346 = scmp.ne.s32.totalorder %s338, %s341
      %p347 = scmp.eq.s32.totalorder %s24, 0
      %p348 = por %p346, %p347
      %p349 = scmp.ne.s32.totalorder %s338, %s341
      %p350 = scmp.eq.s32.totalorder %s29, 2
      %p351 = por %p349, %p350
      %p352 = scmp.ne.s32.totalorder %s341, %s342
      %p353 = scmp.eq.s32.totalorder %s29, 0
      %p354 = por %p352, %p353
      %p355 = scmp.ne.s32.totalorder %s341, %s342
      %p356 = scmp.eq.s32.totalorder %s30, 2
      %p357 = por %p355, %p356
      %p359 = scmp.ne.s32.totalorder %s342, %s358
      %p360 = scmp.eq.s32.totalorder %s30, 0
      %p361 = por %p359, %p360
      %s362 = ssub.s32 %s31, %s43
      %p363 = scmp.eq.s32.totalorder %s362, 0
      %s365 = sadd.s32 %s364, 1
      %s366 = scalar_select %p363, %s364, %s365
      %p369 = pneg %p363
      %p370 = scmp.eq.s32.totalorder %s24, 2
      %p371 = por %p369, %p370
      %p372 = scmp.ne.s32.totalorder %s364, %s367
      %p373 = scmp.eq.s32.totalorder %s24, 0
      %p374 = por %p372, %p373
      %p375 = scmp.ne.s32.totalorder %s364, %s367
      %p376 = scmp.eq.s32.totalorder %s29, 2
      %p377 = por %p375, %p376
      %p378 = scmp.ne.s32.totalorder %s367, %s368
      %p379 = scmp.eq.s32.totalorder %s29, 0
      %p380 = por %p378, %p379
      %p381 = scmp.ne.s32.totalorder %s367, %s368
      %p382 = scmp.eq.s32.totalorder %s30, 2
      %p383 = por %p381, %p382
      %p385 = scmp.ne.s32.totalorder %s368, %s384
      %p386 = scmp.eq.s32.totalorder %s30, 0
      %p387 = por %p385, %p386
      %s388 = ssub.s32 %s31, %s43
      %p389 = scmp.eq.s32.totalorder %s388, 0
      %s391 = sadd.s32 %s390, 1
      %s392 = scalar_select %p389, %s390, %s391
      %p395 = pneg %p389
      %p396 = scmp.eq.s32.totalorder %s24, 2
      %p397 = por %p395, %p396
      %p398 = scmp.ne.s32.totalorder %s390, %s393
      %p399 = scmp.eq.s32.totalorder %s24, 0
      %p400 = por %p398, %p399
      %p401 = scmp.ne.s32.totalorder %s390, %s393
      %p402 = scmp.eq.s32.totalorder %s29, 2
      %p403 = por %p401, %p402
      %p404 = scmp.ne.s32.totalorder %s393, %s394
      %p405 = scmp.eq.s32.totalorder %s29, 0
      %p406 = por %p404, %p405
      %p407 = scmp.ne.s32.totalorder %s393, %s394
      %p408 = scmp.eq.s32.totalorder %s30, 2
      %p409 = por %p407, %p408
      %p411 = scmp.ne.s32.totalorder %s394, %s410
      %p412 = scmp.eq.s32.totalorder %s30, 0
      %p413 = por %p411, %p412
      %p414 = scmp.le.s32.totalorder 1, %s24
      %p415 = scmp.lt.s32.totalorder %s24, 4
      %p416 = pnand %p414, %p415
      %p417 = pneg %p416
      // Predicated region
      $region9: #{tpu_custom_call.1} parent=5 // pred_check
        _
      $region10: #{tpu_custom_call.1} parent=5 // pred_check_branch
        %419 = sbr.rel (%p416) target = $region12
      $region11: #{tpu_custom_call.1} parent=5 // pred_region
        %s420 = ssub.s32 %s24, 1
        // Predicated region
        $region13: #{tpu_custom_call.1} parent=11 // pred_check
          %p421 = pneg %p62
        $region14: #{tpu_custom_call.1} parent=11 // pred_check_branch
          %423 = sbr.rel (%p421) target = $region16
        $region15: #{tpu_custom_call.1} parent=11 // pred_region
          %p424 = scmp.lt.s32.totalorder %s33, 0
          %s425 = scalar_select %p424, %s33, 0
          %s426 = smul.addr %s425, 8
          %s427 = scalar_lea.vmem %s0, %s426
        $region16: #{tpu_custom_call.1} parent=11 // pred_fallthru
          _
        // Predicated region
        $region17: #{tpu_custom_call.1} parent=11 // pred_check
          %p428 = pneg %p83
        $region18: #{tpu_custom_call.1} parent=11 // pred_check_branch
          %430 = sbr.rel (%p428) target = $region20
        $region19: #{tpu_custom_call.1} parent=11 // pred_region
          _
        $region20: #{tpu_custom_call.1} parent=11 // pred_fallthru
          _
        // Predicated region
        $region21: #{tpu_custom_call.1} parent=11 // pred_check
          %p431 = pneg %p104
        $region22: #{tpu_custom_call.1} parent=11 // pred_check_branch
          %433 = sbr.rel (%p431) target = $region24
        $region23: #{tpu_custom_call.1} parent=11 // pred_region
          _
        $region24: #{tpu_custom_call.1} parent=11 // pred_fallthru
          _
        // Predicated region
        $region25: #{tpu_custom_call.1} parent=11 // pred_check
          %p434 = pneg %p255
        $region26: #{tpu_custom_call.1} parent=11 // pred_check_branch
          %436 = sbr.rel (%p434) target = $region28
        $region27: #{tpu_custom_call.1} parent=11 // pred_region
          _
        $region28: #{tpu_custom_call.1} parent=11 // pred_fallthru
          _
        // Predicated region
        $region29: #{tpu_custom_call.1} parent=11 // pred_check
          %p437 = pneg %p276
        $region30: #{tpu_custom_call.1} parent=11 // pred_check_branch
          %439 = sbr.rel (%p437) target = $region32
        $region31: #{tpu_custom_call.1} parent=11 // pred_region
          _
        $region32: #{tpu_custom_call.1} parent=11 // pred_fallthru
          _
      $region12: #{tpu_custom_call.1} parent=5 // pred_fallthru
        _
      %p440 = scmp.lt.s32.totalorder %s24, 3
      // Predicated region
      $region33: #{tpu_custom_call.1} parent=5 // pred_check
        %p441 = pneg %p440
      $region34: #{tpu_custom_call.1} parent=5 // pred_check_branch
        %443 = sbr.rel (%p441) target = $region36
      $region35: #{tpu_custom_call.1} parent=5 // pred_region
        // Predicated region
        $region37: #{tpu_custom_call.1} parent=35 // pred_check
          %p444 = pneg %p124
        $region38: #{tpu_custom_call.1} parent=35 // pred_check_branch
          %446 = sbr.rel (%p444) target = $region40
        $region39: #{tpu_custom_call.1} parent=35 // pred_region
          %p447 = scmp.lt.s32.totalorder %s32, 2
          %s448 = scalar_select %p447, %s32, 2
          %s449 = smul.addr %s448, 8
          %s450 = smul.addr %s449, 4
          %s451 = scalar_lea.vmem %s3, %s450
        $region40: #{tpu_custom_call.1} parent=35 // pred_fallthru
          _
        // Predicated region
        $region41: #{tpu_custom_call.1} parent=35 // pred_check
          %p452 = pneg %p150
        $region42: #{tpu_custom_call.1} parent=35 // pred_check_branch
          %454 = sbr.rel (%p452) target = $region44
        $region43: #{tpu_custom_call.1} parent=35 // pred_region
          %p455 = scmp.lt.s32.totalorder %s32, 2
          %s456 = scalar_select %p455, %s32, 2
          %s457 = smul.addr %s456, 32
          %s458 = smul.addr %s457, 8
          %s459 = scalar_lea.vmem %s4, %s458
        $region44: #{tpu_custom_call.1} parent=35 // pred_fallthru
          _
        // Predicated region
        $region45: #{tpu_custom_call.1} parent=35 // pred_check
          %p460 = pneg %p176
        $region46: #{tpu_custom_call.1} parent=35 // pred_check_branch
          %462 = sbr.rel (%p460) target = $region48
        $region47: #{tpu_custom_call.1} parent=35 // pred_region
          %p463 = scmp.lt.s32.totalorder %s32, 2
          %s464 = scalar_select %p463, %s32, 2
          %s465 = smul.addr %s464, 64
          %s466 = smul.addr %s465, 8
          %s467 = scalar_lea.vmem %s5, %s466
        $region48: #{tpu_custom_call.1} parent=35 // pred_fallthru
          _
        // Predicated region
        $region49: #{tpu_custom_call.1} parent=35 // pred_check
          %p468 = pneg %p202
        $region50: #{tpu_custom_call.1} parent=35 // pred_check_branch
          %470 = sbr.rel (%p468) target = $region52
        $region51: #{tpu_custom_call.1} parent=35 // pred_region
          %p471 = scmp.lt.s32.totalorder %s32, 2
          %s472 = scalar_select %p471, %s32, 2
          %s473 = smul.addr %s472, 8
          %s474 = scalar_lea.vmem %s6, %s473
        $region52: #{tpu_custom_call.1} parent=35 // pred_fallthru
          _
        // Predicated region
        $region53: #{tpu_custom_call.1} parent=35 // pred_check
          %p475 = pneg %p228
        $region54: #{tpu_custom_call.1} parent=35 // pred_check_branch
          %477 = sbr.rel (%p475) target = $region56
        $region55: #{tpu_custom_call.1} parent=35 // pred_region
          %p478 = scmp.lt.s32.totalorder %s32, 2
          %s479 = scalar_select %p478, %s32, 2
          %s480 = smul.addr %s479, 16
          %s481 = smul.addr %s480, 2
          %s482 = scalar_lea.vmem %s7, %s481
        $region56: #{tpu_custom_call.1} parent=35 // pred_fallthru
          _
      $region36: #{tpu_custom_call.1} parent=5 // pred_fallthru
        _
      %p483 = scmp.le.s32.totalorder 1, %s24
      %p484 = scmp.lt.s32.totalorder %s24, 4
      %p485 = pnand %p483, %p484
      %p486 = pneg %p485
      // Predicated region
      $region57: #{tpu_custom_call.1} parent=5 // pred_check
        _
      $region58: #{tpu_custom_call.1} parent=5 // pred_check_branch
        %488 = sbr.rel (%p485) target = $region60
      $region59: #{tpu_custom_call.1} parent=5 // pred_region
        %s489 = ssub.s32 %s24, 1
        %p490 = scmp.lt.s32.totalorder %s33, 0
        %s491 = scalar_select %p490, %s33, 0
        %s492 = smul.addr %s491, 8
        %s493 = scalar_lea.vmem %s0, %s492
        %p494 = pneg %p62
        %p495 = pneg %p59
        %p496 = pneg %p83
        %p497 = pneg %p80
        %p498 = pneg %p104
        %p499 = pneg %p101
        %p500 = scmp.lt.s32.totalorder %s34, 2
        %s501 = scalar_select %p500, %s34, 2
        %s502 = smul.addr %s501, 8
        %s503 = smul.addr %s502, 4
        %s504 = scalar_lea.vmem %s3, %s503
        %p505 = pneg %p130
        %p506 = pneg %p127
        %p507 = scmp.lt.s32.totalorder %s34, 2
        %s508 = scalar_select %p507, %s34, 2
        %s509 = smul.addr %s508, 32
        %s510 = smul.addr %s509, 8
        %s511 = scalar_lea.vmem %s4, %s510
        %p512 = pneg %p156
        %p513 = pneg %p153
        %p514 = scmp.lt.s32.totalorder %s34, 2
        %s515 = scalar_select %p514, %s34, 2
        %s516 = smul.addr %s515, 64
        %s517 = smul.addr %s516, 8
        %s518 = scalar_lea.vmem %s5, %s517
        %p519 = pneg %p182
        %p520 = pneg %p179
        %p521 = scmp.lt.s32.totalorder %s34, 2
        %s522 = scalar_select %p521, %s34, 2
        %s523 = smul.addr %s522, 8
        %s524 = scalar_lea.vmem %s6, %s523
        %p525 = pneg %p208
        %p526 = pneg %p205
        %p527 = scmp.lt.s32.totalorder %s34, 2
        %s528 = scalar_select %p527, %s34, 2
        %s529 = smul.addr %s528, 16
        %s530 = smul.addr %s529, 2
        %s531 = scalar_lea.vmem %s7, %s530
        %p532 = pneg %p234
        %p533 = pneg %p231
        %p534 = pneg %p255
        %p535 = pneg %p252
        %p536 = pneg %p276
        %p537 = pneg %p273
        %p538 = pneg %p302
        %p539 = pneg %p299
        %p540 = pneg %p328
        %p541 = pneg %p325
        %p542 = pneg %p354
        %p543 = pneg %p351
        %p544 = pneg %p380
        %p545 = pneg %p377
        %p546 = pneg %p406
        %p547 = pneg %p403
        %p548 = scmp.lt.s32.totalorder %s33, 0
        %s549 = scalar_select %p548, %s33, 0
        %s550 = smul.addr %s549, 8
        %s551 = scalar_lea.vmem %s0, %s550
        %p552 = scmp.lt.s32.totalorder %s34, 2
        %s553 = scalar_select %p552, %s34, 2
        %s554 = smul.addr %s553, 8
        %s555 = smul.addr %s554, 4
        %s556 = scalar_lea.vmem %s3, %s555
        %p557 = scmp.lt.s32.totalorder %s34, 2
        %s558 = scalar_select %p557, %s34, 2
        %s559 = smul.addr %s558, 32
        %s560 = smul.addr %s559, 8
        %s561 = scalar_lea.vmem %s4, %s560
        %p562 = scmp.lt.s32.totalorder %s34, 2
        %s563 = scalar_select %p562, %s34, 2
        %s564 = smul.addr %s563, 64
        %s565 = smul.addr %s564, 8
        %s566 = scalar_lea.vmem %s5, %s565
        %p567 = scmp.lt.s32.totalorder %s34, 2
        %s568 = scalar_select %p567, %s34, 2
        %s569 = smul.addr %s568, 8
        %s570 = scalar_lea.vmem %s6, %s569
        %p571 = scmp.lt.s32.totalorder %s34, 2
        %s572 = scalar_select %p571, %s34, 2
        %s573 = smul.addr %s572, 16
        %s574 = smul.addr %s573, 2
        %s575 = scalar_lea.vmem %s7, %s574
        %p577 = scmp.eq.s32.totalorder %s34, 0
        // Predicated region
        $region61: #{tpu_custom_call.1} parent=59 // pred_check
          %p578 = pneg %p577
        $region62: #{tpu_custom_call.1} parent=59 // pred_check_branch
          %580 = sbr.rel (%p578) target = $region64
        $region63: #{tpu_custom_call.1} parent=59 // pred_region
          %v581 = vld [vmem:[%s551] sm:$0xff]
          %v582 = vpack.c.bf16 %v581, %v581
          %v583 = vld [vmem:[%s1] sm:$0xf]
          %v584 = vld [vmem:[%s1 + $0x4] sm:$0xf]
          %v585 = vld [vmem:[%s2] sm:$0x1]
          %v587 = vlaneseq
          %v588 = vshrl.u32 %v587, 7
          %v589 = vsub.s32 0, %v588
          %v590 = vrot.slane %v585, %v589
          %v594 = vunpack.c.l.b16 %v583
          %v595 = vunpack.c.l.b16 %v584
          %v596 = vpack.c.b16 %v595, %v594
          %vm598 = vcmask 130048
          %v600 = vsel %vm598, %v582, 0
          %602 = vmatprep.subr.bf16.mxu0 0
          %603 = vmatpush1.bf16.msra.mxu0 %v596
          %604 = vmatprep.subr.bf16.mxu0 0
          %605 = vmatpush1.bf16.msra.mxu0 0
          %606 = vmatprep.subr.bf16.mxu0 0
          %607 = vmatpush1.bf16.msra.mxu0 0
          %608 = vmatprep.subr.bf16.mxu0 0
          %609 = vmatpush1.bf16.msra.mxu0 0
          %610 = vmatprep.subr.bf16.mxu0 0
          %611 = vmatpush1.bf16.msra.mxu0 0
          %612 = vmatprep.subr.bf16.mxu0 0
          %613 = vmatpush1.bf16.msra.mxu0 0
          %614 = vmatprep.subr.bf16.mxu0 0
          %615 = vmatpush1.bf16.msra.mxu0 0
          %616 = vmatprep.subr.bf16.mxu0 0
          %617 = vmatpush1.bf16.msra.mxu0 0
          %618 = vmatprep.subr.bf16.mxu0 0
          %619 = vmatpush1.bf16.msra.mxu0 0
          %620 = vmatprep.subr.bf16.mxu0 0
          %621 = vmatpush1.bf16.msra.mxu0 0
          %622 = vmatprep.subr.bf16.mxu0 0
          %623 = vmatpush1.bf16.msra.mxu0 0
          %624 = vmatprep.subr.bf16.mxu0 0
          %625 = vmatpush1.bf16.msra.mxu0 0
          %626 = vmatprep.subr.bf16.mxu0 0
          %627 = vmatpush1.bf16.msra.mxu0 0
          %628 = vmatprep.subr.bf16.mxu0 0
          %629 = vmatpush1.bf16.msra.mxu0 0
          %630 = vmatprep.subr.bf16.mxu0 0
          %631 = vmatpush1.bf16.msra.mxu0 0
          %632 = vmatprep.subr.bf16.mxu0 0
          %633 = vmatpush1.bf16.msra.mxu0 0
          %634 = vmatprep.mubr.bf16.mxu0 0
          %635 = vmatmul.mubr.bf16.gmra.mrb[0].mxu0 %v600
          %v636 = vpop.f32.mrb[0].mxu0
          %v637 = vadd.f32 %v590, %v636
          %v638 = vpop.f32.mrb[0].mxu0
          %v639 = vpop.f32.mrb[0].mxu0
          %v640 = vpop.f32.mrb[0].mxu0
          %641 = vdwg.mxu0
          %v642 = vxor.u32 %v637, 2147483648
          %v643 = vmul.f32 %v642, 1.442695
          %v644 = vpow.pop %v643
          %v645 = vadd.f32 %v644, 1.0
          %v646 = vrcp.pop %v645
          %v647 = vmul.f32 1.0, %v646
          %v648 = vmul.f32 %v637, %v647
          %vm649 = vcmask 523264
          %650 = vst.msk [vmem:[#allocation2] sm:$0xff] %vm649, %v648
        $region64: #{tpu_custom_call.1} parent=59 // pred_fallthru
          _
        %v651 = vld [vmem:[%s570] sm:$0xff]
        %v652 = vld [vmem:[%s575] sm:$0xff]
        %v653 = vld [vmem:[%s575 + $0x8] sm:$0xff]
        %v654 = vld [vmem:[%s575 + $0x10] sm:$0xff]
        %v655 = vld [vmem:[%s575 + $0x18] sm:$0xff]
        %v656 = vld [vmem:[#allocation2] sm:$0xff]
        %v657 = vpack.c.bf16 %v656, %v656
        %v658 = vld [vmem:[%s556] sm:$0xf]
        %v659 = vld [vmem:[%s556 + $0x4] sm:$0xf]
        %v660 = vld [vmem:[%s556 + $0x8] sm:$0xf]
        %v661 = vld [vmem:[%s556 + $0xc] sm:$0xf]
        %v662 = vld [vmem:[%s556 + $0x10] sm:$0xf]
        %v663 = vld [vmem:[%s556 + $0x14] sm:$0xf]
        %v664 = vld [vmem:[%s556 + $0x18] sm:$0xf]
        %v665 = vld [vmem:[%s556 + $0x1c] sm:$0xf]
        %v666 = vlaneseq
        %v667 = vshrl.u32 %v666, 7
        %v668 = vsub.s32 0, %v667
        %v669 = vrot.slane %v651, %v668
        %v678 = vunpack.c.l.b16 %v658
        %v679 = vunpack.c.l.b16 %v659
        %v680 = vunpack.c.l.b16 %v660
        %v681 = vunpack.c.l.b16 %v661
        %v682 = vunpack.c.l.b16 %v662
        %v683 = vunpack.c.l.b16 %v663
        %v684 = vunpack.c.l.b16 %v664
        %v685 = vunpack.c.l.b16 %v665
        %v686 = vpack.c.b16 %v679, %v678
        %v687 = vpack.c.b16 %v681, %v680
        %v688 = vpack.c.b16 %v683, %v682
        %v689 = vpack.c.b16 %v685, %v684
        %vm694 = vcmask 523264
        %v696 = vsel %vm694, %v657, 0
        %698 = vmatprep.subr.bf16.mxu0 0
        %699 = vmatpush1.bf16.msra.mxu0 %v686
        %700 = vmatprep.subr.bf16.mxu0 0
        %701 = vmatpush1.bf16.msra.mxu0 %v687
        %702 = vmatprep.subr.bf16.mxu0 0
        %703 = vmatpush1.bf16.msra.mxu0 %v688
        %704 = vmatprep.subr.bf16.mxu0 0
        %705 = vmatpush1.bf16.msra.mxu0 %v689
        %706 = vmatprep.subr.bf16.mxu0 0
        %707 = vmatpush1.bf16.msra.mxu0 0
        %708 = vmatprep.subr.bf16.mxu0 0
        %709 = vmatpush1.bf16.msra.mxu0 0
        %710 = vmatprep.subr.bf16.mxu0 0
        %711 = vmatpush1.bf16.msra.mxu0 0
        %712 = vmatprep.subr.bf16.mxu0 0
        %713 = vmatpush1.bf16.msra.mxu0 0
        %714 = vmatprep.subr.bf16.mxu0 0
        %715 = vmatpush1.bf16.msra.mxu0 0
        %716 = vmatprep.subr.bf16.mxu0 0
        %717 = vmatpush1.bf16.msra.mxu0 0
        %718 = vmatprep.subr.bf16.mxu0 0
        %719 = vmatpush1.bf16.msra.mxu0 0
        %720 = vmatprep.subr.bf16.mxu0 0
        %721 = vmatpush1.bf16.msra.mxu0 0
        %722 = vmatprep.subr.bf16.mxu0 0
        %723 = vmatpush1.bf16.msra.mxu0 0
        %724 = vmatprep.subr.bf16.mxu0 0
        %725 = vmatpush1.bf16.msra.mxu0 0
        %726 = vmatprep.subr.bf16.mxu0 0
        %727 = vmatpush1.bf16.msra.mxu0 0
        %728 = vmatprep.subr.bf16.mxu0 0
        %729 = vmatpush1.bf16.msra.mxu0 0
        %730 = vmatprep.mubr.bf16.mxu0 0
        %731 = vmatmul.mubr.bf16.gmra.mrb[0].mxu0 %v696
        %v732 = vpop.f32.mrb[0].mxu0
        %v733 = vadd.f32 %v669, %v732
        %v734 = vpop.f32.mrb[0].mxu0
        %v735 = vpop.f32.mrb[0].mxu0
        %v736 = vpop.f32.mrb[0].mxu0
        %737 = vdwg.mxu0
        %v738 = vadd.f32 %v656, %v733
        %v739 = vsel %vm694, %v738, 0.0
        %740 = vadd.xlane.f32.xlu0 %v739
        %v741 = vpop.xlane.xlu0 %740
        %v742 = vrcp.pop 64.0
        %v743 = vmul.f32 %v741, %v742
        %v744 = vsub.f32 %v738, %v743
        %v745 = vmul.f32 %v744, %v744
        %v746 = vsel %vm694, %v745, 0.0
        %747 = vadd.xlane.f32.xlu0 %v746
        %v748 = vpop.xlane.xlu0 %747
        %v749 = vmul.f32 %v748, %v742
        %v750 = vadd.f32 %v749, 1e-05
        %v751 = vrsqrt.pop %v750
        %v752 = vmul.f32 %v744, %v751
        %v753 = vlaneseq
        %v754 = vshrl.u32 %v753, 7
        %v755 = vsub.s32 2, %v754
        %v756 = vrot.slane %v651, %v755
        %v757 = vmul.f32 %v752, %v756
        %v758 = vlaneseq
        %v759 = vshrl.u32 %v758, 7
        %v760 = vsub.s32 3, %v759
        %v761 = vrot.slane %v651, %v760
        %v762 = vadd.f32 %v757, %v761
        %v763 = vld [vmem:[%s561] sm:$0xff]
        %v764 = vld [vmem:[%s561 + $0x8] sm:$0xff]
        %v765 = vld [vmem:[%s561 + $0x10] sm:$0xff]
        %v766 = vld [vmem:[%s561 + $0x18] sm:$0xff]
        %v767 = vld [vmem:[%s561 + $0x20] sm:$0xff]
        %v768 = vld [vmem:[%s561 + $0x28] sm:$0xff]
        %v769 = vld [vmem:[%s561 + $0x30] sm:$0xff]
        %v770 = vld [vmem:[%s561 + $0x38] sm:$0xff]
        %v771 = vld [vmem:[%s561 + $0x40] sm:$0xff]
        %v772 = vld [vmem:[%s561 + $0x48] sm:$0xff]
        %v773 = vld [vmem:[%s561 + $0x50] sm:$0xff]
        %v774 = vld [vmem:[%s561 + $0x58] sm:$0xff]
        %v775 = vld [vmem:[%s561 + $0x60] sm:$0xff]
        %v776 = vld [vmem:[%s561 + $0x68] sm:$0xff]
        %v777 = vld [vmem:[%s561 + $0x70] sm:$0xff]
        %v778 = vld [vmem:[%s561 + $0x78] sm:$0xff]
        %v779 = vld [vmem:[%s561 + $0x80] sm:$0xff]
        %v780 = vld [vmem:[%s561 + $0x88] sm:$0xff]
        %v781 = vld [vmem:[%s561 + $0x90] sm:$0xff]
        %v782 = vld [vmem:[%s561 + $0x98] sm:$0xff]
        %v783 = vld [vmem:[%s561 + $0xa0] sm:$0xff]
        %v784 = vld [vmem:[%s561 + $0xa8] sm:$0xff]
        %v785 = vld [vmem:[%s561 + $0xb0] sm:$0xff]
        %v786 = vld [vmem:[%s561 + $0xb8] sm:$0xff]
        %v787 = vld [vmem:[%s561 + $0xc0] sm:$0xff]
        %v788 = vld [vmem:[%s561 + $0xc8] sm:$0xff]
        %v789 = vld [vmem:[%s561 + $0xd0] sm:$0xff]
        %v790 = vld [vmem:[%s561 + $0xd8] sm:$0xff]
        %v791 = vld [vmem:[%s561 + $0xe0] sm:$0xff]
        %v792 = vld [vmem:[%s561 + $0xe8] sm:$0xff]
        %v793 = vld [vmem:[%s561 + $0xf0] sm:$0xff]
        %v794 = vld [vmem:[%s561 + $0xf8] sm:$0xff]
        %v795 = vunpack.c.0.s8 %v763
        %v796 = vunpack.c.0.s8 %v764
        %v797 = vunpack.c.0.s8 %v765
        %v798 = vunpack.c.0.s8 %v766
        %v799 = vunpack.c.0.s8 %v767
        %v800 = vunpack.c.0.s8 %v768
        %v801 = vunpack.c.0.s8 %v769
        %v802 = vunpack.c.0.s8 %v770
        %v803 = vunpack.c.0.s8 %v771
        %v804 = vunpack.c.0.s8 %v772
        %v805 = vunpack.c.0.s8 %v773
        %v806 = vunpack.c.0.s8 %v774
        %v807 = vunpack.c.0.s8 %v775
        %v808 = vunpack.c.0.s8 %v776
        %v809 = vunpack.c.0.s8 %v777
        %v810 = vunpack.c.0.s8 %v778
        %v811 = vunpack.c.1.s8 %v763
        %v812 = vunpack.c.1.s8 %v764
        %v813 = vunpack.c.1.s8 %v765
        %v814 = vunpack.c.1.s8 %v766
        %v815 = vunpack.c.1.s8 %v767
        %v816 = vunpack.c.1.s8 %v768
        %v817 = vunpack.c.1.s8 %v769
        %v818 = vunpack.c.1.s8 %v770
        %v819 = vunpack.c.1.s8 %v771
        %v820 = vunpack.c.1.s8 %v772
        %v821 = vunpack.c.1.s8 %v773
        %v822 = vunpack.c.1.s8 %v774
        %v823 = vunpack.c.1.s8 %v775
        %v824 = vunpack.c.1.s8 %v776
        %v825 = vunpack.c.1.s8 %v777
        %v826 = vunpack.c.1.s8 %v778
        %v827 = vunpack.c.2.s8 %v763
        %v828 = vunpack.c.2.s8 %v764
        %v829 = vunpack.c.2.s8 %v765
        %v830 = vunpack.c.2.s8 %v766
        %v831 = vunpack.c.2.s8 %v767
        %v832 = vunpack.c.2.s8 %v768
        %v833 = vunpack.c.2.s8 %v769
        %v834 = vunpack.c.2.s8 %v770
        %v835 = vunpack.c.2.s8 %v771
        %v836 = vunpack.c.2.s8 %v772
        %v837 = vunpack.c.2.s8 %v773
        %v838 = vunpack.c.2.s8 %v774
        %v839 = vunpack.c.2.s8 %v775
        %v840 = vunpack.c.2.s8 %v776
        %v841 = vunpack.c.2.s8 %v777
        %v842 = vunpack.c.2.s8 %v778
        %v843 = vunpack.c.3.s8 %v763
        %v844 = vunpack.c.3.s8 %v764
        %v845 = vunpack.c.3.s8 %v765
        %v846 = vunpack.c.3.s8 %v766
        %v847 = vunpack.c.3.s8 %v767
        %v848 = vunpack.c.3.s8 %v768
        %v849 = vunpack.c.3.s8 %v769
        %v850 = vunpack.c.3.s8 %v770
        %v851 = vunpack.c.3.s8 %v771
        %v852 = vunpack.c.3.s8 %v772
        %v853 = vunpack.c.3.s8 %v773
        %v854 = vunpack.c.3.s8 %v774
        %v855 = vunpack.c.3.s8 %v775
        %v856 = vunpack.c.3.s8 %v776
        %v857 = vunpack.c.3.s8 %v777
        %v858 = vunpack.c.3.s8 %v778
        %v859 = vunpack.c.0.s8 %v779
        %v860 = vunpack.c.0.s8 %v780
        %v861 = vunpack.c.0.s8 %v781
        %v862 = vunpack.c.0.s8 %v782
        %v863 = vunpack.c.0.s8 %v783
        %v864 = vunpack.c.0.s8 %v784
        %v865 = vunpack.c.0.s8 %v785
        %v866 = vunpack.c.0.s8 %v786
        %v867 = vunpack.c.0.s8 %v787
        %v868 = vunpack.c.0.s8 %v788
        %v869 = vunpack.c.0.s8 %v789
        %v870 = vunpack.c.0.s8 %v790
        %v871 = vunpack.c.0.s8 %v791
        %v872 = vunpack.c.0.s8 %v792
        %v873 = vunpack.c.0.s8 %v793
        %v874 = vunpack.c.0.s8 %v794
        %v875 = vunpack.c.1.s8 %v779
        %v876 = vunpack.c.1.s8 %v780
        %v877 = vunpack.c.1.s8 %v781
        %v878 = vunpack.c.1.s8 %v782
        %v879 = vunpack.c.1.s8 %v783
        %v880 = vunpack.c.1.s8 %v784
        %v881 = vunpack.c.1.s8 %v785
        %v882 = vunpack.c.1.s8 %v786
        %v883 = vunpack.c.1.s8 %v787
        %v884 = vunpack.c.1.s8 %v788
        %v885 = vunpack.c.1.s8 %v789
        %v886 = vunpack.c.1.s8 %v790
        %v887 = vunpack.c.1.s8 %v791
        %v888 = vunpack.c.1.s8 %v792
        %v889 = vunpack.c.1.s8 %v793
        %v890 = vunpack.c.1.s8 %v794
        %v891 = vunpack.c.2.s8 %v779
        %v892 = vunpack.c.2.s8 %v780
        %v893 = vunpack.c.2.s8 %v781
        %v894 = vunpack.c.2.s8 %v782
        %v895 = vunpack.c.2.s8 %v783
        %v896 = vunpack.c.2.s8 %v784
        %v897 = vunpack.c.2.s8 %v785
        %v898 = vunpack.c.2.s8 %v786
        %v899 = vunpack.c.2.s8 %v787
        %v900 = vunpack.c.2.s8 %v788
        %v901 = vunpack.c.2.s8 %v789
        %v902 = vunpack.c.2.s8 %v790
        %v903 = vunpack.c.2.s8 %v791
        %v904 = vunpack.c.2.s8 %v792
        %v905 = vunpack.c.2.s8 %v793
        %v906 = vunpack.c.2.s8 %v794
        %v907 = vunpack.c.3.s8 %v779
        %v908 = vunpack.c.3.s8 %v780
        %v909 = vunpack.c.3.s8 %v781
        %v910 = vunpack.c.3.s8 %v782
        %v911 = vunpack.c.3.s8 %v783
        %v912 = vunpack.c.3.s8 %v784
        %v913 = vunpack.c.3.s8 %v785
        %v914 = vunpack.c.3.s8 %v786
        %v915 = vunpack.c.3.s8 %v787
        %v916 = vunpack.c.3.s8 %v788
        %v917 = vunpack.c.3.s8 %v789
        %v918 = vunpack.c.3.s8 %v790
        %v919 = vunpack.c.3.s8 %v791
        %v920 = vunpack.c.3.s8 %v792
        %v921 = vunpack.c.3.s8 %v793
        %v922 = vunpack.c.3.s8 %v794
        %v923 = vcvt.s32.f32 %v795
        %v924 = vcvt.s32.f32 %v796
        %v925 = vcvt.s32.f32 %v797
        %v926 = vcvt.s32.f32 %v798
        %v927 = vcvt.s32.f32 %v799
        %v928 = vcvt.s32.f32 %v800
        %v929 = vcvt.s32.f32 %v801
        %v930 = vcvt.s32.f32 %v802
        %v931 = vcvt.s32.f32 %v803
        %v932 = vcvt.s32.f32 %v804
        %v933 = vcvt.s32.f32 %v805
        %v934 = vcvt.s32.f32 %v806
        %v935 = vcvt.s32.f32 %v807
        %v936 = vcvt.s32.f32 %v808
        %v937 = vcvt.s32.f32 %v809
        %v938 = vcvt.s32.f32 %v810
        %v939 = vcvt.s32.f32 %v811
        %v940 = vcvt.s32.f32 %v812
        %v941 = vcvt.s32.f32 %v813
        %v942 = vcvt.s32.f32 %v814
        %v943 = vcvt.s32.f32 %v815
        %v944 = vcvt.s32.f32 %v816
        %v945 = vcvt.s32.f32 %v817
        %v946 = vcvt.s32.f32 %v818
        %v947 = vcvt.s32.f32 %v819
        %v948 = vcvt.s32.f32 %v820
        %v949 = vcvt.s32.f32 %v821
        %v950 = vcvt.s32.f32 %v822
        %v951 = vcvt.s32.f32 %v823
        %v952 = vcvt.s32.f32 %v824
        %v953 = vcvt.s32.f32 %v825
        %v954 = vcvt.s32.f32 %v826
        %v955 = vcvt.s32.f32 %v827
        %v956 = vcvt.s32.f32 %v828
        %v957 = vcvt.s32.f32 %v829
        %v958 = vcvt.s32.f32 %v830
        %v959 = vcvt.s32.f32 %v831
        %v960 = vcvt.s32.f32 %v832
        %v961 = vcvt.s32.f32 %v833
        %v962 = vcvt.s32.f32 %v834
        %v963 = vcvt.s32.f32 %v835
        %v964 = vcvt.s32.f32 %v836
        %v965 = vcvt.s32.f32 %v837
        %v966 = vcvt.s32.f32 %v838
        %v967 = vcvt.s32.f32 %v839
        %v968 = vcvt.s32.f32 %v840
        %v969 = vcvt.s32.f32 %v841
        %v970 = vcvt.s32.f32 %v842
        %v971 = vcvt.s32.f32 %v843
        %v972 = vcvt.s32.f32 %v844
        %v973 = vcvt.s32.f32 %v845
        %v974 = vcvt.s32.f32 %v846
        %v975 = vcvt.s32.f32 %v847
        %v976 = vcvt.s32.f32 %v848
        %v977 = vcvt.s32.f32 %v849
        %v978 = vcvt.s32.f32 %v850
        %v979 = vcvt.s32.f32 %v851
        %v980 = vcvt.s32.f32 %v852
        %v981 = vcvt.s32.f32 %v853
        %v982 = vcvt.s32.f32 %v854
        %v983 = vcvt.s32.f32 %v855
        %v984 = vcvt.s32.f32 %v856
        %v985 = vcvt.s32.f32 %v857
        %v986 = vcvt.s32.f32 %v858
        %v987 = vcvt.s32.f32 %v859
        %v988 = vcvt.s32.f32 %v860
        %v989 = vcvt.s32.f32 %v861
        %v990 = vcvt.s32.f32 %v862
        %v991 = vcvt.s32.f32 %v863
        %v992 = vcvt.s32.f32 %v864
        %v993 = vcvt.s32.f32 %v865
        %v994 = vcvt.s32.f32 %v866
        %v995 = vcvt.s32.f32 %v867
        %v996 = vcvt.s32.f32 %v868
        %v997 = vcvt.s32.f32 %v869
        %v998 = vcvt.s32.f32 %v870
        %v999 = vcvt.s32.f32 %v871
        %v1000 = vcvt.s32.f32 %v872
        %v1001 = vcvt.s32.f32 %v873
        %v1002 = vcvt.s32.f32 %v874
        %v1003 = vcvt.s32.f32 %v875
        %v1004 = vcvt.s32.f32 %v876
        %v1005 = vcvt.s32.f32 %v877
        %v1006 = vcvt.s32.f32 %v878
        %v1007 = vcvt.s32.f32 %v879
        %v1008 = vcvt.s32.f32 %v880
        %v1009 = vcvt.s32.f32 %v881
        %v1010 = vcvt.s32.f32 %v882
        %v1011 = vcvt.s32.f32 %v883
        %v1012 = vcvt.s32.f32 %v884
        %v1013 = vcvt.s32.f32 %v885
        %v1014 = vcvt.s32.f32 %v886
        %v1015 = vcvt.s32.f32 %v887
        %v1016 = vcvt.s32.f32 %v888
        %v1017 = vcvt.s32.f32 %v889
        %v1018 = vcvt.s32.f32 %v890
        %v1019 = vcvt.s32.f32 %v891
        %v1020 = vcvt.s32.f32 %v892
        %v1021 = vcvt.s32.f32 %v893
        %v1022 = vcvt.s32.f32 %v894
        %v1023 = vcvt.s32.f32 %v895
        %v1024 = vcvt.s32.f32 %v896
        %v1025 = vcvt.s32.f32 %v897
        %v1026 = vcvt.s32.f32 %v898
        %v1027 = vcvt.s32.f32 %v899
        %v1028 = vcvt.s32.f32 %v900
        %v1029 = vcvt.s32.f32 %v901
        %v1030 = vcvt.s32.f32 %v902
        %v1031 = vcvt.s32.f32 %v903
        %v1032 = vcvt.s32.f32 %v904
        %v1033 = vcvt.s32.f32 %v905
        %v1034 = vcvt.s32.f32 %v906
        %v1035 = vcvt.s32.f32 %v907
        %v1036 = vcvt.s32.f32 %v908
        %v1037 = vcvt.s32.f32 %v909
        %v1038 = vcvt.s32.f32 %v910
        %v1039 = vcvt.s32.f32 %v911
        %v1040 = vcvt.s32.f32 %v912
        %v1041 = vcvt.s32.f32 %v913
        %v1042 = vcvt.s32.f32 %v914
        %v1043 = vcvt.s32.f32 %v915
        %v1044 = vcvt.s32.f32 %v916
        %v1045 = vcvt.s32.f32 %v917
        %v1046 = vcvt.s32.f32 %v918
        %v1047 = vcvt.s32.f32 %v919
        %v1048 = vcvt.s32.f32 %v920
        %v1049 = vcvt.s32.f32 %v921
        %v1050 = vcvt.s32.f32 %v922
        %v1052 = vsel %vm694, %v762, 0
        %1054 = vmatprep.subr.mxu0 %v924
        %1055 = vmatpush1.msra.mxu0 %v923
        %1056 = vmatprep.subr.mxu0 %v940
        %1057 = vmatpush1.msra.mxu0 %v939
        %1058 = vmatprep.subr.mxu0 %v956
        %1059 = vmatpush1.msra.mxu0 %v955
        %1060 = vmatprep.subr.mxu0 %v972
        %1061 = vmatpush1.msra.mxu0 %v971
        %1062 = vmatprep.subr.mxu0 %v988
        %1063 = vmatpush1.msra.mxu0 %v987
        %1064 = vmatprep.subr.mxu0 %v1004
        %1065 = vmatpush1.msra.mxu0 %v1003
        %1066 = vmatprep.subr.mxu0 %v1020
        %1067 = vmatpush1.msra.mxu0 %v1019
        %1068 = vmatprep.subr.mxu0 %v1036
        %1069 = vmatpush1.msra.mxu0 %v1035
        %1070 = vmatprep.subr.mxu0 0.0
        %1071 = vmatpush1.msra.mxu0 0.0
        %1072 = vmatprep.subr.mxu0 0.0
        %1073 = vmatpush1.msra.mxu0 0.0
        %1074 = vmatprep.subr.mxu0 0.0
        %1075 = vmatpush1.msra.mxu0 0.0
        %1076 = vmatprep.subr.mxu0 0.0
        %1077 = vmatpush1.msra.mxu0 0.0
        %1078 = vmatprep.subr.mxu0 0.0
        %1079 = vmatpush1.msra.mxu0 0.0
        %1080 = vmatprep.subr.mxu0 0.0
        %1081 = vmatpush1.msra.mxu0 0.0
        %1082 = vmatprep.subr.mxu0 0.0
        %1083 = vmatpush1.msra.mxu0 0.0
        %1084 = vmatprep.subr.mxu0 0.0
        %1085 = vmatpush1.msra.mxu0 0.0
        %1086 = vmatprep.subr.mxu0 0.0
        %1087 = vmatpush1.msra.mxu0 0.0
        %1088 = vmatprep.subr.mxu0 0.0
        %1089 = vmatpush1.msra.mxu0 0.0
        %1090 = vmatprep.subr.mxu0 0.0
        %1091 = vmatpush1.msra.mxu0 0.0
        %1092 = vmatprep.subr.mxu0 0.0
        %1093 = vmatpush1.msra.mxu0 0.0
        %1094 = vmatprep.subr.mxu0 0.0
        %1095 = vmatpush1.msra.mxu0 0.0
        %1096 = vmatprep.subr.mxu0 0.0
        %1097 = vmatpush1.msra.mxu0 0.0
        %1098 = vmatprep.subr.mxu0 0.0
        %1099 = vmatpush1.msra.mxu0 0.0
        %1100 = vmatprep.subr.mxu0 0.0
        %1101 = vmatpush1.msra.mxu0 0.0
        %1102 = vmatprep.subr.mxu0 0.0
        %1103 = vmatpush1.msra.mxu0 0.0
        %1104 = vmatprep.subr.mxu0 0.0
        %1105 = vmatpush1.msra.mxu0 0.0
        %1106 = vmatprep.subr.mxu0 0.0
        %1107 = vmatpush1.msra.mxu0 0.0
        %1108 = vmatprep.subr.mxu0 0.0
        %1109 = vmatpush1.msra.mxu0 0.0
        %1110 = vmatprep.subr.mxu0 0.0
        %1111 = vmatpush1.msra.mxu0 0.0
        %1112 = vmatprep.subr.mxu0 0.0
        %1113 = vmatpush1.msra.mxu0 0.0
        %1114 = vmatprep.subr.mxu0 0.0
        %1115 = vmatpush1.msra.mxu0 0.0
        %1116 = vmatprep.subr.mxu0 0.0
        %1117 = vmatpush1.msra.mxu0 0.0
        %1118 = vmatprep.mubr.f32.mxu0 0.0
        %1119 = vmatmul.mubr.f32.gmra.mrb[0].mxu0 %v1052
        %v1120 = vpop.f32.mrb[0].mxu0
        %v1121 = vadd.f32 0.0, %v1120
        %v1122 = vpop.f32.mrb[0].mxu0
        %v1123 = vadd.f32 0.0, %v1122
        %1124 = vdwg.mxu0
        %1125 = vmatprep.subr.mxu0 %v926
        %1126 = vmatpush1.msra.mxu0 %v925
        %1127 = vmatprep.subr.mxu0 %v942
        %1128 = vmatpush1.msra.mxu0 %v941
        %1129 = vmatprep.subr.mxu0 %v958
        %1130 = vmatpush1.msra.mxu0 %v957
        %1131 = vmatprep.subr.mxu0 %v974
        %1132 = vmatpush1.msra.mxu0 %v973
        %1133 = vmatprep.subr.mxu0 %v990
        %1134 = vmatpush1.msra.mxu0 %v989
        %1135 = vmatprep.subr.mxu0 %v1006
        %1136 = vmatpush1.msra.mxu0 %v1005
        %1137 = vmatprep.subr.mxu0 %v1022
        %1138 = vmatpush1.msra.mxu0 %v1021
        %1139 = vmatprep.subr.mxu0 %v1038
        %1140 = vmatpush1.msra.mxu0 %v1037
        %1141 = vmatprep.subr.mxu0 0.0
        %1142 = vmatpush1.msra.mxu0 0.0
        %1143 = vmatprep.subr.mxu0 0.0
        %1144 = vmatpush1.msra.mxu0 0.0
        %1145 = vmatprep.subr.mxu0 0.0
        %1146 = vmatpush1.msra.mxu0 0.0
        %1147 = vmatprep.subr.mxu0 0.0
        %1148 = vmatpush1.msra.mxu0 0.0
        %1149 = vmatprep.subr.mxu0 0.0
        %1150 = vmatpush1.msra.mxu0 0.0
        %1151 = vmatprep.subr.mxu0 0.0
        %1152 = vmatpush1.msra.mxu0 0.0
        %1153 = vmatprep.subr.mxu0 0.0
        %1154 = vmatpush1.msra.mxu0 0.0
        %1155 = vmatprep.subr.mxu0 0.0
        %1156 = vmatpush1.msra.mxu0 0.0
        %1157 = vmatprep.subr.mxu0 0.0
        %1158 = vmatpush1.msra.mxu0 0.0
        %1159 = vmatprep.subr.mxu0 0.0
        %1160 = vmatpush1.msra.mxu0 0.0
        %1161 = vmatprep.subr.mxu0 0.0
        %1162 = vmatpush1.msra.mxu0 0.0
        %1163 = vmatprep.subr.mxu0 0.0
        %1164 = vmatpush1.msra.mxu0 0.0
        %1165 = vmatprep.subr.mxu0 0.0
        %1166 = vmatpush1.msra.mxu0 0.0
        %1167 = vmatprep.subr.mxu0 0.0
        %1168 = vmatpush1.msra.mxu0 0.0
        %1169 = vmatprep.subr.mxu0 0.0
        %1170 = vmatpush1.msra.mxu0 0.0
        %1171 = vmatprep.subr.mxu0 0.0
        %1172 = vmatpush1.msra.mxu0 0.0
        %1173 = vmatprep.subr.mxu0 0.0
        %1174 = vmatpush1.msra.mxu0 0.0
        %1175 = vmatprep.subr.mxu0 0.0
        %1176 = vmatpush1.msra.mxu0 0.0
        %1177 = vmatprep.subr.mxu0 0.0
        %1178 = vmatpush1.msra.mxu0 0.0
        %1179 = vmatprep.subr.mxu0 0.0
        %1180 = vmatpush1.msra.mxu0 0.0
        %1181 = vmatprep.subr.mxu0 0.0
        %1182 = vmatpush1.msra.mxu0 0.0
        %1183 = vmatprep.subr.mxu0 0.0
        %1184 = vmatpush1.msra.mxu0 0.0
        %1185 = vmatprep.subr.mxu0 0.0
        %1186 = vmatpush1.msra.mxu0 0.0
        %1187 = vmatprep.subr.mxu0 0.0
        %1188 = vmatpush1.msra.mxu0 0.0
        %1189 = vmatprep.mubr.f32.mxu0 0.0
        %1190 = vmatmul.mubr.f32.gmra.mrb[0].mxu0 %v1052
        %v1191 = vpop.f32.mrb[0].mxu0
        %v1192 = vadd.f32 0.0, %v1191
        %v1193 = vpop.f32.mrb[0].mxu0
        %v1194 = vadd.f32 0.0, %v1193
        %1195 = vdwg.mxu0
        %1196 = vmatprep.subr.mxu0 %v928
        %1197 = vmatpush1.msra.mxu0 %v927
        %1198 = vmatprep.subr.mxu0 %v944
        %1199 = vmatpush1.msra.mxu0 %v943
        %1200 = vmatprep.subr.mxu0 %v960
        %1201 = vmatpush1.msra.mxu0 %v959
        %1202 = vmatprep.subr.mxu0 %v976
        %1203 = vmatpush1.msra.mxu0 %v975
        %1204 = vmatprep.subr.mxu0 %v992
        %1205 = vmatpush1.msra.mxu0 %v991
        %1206 = vmatprep.subr.mxu0 %v1008
        %1207 = vmatpush1.msra.mxu0 %v1007
        %1208 = vmatprep.subr.mxu0 %v1024
        %1209 = vmatpush1.msra.mxu0 %v1023
        %1210 = vmatprep.subr.mxu0 %v1040
        %1211 = vmatpush1.msra.mxu0 %v1039
        %1212 = vmatprep.subr.mxu0 0.0
        %1213 = vmatpush1.msra.mxu0 0.0
        %1214 = vmatprep.subr.mxu0 0.0
        %1215 = vmatpush1.msra.mxu0 0.0
        %1216 = vmatprep.subr.mxu0 0.0
        %1217 = vmatpush1.msra.mxu0 0.0
        %1218 = vmatprep.subr.mxu0 0.0
        %1219 = vmatpush1.msra.mxu0 0.0
        %1220 = vmatprep.subr.mxu0 0.0
        %1221 = vmatpush1.msra.mxu0 0.0
        %1222 = vmatprep.subr.mxu0 0.0
        %1223 = vmatpush1.msra.mxu0 0.0
        %1224 = vmatprep.subr.mxu0 0.0
        %1225 = vmatpush1.msra.mxu0 0.0
        %1226 = vmatprep.subr.mxu0 0.0
        %1227 = vmatpush1.msra.mxu0 0.0
        %1228 = vmatprep.subr.mxu0 0.0
        %1229 = vmatpush1.msra.mxu0 0.0
        %1230 = vmatprep.subr.mxu0 0.0
        %1231 = vmatpush1.msra.mxu0 0.0
        %1232 = vmatprep.subr.mxu0 0.0
        %1233 = vmatpush1.msra.mxu0 0.0
        %1234 = vmatprep.subr.mxu0 0.0
        %1235 = vmatpush1.msra.mxu0 0.0
        %1236 = vmatprep.subr.mxu0 0.0
        %1237 = vmatpush1.msra.mxu0 0.0
        %1238 = vmatprep.subr.mxu0 0.0
        %1239 = vmatpush1.msra.mxu0 0.0
        %1240 = vmatprep.subr.mxu0 0.0
        %1241 = vmatpush1.msra.mxu0 0.0
        %1242 = vmatprep.subr.mxu0 0.0
        %1243 = vmatpush1.msra.mxu0 0.0
        %1244 = vmatprep.subr.mxu0 0.0
        %1245 = vmatpush1.msra.mxu0 0.0
        %1246 = vmatprep.subr.mxu0 0.0
        %1247 = vmatpush1.msra.mxu0 0.0
        %1248 = vmatprep.subr.mxu0 0.0
        %1249 = vmatpush1.msra.mxu0 0.0
        %1250 = vmatprep.subr.mxu0 0.0
        %1251 = vmatpush1.msra.mxu0 0.0
        %1252 = vmatprep.subr.mxu0 0.0
        %1253 = vmatpush1.msra.mxu0 0.0
        %1254 = vmatprep.subr.mxu0 0.0
        %1255 = vmatpush1.msra.mxu0 0.0
        %1256 = vmatprep.subr.mxu0 0.0
        %1257 = vmatpush1.msra.mxu0 0.0
        %1258 = vmatprep.subr.mxu0 0.0
        %1259 = vmatpush1.msra.mxu0 0.0
        %1260 = vmatprep.mubr.f32.mxu0 0.0
        %1261 = vmatmul.mubr.f32.gmra.mrb[0].mxu0 %v1052
        %v1262 = vpop.f32.mrb[0].mxu0
        %v1263 = vadd.f32 0.0, %v1262
        %v1264 = vpop.f32.mrb[0].mxu0
        %v1265 = vadd.f32 0.0, %v1264
        %1266 = vdwg.mxu0
        %1267 = vmatprep.subr.mxu0 %v930
        %1268 = vmatpush1.msra.mxu0 %v929
        %1269 = vmatprep.subr.mxu0 %v946
        %1270 = vmatpush1.msra.mxu0 %v945
        %1271 = vmatprep.subr.mxu0 %v962
        %1272 = vmatpush1.msra.mxu0 %v961
        %1273 = vmatprep.subr.mxu0 %v978
        %1274 = vmatpush1.msra.mxu0 %v977
        %1275 = vmatprep.subr.mxu0 %v994
        %1276 = vmatpush1.msra.mxu0 %v993
        %1277 = vmatprep.subr.mxu0 %v1010
        %1278 = vmatpush1.msra.mxu0 %v1009
        %1279 = vmatprep.subr.mxu0 %v1026
        %1280 = vmatpush1.msra.mxu0 %v1025
        %1281 = vmatprep.subr.mxu0 %v1042
        %1282 = vmatpush1.msra.mxu0 %v1041
        %1283 = vmatprep.subr.mxu0 0.0
        %1284 = vmatpush1.msra.mxu0 0.0
        %1285 = vmatprep.subr.mxu0 0.0
        %1286 = vmatpush1.msra.mxu0 0.0
        %1287 = vmatprep.subr.mxu0 0.0
        %1288 = vmatpush1.msra.mxu0 0.0
        %1289 = vmatprep.subr.mxu0 0.0
        %1290 = vmatpush1.msra.mxu0 0.0
        %1291 = vmatprep.subr.mxu0 0.0
        %1292 = vmatpush1.msra.mxu0 0.0
        %1293 = vmatprep.subr.mxu0 0.0
        %1294 = vmatpush1.msra.mxu0 0.0
        %1295 = vmatprep.subr.mxu0 0.0
        %1296 = vmatpush1.msra.mxu0 0.0
        %1297 = vmatprep.subr.mxu0 0.0
        %1298 = vmatpush1.msra.mxu0 0.0
        %1299 = vmatprep.subr.mxu0 0.0
        %1300 = vmatpush1.msra.mxu0 0.0
        %1301 = vmatprep.subr.mxu0 0.0
        %1302 = vmatpush1.msra.mxu0 0.0
        %1303 = vmatprep.subr.mxu0 0.0
        %1304 = vmatpush1.msra.mxu0 0.0
        %1305 = vmatprep.subr.mxu0 0.0
        %1306 = vmatpush1.msra.mxu0 0.0
        %1307 = vmatprep.subr.mxu0 0.0
        %1308 = vmatpush1.msra.mxu0 0.0
        %1309 = vmatprep.subr.mxu0 0.0
        %1310 = vmatpush1.msra.mxu0 0.0
        %1311 = vmatprep.subr.mxu0 0.0
        %1312 = vmatpush1.msra.mxu0 0.0
        %1313 = vmatprep.subr.mxu0 0.0
        %1314 = vmatpush1.msra.mxu0 0.0
        %1315 = vmatprep.subr.mxu0 0.0
        %1316 = vmatpush1.msra.mxu0 0.0
        %1317 = vmatprep.subr.mxu0 0.0
        %1318 = vmatpush1.msra.mxu0 0.0
        %1319 = vmatprep.subr.mxu0 0.0
        %1320 = vmatpush1.msra.mxu0 0.0
        %1321 = vmatprep.subr.mxu0 0.0
        %1322 = vmatpush1.msra.mxu0 0.0
        %1323 = vmatprep.subr.mxu0 0.0
        %1324 = vmatpush1.msra.mxu0 0.0
        %1325 = vmatprep.subr.mxu0 0.0
        %1326 = vmatpush1.msra.mxu0 0.0
        %1327 = vmatprep.subr.mxu0 0.0
        %1328 = vmatpush1.msra.mxu0 0.0
        %1329 = vmatprep.subr.mxu0 0.0
        %1330 = vmatpush1.msra.mxu0 0.0
        %1331 = vmatprep.mubr.f32.mxu0 0.0
        %1332 = vmatmul.mubr.f32.gmra.mrb[0].mxu0 %v1052
        %v1333 = vpop.f32.mrb[0].mxu0
        %v1334 = vadd.f32 0.0, %v1333
        %v1335 = vpop.f32.mrb[0].mxu0
        %v1336 = vadd.f32 0.0, %v1335
        %1337 = vdwg.mxu0
        %1338 = vmatprep.subr.mxu0 %v932
        %1339 = vmatpush1.msra.mxu0 %v931
        %1340 = vmatprep.subr.mxu0 %v948
        %1341 = vmatpush1.msra.mxu0 %v947
        %1342 = vmatprep.subr.mxu0 %v964
        %1343 = vmatpush1.msra.mxu0 %v963
        %1344 = vmatprep.subr.mxu0 %v980
        %1345 = vmatpush1.msra.mxu0 %v979
        %1346 = vmatprep.subr.mxu0 %v996
        %1347 = vmatpush1.msra.mxu0 %v995
        %1348 = vmatprep.subr.mxu0 %v1012
        %1349 = vmatpush1.msra.mxu0 %v1011
        %1350 = vmatprep.subr.mxu0 %v1028
        %1351 = vmatpush1.msra.mxu0 %v1027
        %1352 = vmatprep.subr.mxu0 %v1044
        %1353 = vmatpush1.msra.mxu0 %v1043
        %1354 = vmatprep.subr.mxu0 0.0
        %1355 = vmatpush1.msra.mxu0 0.0
        %1356 = vmatprep.subr.mxu0 0.0
        %1357 = vmatpush1.msra.mxu0 0.0
        %1358 = vmatprep.subr.mxu0 0.0
        %1359 = vmatpush1.msra.mxu0 0.0
        %1360 = vmatprep.subr.mxu0 0.0
        %1361 = vmatpush1.msra.mxu0 0.0
        %1362 = vmatprep.subr.mxu0 0.0
        %1363 = vmatpush1.msra.mxu0 0.0
        %1364 = vmatprep.subr.mxu0 0.0
        %1365 = vmatpush1.msra.mxu0 0.0
        %1366 = vmatprep.subr.mxu0 0.0
        %1367 = vmatpush1.msra.mxu0 0.0
        %1368 = vmatprep.subr.mxu0 0.0
        %1369 = vmatpush1.msra.mxu0 0.0
        %1370 = vmatprep.subr.mxu0 0.0
        %1371 = vmatpush1.msra.mxu0 0.0
        %1372 = vmatprep.subr.mxu0 0.0
        %1373 = vmatpush1.msra.mxu0 0.0
        %1374 = vmatprep.subr.mxu0 0.0
        %1375 = vmatpush1.msra.mxu0 0.0
        %1376 = vmatprep.subr.mxu0 0.0
        %1377 = vmatpush1.msra.mxu0 0.0
        %1378 = vmatprep.subr.mxu0 0.0
        %1379 = vmatpush1.msra.mxu0 0.0
        %1380 = vmatprep.subr.mxu0 0.0
        %1381 = vmatpush1.msra.mxu0 0.0
        %1382 = vmatprep.subr.mxu0 0.0
        %1383 = vmatpush1.msra.mxu0 0.0
        %1384 = vmatprep.subr.mxu0 0.0
        %1385 = vmatpush1.msra.mxu0 0.0
        %1386 = vmatprep.subr.mxu0 0.0
        %1387 = vmatpush1.msra.mxu0 0.0
        %1388 = vmatprep.subr.mxu0 0.0
        %1389 = vmatpush1.msra.mxu0 0.0
        %1390 = vmatprep.subr.mxu0 0.0
        %1391 = vmatpush1.msra.mxu0 0.0
        %1392 = vmatprep.subr.mxu0 0.0
        %1393 = vmatpush1.msra.mxu0 0.0
        %1394 = vmatprep.subr.mxu0 0.0
        %1395 = vmatpush1.msra.mxu0 0.0
        %1396 = vmatprep.subr.mxu0 0.0
        %1397 = vmatpush1.msra.mxu0 0.0
        %1398 = vmatprep.subr.mxu0 0.0
        %1399 = vmatpush1.msra.mxu0 0.0
        %1400 = vmatprep.subr.mxu0 0.0
        %1401 = vmatpush1.msra.mxu0 0.0
        %1402 = vmatprep.mubr.f32.mxu0 0.0
        %1403 = vmatmul.mubr.f32.gmra.mrb[0].mxu0 %v1052
        %v1404 = vpop.f32.mrb[0].mxu0
        %v1405 = vadd.f32 0.0, %v1404
        %v1406 = vpop.f32.mrb[0].mxu0
        %v1407 = vadd.f32 0.0, %v1406
        %1408 = vdwg.mxu0
        %1409 = vmatprep.subr.mxu0 %v934
        %1410 = vmatpush1.msra.mxu0 %v933
        %1411 = vmatprep.subr.mxu0 %v950
        %1412 = vmatpush1.msra.mxu0 %v949
        %1413 = vmatprep.subr.mxu0 %v966
        %1414 = vmatpush1.msra.mxu0 %v965
        %1415 = vmatprep.subr.mxu0 %v982
        %1416 = vmatpush1.msra.mxu0 %v981
        %1417 = vmatprep.subr.mxu0 %v998
        %1418 = vmatpush1.msra.mxu0 %v997
        %1419 = vmatprep.subr.mxu0 %v1014
        %1420 = vmatpush1.msra.mxu0 %v1013
        %1421 = vmatprep.subr.mxu0 %v1030
        %1422 = vmatpush1.msra.mxu0 %v1029
        %1423 = vmatprep.subr.mxu0 %v1046
        %1424 = vmatpush1.msra.mxu0 %v1045
        %1425 = vmatprep.subr.mxu0 0.0
        %1426 = vmatpush1.msra.mxu0 0.0
        %1427 = vmatprep.subr.mxu0 0.0
        %1428 = vmatpush1.msra.mxu0 0.0
        %1429 = vmatprep.subr.mxu0 0.0
        %1430 = vmatpush1.msra.mxu0 0.0
        %1431 = vmatprep.subr.mxu0 0.0
        %1432 = vmatpush1.msra.mxu0 0.0
        %1433 = vmatprep.subr.mxu0 0.0
        %1434 = vmatpush1.msra.mxu0 0.0
        %1435 = vmatprep.subr.mxu0 0.0
        %1436 = vmatpush1.msra.mxu0 0.0
        %1437 = vmatprep.subr.mxu0 0.0
        %1438 = vmatpush1.msra.mxu0 0.0
        %1439 = vmatprep.subr.mxu0 0.0
        %1440 = vmatpush1.msra.mxu0 0.0
        %1441 = vmatprep.subr.mxu0 0.0
        %1442 = vmatpush1.msra.mxu0 0.0
        %1443 = vmatprep.subr.mxu0 0.0
        %1444 = vmatpush1.msra.mxu0 0.0
        %1445 = vmatprep.subr.mxu0 0.0
        %1446 = vmatpush1.msra.mxu0 0.0
        %1447 = vmatprep.subr.mxu0 0.0
        %1448 = vmatpush1.msra.mxu0 0.0
        %1449 = vmatprep.subr.mxu0 0.0
        %1450 = vmatpush1.msra.mxu0 0.0
        %1451 = vmatprep.subr.mxu0 0.0
        %1452 = vmatpush1.msra.mxu0 0.0
        %1453 = vmatprep.subr.mxu0 0.0
        %1454 = vmatpush1.msra.mxu0 0.0
        %1455 = vmatprep.subr.mxu0 0.0
        %1456 = vmatpush1.msra.mxu0 0.0
        %1457 = vmatprep.subr.mxu0 0.0
        %1458 = vmatpush1.msra.mxu0 0.0
        %1459 = vmatprep.subr.mxu0 0.0
        %1460 = vmatpush1.msra.mxu0 0.0
        %1461 = vmatprep.subr.mxu0 0.0
        %1462 = vmatpush1.msra.mxu0 0.0
        %1463 = vmatprep.subr.mxu0 0.0
        %1464 = vmatpush1.msra.mxu0 0.0
        %1465 = vmatprep.subr.mxu0 0.0
        %1466 = vmatpush1.msra.mxu0 0.0
        %1467 = vmatprep.subr.mxu0 0.0
        %1468 = vmatpush1.msra.mxu0 0.0
        %1469 = vmatprep.subr.mxu0 0.0
        %1470 = vmatpush1.msra.mxu0 0.0
        %1471 = vmatprep.subr.mxu0 0.0
        %1472 = vmatpush1.msra.mxu0 0.0
        %1473 = vmatprep.mubr.f32.mxu0 0.0
        %1474 = vmatmul.mubr.f32.gmra.mrb[0].mxu0 %v1052
        %v1475 = vpop.f32.mrb[0].mxu0
        %v1476 = vadd.f32 0.0, %v1475
        %v1477 = vpop.f32.mrb[0].mxu0
        %v1478 = vadd.f32 0.0, %v1477
        %1479 = vdwg.mxu0
        %1480 = vmatprep.subr.mxu0 %v936
        %1481 = vmatpush1.msra.mxu0 %v935
        %1482 = vmatprep.subr.mxu0 %v952
        %1483 = vmatpush1.msra.mxu0 %v951
        %1484 = vmatprep.subr.mxu0 %v968
        %1485 = vmatpush1.msra.mxu0 %v967
        %1486 = vmatprep.subr.mxu0 %v984
        %1487 = vmatpush1.msra.mxu0 %v983
        %1488 = vmatprep.subr.mxu0 %v1000
        %1489 = vmatpush1.msra.mxu0 %v999
        %1490 = vmatprep.subr.mxu0 %v1016
        %1491 = vmatpush1.msra.mxu0 %v1015
        %1492 = vmatprep.subr.mxu0 %v1032
        %1493 = vmatpush1.msra.mxu0 %v1031
        %1494 = vmatprep.subr.mxu0 %v1048
        %1495 = vmatpush1.msra.mxu0 %v1047
        %1496 = vmatprep.subr.mxu0 0.0
        %1497 = vmatpush1.msra.mxu0 0.0
        %1498 = vmatprep.subr.mxu0 0.0
        %1499 = vmatpush1.msra.mxu0 0.0
        %1500 = vmatprep.subr.mxu0 0.0
        %1501 = vmatpush1.msra.mxu0 0.0
        %1502 = vmatprep.subr.mxu0 0.0
        %1503 = vmatpush1.msra.mxu0 0.0
        %1504 = vmatprep.subr.mxu0 0.0
        %1505 = vmatpush1.msra.mxu0 0.0
        %1506 = vmatprep.subr.mxu0 0.0
        %1507 = vmatpush1.msra.mxu0 0.0
        %1508 = vmatprep.subr.mxu0 0.0
        %1509 = vmatpush1.msra.mxu0 0.0
        %1510 = vmatprep.subr.mxu0 0.0
        %1511 = vmatpush1.msra.mxu0 0.0
        %1512 = vmatprep.subr.mxu0 0.0
        %1513 = vmatpush1.msra.mxu0 0.0
        %1514 = vmatprep.subr.mxu0 0.0
        %1515 = vmatpush1.msra.mxu0 0.0
        %1516 = vmatprep.subr.mxu0 0.0
        %1517 = vmatpush1.msra.mxu0 0.0
        %1518 = vmatprep.subr.mxu0 0.0
        %1519 = vmatpush1.msra.mxu0 0.0
        %1520 = vmatprep.subr.mxu0 0.0
        %1521 = vmatpush1.msra.mxu0 0.0
        %1522 = vmatprep.subr.mxu0 0.0
        %1523 = vmatpush1.msra.mxu0 0.0
        %1524 = vmatprep.subr.mxu0 0.0
        %1525 = vmatpush1.msra.mxu0 0.0
        %1526 = vmatprep.subr.mxu0 0.0
        %1527 = vmatpush1.msra.mxu0 0.0
        %1528 = vmatprep.subr.mxu0 0.0
        %1529 = vmatpush1.msra.mxu0 0.0
        %1530 = vmatprep.subr.mxu0 0.0
        %1531 = vmatpush1.msra.mxu0 0.0
        %1532 = vmatprep.subr.mxu0 0.0
        %1533 = vmatpush1.msra.mxu0 0.0
        %1534 = vmatprep.subr.mxu0 0.0
        %1535 = vmatpush1.msra.mxu0 0.0
        %1536 = vmatprep.subr.mxu0 0.0
        %1537 = vmatpush1.msra.mxu0 0.0
        %1538 = vmatprep.subr.mxu0 0.0
        %1539 = vmatpush1.msra.mxu0 0.0
        %1540 = vmatprep.subr.mxu0 0.0
        %1541 = vmatpush1.msra.mxu0 0.0
        %1542 = vmatprep.subr.mxu0 0.0
        %1543 = vmatpush1.msra.mxu0 0.0
        %1544 = vmatprep.mubr.f32.mxu0 0.0
        %1545 = vmatmul.mubr.f32.gmra.mrb[0].mxu0 %v1052
        %v1546 = vpop.f32.mrb[0].mxu0
        %v1547 = vadd.f32 0.0, %v1546
        %v1548 = vpop.f32.mrb[0].mxu0
        %v1549 = vadd.f32 0.0, %v1548
        %1550 = vdwg.mxu0
        %1551 = vmatprep.subr.mxu0 %v938
        %1552 = vmatpush1.msra.mxu0 %v937
        %1553 = vmatprep.subr.mxu0 %v954
        %1554 = vmatpush1.msra.mxu0 %v953
        %1555 = vmatprep.subr.mxu0 %v970
        %1556 = vmatpush1.msra.mxu0 %v969
        %1557 = vmatprep.subr.mxu0 %v986
        %1558 = vmatpush1.msra.mxu0 %v985
        %1559 = vmatprep.subr.mxu0 %v1002
        %1560 = vmatpush1.msra.mxu0 %v1001
        %1561 = vmatprep.subr.mxu0 %v1018
        %1562 = vmatpush1.msra.mxu0 %v1017
        %1563 = vmatprep.subr.mxu0 %v1034
        %1564 = vmatpush1.msra.mxu0 %v1033
        %1565 = vmatprep.subr.mxu0 %v1050
        %1566 = vmatpush1.msra.mxu0 %v1049
        %1567 = vmatprep.subr.mxu0 0.0
        %1568 = vmatpush1.msra.mxu0 0.0
        %1569 = vmatprep.subr.mxu0 0.0
        %1570 = vmatpush1.msra.mxu0 0.0
        %1571 = vmatprep.subr.mxu0 0.0
        %1572 = vmatpush1.msra.mxu0 0.0
        %1573 = vmatprep.subr.mxu0 0.0
        %1574 = vmatpush1.msra.mxu0 0.0
        %1575 = vmatprep.subr.mxu0 0.0
        %1576 = vmatpush1.msra.mxu0 0.0
        %1577 = vmatprep.subr.mxu0 0.0
        %1578 = vmatpush1.msra.mxu0 0.0
        %1579 = vmatprep.subr.mxu0 0.0
        %1580 = vmatpush1.msra.mxu0 0.0
        %1581 = vmatprep.subr.mxu0 0.0
        %1582 = vmatpush1.msra.mxu0 0.0
        %1583 = vmatprep.subr.mxu0 0.0
        %1584 = vmatpush1.msra.mxu0 0.0
        %1585 = vmatprep.subr.mxu0 0.0
        %1586 = vmatpush1.msra.mxu0 0.0
        %1587 = vmatprep.subr.mxu0 0.0
        %1588 = vmatpush1.msra.mxu0 0.0
        %1589 = vmatprep.subr.mxu0 0.0
        %1590 = vmatpush1.msra.mxu0 0.0
        %1591 = vmatprep.subr.mxu0 0.0
        %1592 = vmatpush1.msra.mxu0 0.0
        %1593 = vmatprep.subr.mxu0 0.0
        %1594 = vmatpush1.msra.mxu0 0.0
        %1595 = vmatprep.subr.mxu0 0.0
        %1596 = vmatpush1.msra.mxu0 0.0
        %1597 = vmatprep.subr.mxu0 0.0
        %1598 = vmatpush1.msra.mxu0 0.0
        %1599 = vmatprep.subr.mxu0 0.0
        %1600 = vmatpush1.msra.mxu0 0.0
        %1601 = vmatprep.subr.mxu0 0.0
        %1602 = vmatpush1.msra.mxu0 0.0
        %1603 = vmatprep.subr.mxu0 0.0
        %1604 = vmatpush1.msra.mxu0 0.0
        %1605 = vmatprep.subr.mxu0 0.0
        %1606 = vmatpush1.msra.mxu0 0.0
        %1607 = vmatprep.subr.mxu0 0.0
        %1608 = vmatpush1.msra.mxu0 0.0
        %1609 = vmatprep.subr.mxu0 0.0
        %1610 = vmatpush1.msra.mxu0 0.0
        %1611 = vmatprep.subr.mxu0 0.0
        %1612 = vmatpush1.msra.mxu0 0.0
        %1613 = vmatprep.subr.mxu0 0.0
        %1614 = vmatpush1.msra.mxu0 0.0
        %1615 = vmatprep.mubr.f32.mxu0 0.0
        %1616 = vmatmul.mubr.f32.gmra.mrb[0].mxu0 %v1052
        %v1617 = vpop.f32.mrb[0].mxu0
        %v1618 = vadd.f32 0.0, %v1617
        %v1619 = vpop.f32.mrb[0].mxu0
        %v1620 = vadd.f32 0.0, %v1619
        %1621 = vdwg.mxu0
        %v1626 = vlaneseq
        %v1627 = vshrl.u32 %v1626, 7
        %v1628 = vsub.s32 1, %v1627
        %v1629 = vrot.slane %v652, %v1628
        %v1630 = vlaneseq
        %v1631 = vshrl.u32 %v1630, 7
        %v1632 = vsub.s32 3, %v1631
        %v1633 = vrot.slane %v652, %v1632
        %v1634 = vlaneseq
        %v1635 = vshrl.u32 %v1634, 7
        %v1636 = vsub.s32 5, %v1635
        %v1637 = vrot.slane %v652, %v1636
        %v1638 = vlaneseq
        %v1639 = vshrl.u32 %v1638, 7
        %v1640 = vsub.s32 7, %v1639
        %v1641 = vrot.slane %v652, %v1640
        %v1642 = vlaneseq
        %v1643 = vshrl.u32 %v1642, 7
        %v1644 = vsub.s32 1, %v1643
        %v1645 = vrot.slane %v653, %v1644
        %v1646 = vlaneseq
        %v1647 = vshrl.u32 %v1646, 7
        %v1648 = vsub.s32 3, %v1647
        %v1649 = vrot.slane %v653, %v1648
        %v1650 = vlaneseq
        %v1651 = vshrl.u32 %v1650, 7
        %v1652 = vsub.s32 5, %v1651
        %v1653 = vrot.slane %v653, %v1652
        %v1654 = vlaneseq
        %v1655 = vshrl.u32 %v1654, 7
        %v1656 = vsub.s32 7, %v1655
        %v1657 = vrot.slane %v653, %v1656
        %v1658 = vlaneseq
        %v1659 = vshrl.u32 %v1658, 7
        %v1660 = vsub.s32 1, %v1659
        %v1661 = vrot.slane %v654, %v1660
        %v1662 = vlaneseq
        %v1663 = vshrl.u32 %v1662, 7
        %v1664 = vsub.s32 3, %v1663
        %v1665 = vrot.slane %v654, %v1664
        %v1666 = vlaneseq
        %v1667 = vshrl.u32 %v1666, 7
        %v1668 = vsub.s32 5, %v1667
        %v1669 = vrot.slane %v654, %v1668
        %v1670 = vlaneseq
        %v1671 = vshrl.u32 %v1670, 7
        %v1672 = vsub.s32 7, %v1671
        %v1673 = vrot.slane %v654, %v1672
        %v1674 = vlaneseq
        %v1675 = vshrl.u32 %v1674, 7
        %v1676 = vsub.s32 1, %v1675
        %v1677 = vrot.slane %v655, %v1676
        %v1678 = vlaneseq
        %v1679 = vshrl.u32 %v1678, 7
        %v1680 = vsub.s32 3, %v1679
        %v1681 = vrot.slane %v655, %v1680
        %v1682 = vlaneseq
        %v1683 = vshrl.u32 %v1682, 7
        %v1684 = vsub.s32 5, %v1683
        %v1685 = vrot.slane %v655, %v1684
        %v1686 = vlaneseq
        %v1687 = vshrl.u32 %v1686, 7
        %v1688 = vsub.s32 7, %v1687
        %v1689 = vrot.slane %v655, %v1688
        %v1706 = vlaneseq
        %v1707 = vshrl.u32 %v1706, 7
        %v1708 = vsub.s32 1, %v1707
        %v1709 = vrot.slane %v1629, %v1708
        %v1710 = vlaneseq
        %v1711 = vshrl.u32 %v1710, 7
        %v1712 = vsub.s32 1, %v1711
        %v1713 = vrot.slane %v1633, %v1712
        %v1714 = vlaneseq
        %v1715 = vshrl.u32 %v1714, 7
        %v1716 = vsub.s32 1, %v1715
        %v1717 = vrot.slane %v1637, %v1716
        %v1718 = vlaneseq
        %v1719 = vshrl.u32 %v1718, 7
        %v1720 = vsub.s32 1, %v1719
        %v1721 = vrot.slane %v1641, %v1720
        %v1722 = vlaneseq
        %v1723 = vshrl.u32 %v1722, 7
        %v1724 = vsub.s32 1, %v1723
        %v1725 = vrot.slane %v1645, %v1724
        %v1726 = vlaneseq
        %v1727 = vshrl.u32 %v1726, 7
        %v1728 = vsub.s32 1, %v1727
        %v1729 = vrot.slane %v1649, %v1728
        %v1730 = vlaneseq
        %v1731 = vshrl.u32 %v1730, 7
        %v1732 = vsub.s32 1, %v1731
        %v1733 = vrot.slane %v1653, %v1732
        %v1734 = vlaneseq
        %v1735 = vshrl.u32 %v1734, 7
        %v1736 = vsub.s32 1, %v1735
        %v1737 = vrot.slane %v1657, %v1736
        %v1738 = vlaneseq
        %v1739 = vshrl.u32 %v1738, 7
        %v1740 = vsub.s32 1, %v1739
        %v1741 = vrot.slane %v1661, %v1740
        %v1742 = vlaneseq
        %v1743 = vshrl.u32 %v1742, 7
        %v1744 = vsub.s32 1, %v1743
        %v1745 = vrot.slane %v1665, %v1744
        %v1746 = vlaneseq
        %v1747 = vshrl.u32 %v1746, 7
        %v1748 = vsub.s32 1, %v1747
        %v1749 = vrot.slane %v1669, %v1748
        %v1750 = vlaneseq
        %v1751 = vshrl.u32 %v1750, 7
        %v1752 = vsub.s32 1, %v1751
        %v1753 = vrot.slane %v1673, %v1752
        %v1754 = vlaneseq
        %v1755 = vshrl.u32 %v1754, 7
        %v1756 = vsub.s32 1, %v1755
        %v1757 = vrot.slane %v1677, %v1756
        %v1758 = vlaneseq
        %v1759 = vshrl.u32 %v1758, 7
        %v1760 = vsub.s32 1, %v1759
        %v1761 = vrot.slane %v1681, %v1760
        %v1762 = vlaneseq
        %v1763 = vshrl.u32 %v1762, 7
        %v1764 = vsub.s32 1, %v1763
        %v1765 = vrot.slane %v1685, %v1764
        %v1766 = vlaneseq
        %v1767 = vshrl.u32 %v1766, 7
        %v1768 = vsub.s32 1, %v1767
        %v1769 = vrot.slane %v1689, %v1768
        %v1770 = vmul.f32 %v1121, %v1709
        %v1771 = vmul.f32 %v1123, %v1713
        %v1772 = vmul.f32 %v1192, %v1717
        %v1773 = vmul.f32 %v1194, %v1721
        %v1774 = vmul.f32 %v1263, %v1725
        %v1775 = vmul.f32 %v1265, %v1729
        %v1776 = vmul.f32 %v1334, %v1733
        %v1777 = vmul.f32 %v1336, %v1737
        %v1778 = vmul.f32 %v1405, %v1741
        %v1779 = vmul.f32 %v1407, %v1745
        %v1780 = vmul.f32 %v1476, %v1749
        %v1781 = vmul.f32 %v1478, %v1753
        %v1782 = vmul.f32 %v1547, %v1757
        %v1783 = vmul.f32 %v1549, %v1761
        %v1784 = vmul.f32 %v1618, %v1765
        %v1785 = vmul.f32 %v1620, %v1769
        %v1786 = vlaneseq
        %v1787 = vshrl.u32 %v1786, 7
        %v1788 = vsub.s32 0, %v1787
        %v1789 = vrot.slane %v652, %v1788
        %v1790 = vlaneseq
        %v1791 = vshrl.u32 %v1790, 7
        %v1792 = vsub.s32 2, %v1791
        %v1793 = vrot.slane %v652, %v1792
        %v1794 = vlaneseq
        %v1795 = vshrl.u32 %v1794, 7
        %v1796 = vsub.s32 4, %v1795
        %v1797 = vrot.slane %v652, %v1796
        %v1798 = vlaneseq
        %v1799 = vshrl.u32 %v1798, 7
        %v1800 = vsub.s32 6, %v1799
        %v1801 = vrot.slane %v652, %v1800
        %v1802 = vlaneseq
        %v1803 = vshrl.u32 %v1802, 7
        %v1804 = vsub.s32 0, %v1803
        %v1805 = vrot.slane %v653, %v1804
        %v1806 = vlaneseq
        %v1807 = vshrl.u32 %v1806, 7
        %v1808 = vsub.s32 2, %v1807
        %v1809 = vrot.slane %v653, %v1808
        %v1810 = vlaneseq
        %v1811 = vshrl.u32 %v1810, 7
        %v1812 = vsub.s32 4, %v1811
        %v1813 = vrot.slane %v653, %v1812
        %v1814 = vlaneseq
        %v1815 = vshrl.u32 %v1814, 7
        %v1816 = vsub.s32 6, %v1815
        %v1817 = vrot.slane %v653, %v1816
        %v1818 = vlaneseq
        %v1819 = vshrl.u32 %v1818, 7
        %v1820 = vsub.s32 0, %v1819
        %v1821 = vrot.slane %v654, %v1820
        %v1822 = vlaneseq
        %v1823 = vshrl.u32 %v1822, 7
        %v1824 = vsub.s32 2, %v1823
        %v1825 = vrot.slane %v654, %v1824
        %v1826 = vlaneseq
        %v1827 = vshrl.u32 %v1826, 7
        %v1828 = vsub.s32 4, %v1827
        %v1829 = vrot.slane %v654, %v1828
        %v1830 = vlaneseq
        %v1831 = vshrl.u32 %v1830, 7
        %v1832 = vsub.s32 6, %v1831
        %v1833 = vrot.slane %v654, %v1832
        %v1834 = vlaneseq
        %v1835 = vshrl.u32 %v1834, 7
        %v1836 = vsub.s32 0, %v1835
        %v1837 = vrot.slane %v655, %v1836
        %v1838 = vlaneseq
        %v1839 = vshrl.u32 %v1838, 7
        %v1840 = vsub.s32 2, %v1839
        %v1841 = vrot.slane %v655, %v1840
        %v1842 = vlaneseq
        %v1843 = vshrl.u32 %v1842, 7
        %v1844 = vsub.s32 4, %v1843
        %v1845 = vrot.slane %v655, %v1844
        %v1846 = vlaneseq
        %v1847 = vshrl.u32 %v1846, 7
        %v1848 = vsub.s32 6, %v1847
        %v1849 = vrot.slane %v655, %v1848
        %v1866 = vlaneseq
        %v1867 = vshrl.u32 %v1866, 7
        %v1868 = vsub.s32 0, %v1867
        %v1869 = vrot.slane %v1789, %v1868
        %v1870 = vlaneseq
        %v1871 = vshrl.u32 %v1870, 7
        %v1872 = vsub.s32 0, %v1871
        %v1873 = vrot.slane %v1793, %v1872
        %v1874 = vlaneseq
        %v1875 = vshrl.u32 %v1874, 7
        %v1876 = vsub.s32 0, %v1875
        %v1877 = vrot.slane %v1797, %v1876
        %v1878 = vlaneseq
        %v1879 = vshrl.u32 %v1878, 7
        %v1880 = vsub.s32 0, %v1879
        %v1881 = vrot.slane %v1801, %v1880
        %v1882 = vlaneseq
        %v1883 = vshrl.u32 %v1882, 7
        %v1884 = vsub.s32 0, %v1883
        %v1885 = vrot.slane %v1805, %v1884
        %v1886 = vlaneseq
        %v1887 = vshrl.u32 %v1886, 7
        %v1888 = vsub.s32 0, %v1887
        %v1889 = vrot.slane %v1809, %v1888
        %v1890 = vlaneseq
        %v1891 = vshrl.u32 %v1890, 7
        %v1892 = vsub.s32 0, %v1891
        %v1893 = vrot.slane %v1813, %v1892
        %v1894 = vlaneseq
        %v1895 = vshrl.u32 %v1894, 7
        %v1896 = vsub.s32 0, %v1895
        %v1897 = vrot.slane %v1817, %v1896
        %v1898 = vlaneseq
        %v1899 = vshrl.u32 %v1898, 7
        %v1900 = vsub.s32 0, %v1899
        %v1901 = vrot.slane %v1821, %v1900
        %v1902 = vlaneseq
        %v1903 = vshrl.u32 %v1902, 7
        %v1904 = vsub.s32 0, %v1903
        %v1905 = vrot.slane %v1825, %v1904
        %v1906 = vlaneseq
        %v1907 = vshrl.u32 %v1906, 7
        %v1908 = vsub.s32 0, %v1907
        %v1909 = vrot.slane %v1829, %v1908
        %v1910 = vlaneseq
        %v1911 = vshrl.u32 %v1910, 7
        %v1912 = vsub.s32 0, %v1911
        %v1913 = vrot.slane %v1833, %v1912
        %v1914 = vlaneseq
        %v1915 = vshrl.u32 %v1914, 7
        %v1916 = vsub.s32 0, %v1915
        %v1917 = vrot.slane %v1837, %v1916
        %v1918 = vlaneseq
        %v1919 = vshrl.u32 %v1918, 7
        %v1920 = vsub.s32 0, %v1919
        %v1921 = vrot.slane %v1841, %v1920
        %v1922 = vlaneseq
        %v1923 = vshrl.u32 %v1922, 7
        %v1924 = vsub.s32 0, %v1923
        %v1925 = vrot.slane %v1845, %v1924
        %v1926 = vlaneseq
        %v1927 = vshrl.u32 %v1926, 7
        %v1928 = vsub.s32 0, %v1927
        %v1929 = vrot.slane %v1849, %v1928
        %v1930 = vadd.f32 %v1770, %v1869
        %v1931 = vadd.f32 %v1771, %v1873
        %v1932 = vadd.f32 %v1772, %v1877
        %v1933 = vadd.f32 %v1773, %v1881
        %v1934 = vadd.f32 %v1774, %v1885
        %v1935 = vadd.f32 %v1775, %v1889
        %v1936 = vadd.f32 %v1776, %v1893
        %v1937 = vadd.f32 %v1777, %v1897
        %v1938 = vadd.f32 %v1778, %v1901
        %v1939 = vadd.f32 %v1779, %v1905
        %v1940 = vadd.f32 %v1780, %v1909
        %v1941 = vadd.f32 %v1781, %v1913
        %v1942 = vadd.f32 %v1782, %v1917
        %v1943 = vadd.f32 %v1783, %v1921
        %v1944 = vadd.f32 %v1784, %v1925
        %v1945 = vadd.f32 %v1785, %v1929
        %v1946 = vmax.f32 %v1930, 0.0
        %v1947 = vmax.f32 %v1931, 0.0
        %v1948 = vmax.f32 %v1932, 0.0
        %v1949 = vmax.f32 %v1933, 0.0
        %v1950 = vmax.f32 %v1934, 0.0
        %v1951 = vmax.f32 %v1935, 0.0
        %v1952 = vmax.f32 %v1936, 0.0
        %v1953 = vmax.f32 %v1937, 0.0
        %v1954 = vmax.f32 %v1938, 0.0
        %v1955 = vmax.f32 %v1939, 0.0
        %v1956 = vmax.f32 %v1940, 0.0
        %v1957 = vmax.f32 %v1941, 0.0
        %v1958 = vmax.f32 %v1942, 0.0
        %v1959 = vmax.f32 %v1943, 0.0
        %v1960 = vmax.f32 %v1944, 0.0
        %v1961 = vmax.f32 %v1945, 0.0
        %v1962 = vld [vmem:[%s566] sm:$0xff]
        %v1963 = vld [vmem:[%s566 + $0x8] sm:$0xff]
        %v1964 = vld [vmem:[%s566 + $0x10] sm:$0xff]
        %v1965 = vld [vmem:[%s566 + $0x18] sm:$0xff]
        %v1966 = vld [vmem:[%s566 + $0x20] sm:$0xff]
        %v1967 = vld [vmem:[%s566 + $0x28] sm:$0xff]
        %v1968 = vld [vmem:[%s566 + $0x30] sm:$0xff]
        %v1969 = vld [vmem:[%s566 + $0x38] sm:$0xff]
        %v1970 = vld [vmem:[%s566 + $0x40] sm:$0xff]
        %v1971 = vld [vmem:[%s566 + $0x48] sm:$0xff]
        %v1972 = vld [vmem:[%s566 + $0x50] sm:$0xff]
        %v1973 = vld [vmem:[%s566 + $0x58] sm:$0xff]
        %v1974 = vld [vmem:[%s566 + $0x60] sm:$0xff]
        %v1975 = vld [vmem:[%s566 + $0x68] sm:$0xff]
        %v1976 = vld [vmem:[%s566 + $0x70] sm:$0xff]
        %v1977 = vld [vmem:[%s566 + $0x78] sm:$0xff]
        %v1978 = vld [vmem:[%s566 + $0x80] sm:$0xff]
        %v1979 = vld [vmem:[%s566 + $0x88] sm:$0xff]
        %v1980 = vld [vmem:[%s566 + $0x90] sm:$0xff]
        %v1981 = vld [vmem:[%s566 + $0x98] sm:$0xff]
        %v1982 = vld [vmem:[%s566 + $0xa0] sm:$0xff]
        %v1983 = vld [vmem:[%s566 + $0xa8] sm:$0xff]
        %v1984 = vld [vmem:[%s566 + $0xb0] sm:$0xff]
        %v1985 = vld [vmem:[%s566 + $0xb8] sm:$0xff]
        %v1986 = vld [vmem:[%s566 + $0xc0] sm:$0xff]
        %v1987 = vld [vmem:[%s566 + $0xc8] sm:$0xff]
        %v1988 = vld [vmem:[%s566 + $0xd0] sm:$0xff]
        %v1989 = vld [vmem:[%s566 + $0xd8] sm:$0xff]
        %v1990 = vld [vmem:[%s566 + $0xe0] sm:$0xff]
        %v1991 = vld [vmem:[%s566 + $0xe8] sm:$0xff]
        %v1992 = vld [vmem:[%s566 + $0xf0] sm:$0xff]
        %v1993 = vld [vmem:[%s566 + $0xf8] sm:$0xff]
        %v1994 = vld [vmem:[%s566 + $0x100] sm:$0xff]
        %v1995 = vld [vmem:[%s566 + $0x108] sm:$0xff]
        %v1996 = vld [vmem:[%s566 + $0x110] sm:$0xff]
        %v1997 = vld [vmem:[%s566 + $0x118] sm:$0xff]
        %v1998 = vld [vmem:[%s566 + $0x120] sm:$0xff]
        %v1999 = vld [vmem:[%s566 + $0x128] sm:$0xff]
        %v2000 = vld [vmem:[%s566 + $0x130] sm:$0xff]
        %v2001 = vld [vmem:[%s566 + $0x138] sm:$0xff]
        %v2002 = vld [vmem:[%s566 + $0x140] sm:$0xff]
        %v2003 = vld [vmem:[%s566 + $0x148] sm:$0xff]
        %v2004 = vld [vmem:[%s566 + $0x150] sm:$0xff]
        %v2005 = vld [vmem:[%s566 + $0x158] sm:$0xff]
        %v2006 = vld [vmem:[%s566 + $0x160] sm:$0xff]
        %v2007 = vld [vmem:[%s566 + $0x168] sm:$0xff]
        %v2008 = vld [vmem:[%s566 + $0x170] sm:$0xff]
        %v2009 = vld [vmem:[%s566 + $0x178] sm:$0xff]
        %v2010 = vld [vmem:[%s566 + $0x180] sm:$0xff]
        %v2011 = vld [vmem:[%s566 + $0x188] sm:$0xff]
        %v2012 = vld [vmem:[%s566 + $0x190] sm:$0xff]
        %v2013 = vld [vmem:[%s566 + $0x198] sm:$0xff]
        %v2014 = vld [vmem:[%s566 + $0x1a0] sm:$0xff]
        %v2015 = vld [vmem:[%s566 + $0x1a8] sm:$0xff]
        %v2016 = vld [vmem:[%s566 + $0x1b0] sm:$0xff]
        %v2017 = vld [vmem:[%s566 + $0x1b8] sm:$0xff]
        %v2018 = vld [vmem:[%s566 + $0x1c0] sm:$0xff]
        %v2019 = vld [vmem:[%s566 + $0x1c8] sm:$0xff]
        %v2020 = vld [vmem:[%s566 + $0x1d0] sm:$0xff]
        %v2021 = vld [vmem:[%s566 + $0x1d8] sm:$0xff]
        %v2022 = vld [vmem:[%s566 + $0x1e0] sm:$0xff]
        %v2023 = vld [vmem:[%s566 + $0x1e8] sm:$0xff]
        %v2024 = vld [vmem:[%s566 + $0x1f0] sm:$0xff]
        %v2025 = vld [vmem:[%s566 + $0x1f8] sm:$0xff]
        %v2026 = vunpack.c.0.s8 %v1962
        %v2027 = vunpack.c.1.s8 %v1962
        %v2028 = vunpack.c.2.s8 %v1962
        %v2029 = vunpack.c.3.s8 %v1962
        %v2030 = vunpack.c.0.s8 %v1963
        %v2031 = vunpack.c.1.s8 %v1963
        %v2032 = vunpack.c.2.s8 %v1963
        %v2033 = vunpack.c.3.s8 %v1963
        %v2034 = vunpack.c.0.s8 %v1964
        %v2035 = vunpack.c.1.s8 %v1964
        %v2036 = vunpack.c.2.s8 %v1964
        %v2037 = vunpack.c.3.s8 %v1964
        %v2038 = vunpack.c.0.s8 %v1965
        %v2039 = vunpack.c.1.s8 %v1965
        %v2040 = vunpack.c.2.s8 %v1965
        %v2041 = vunpack.c.3.s8 %v1965
        %v2042 = vunpack.c.0.s8 %v1966
        %v2043 = vunpack.c.1.s8 %v1966
        %v2044 = vunpack.c.2.s8 %v1966
        %v2045 = vunpack.c.3.s8 %v1966
        %v2046 = vunpack.c.0.s8 %v1967
        %v2047 = vunpack.c.1.s8 %v1967
        %v2048 = vunpack.c.2.s8 %v1967
        %v2049 = vunpack.c.3.s8 %v1967
        %v2050 = vunpack.c.0.s8 %v1968
        %v2051 = vunpack.c.1.s8 %v1968
        %v2052 = vunpack.c.2.s8 %v1968
        %v2053 = vunpack.c.3.s8 %v1968
        %v2054 = vunpack.c.0.s8 %v1969
        %v2055 = vunpack.c.1.s8 %v1969
        %v2056 = vunpack.c.2.s8 %v1969
        %v2057 = vunpack.c.3.s8 %v1969
        %v2058 = vunpack.c.0.s8 %v1970
        %v2059 = vunpack.c.1.s8 %v1970
        %v2060 = vunpack.c.2.s8 %v1970
        %v2061 = vunpack.c.3.s8 %v1970
        %v2062 = vunpack.c.0.s8 %v1971
        %v2063 = vunpack.c.1.s8 %v1971
        %v2064 = vunpack.c.2.s8 %v1971
        %v2065 = vunpack.c.3.s8 %v1971
        %v2066 = vunpack.c.0.s8 %v1972
        %v2067 = vunpack.c.1.s8 %v1972
        %v2068 = vunpack.c.2.s8 %v1972
        %v2069 = vunpack.c.3.s8 %v1972
        %v2070 = vunpack.c.0.s8 %v1973
        %v2071 = vunpack.c.1.s8 %v1973
        %v2072 = vunpack.c.2.s8 %v1973
        %v2073 = vunpack.c.3.s8 %v1973
        %v2074 = vunpack.c.0.s8 %v1974
        %v2075 = vunpack.c.1.s8 %v1974
        %v2076 = vunpack.c.2.s8 %v1974
        %v2077 = vunpack.c.3.s8 %v1974
        %v2078 = vunpack.c.0.s8 %v1975
        %v2079 = vunpack.c.1.s8 %v1975
        %v2080 = vunpack.c.2.s8 %v1975
        %v2081 = vunpack.c.3.s8 %v1975
        %v2082 = vunpack.c.0.s8 %v1976
        %v2083 = vunpack.c.1.s8 %v1976
        %v2084 = vunpack.c.2.s8 %v1976
        %v2085 = vunpack.c.3.s8 %v1976
        %v2086 = vunpack.c.0.s8 %v1977
        %v2087 = vunpack.c.1.s8 %v1977
        %v2088 = vunpack.c.2.s8 %v1977
        %v2089 = vunpack.c.3.s8 %v1977
        %v2090 = vunpack.c.0.s8 %v1978
        %v2091 = vunpack.c.1.s8 %v1978
        %v2092 = vunpack.c.2.s8 %v1978
        %v2093 = vunpack.c.3.s8 %v1978
        %v2094 = vunpack.c.0.s8 %v1979
        %v2095 = vunpack.c.1.s8 %v1979
        %v2096 = vunpack.c.2.s8 %v1979
        %v2097 = vunpack.c.3.s8 %v1979
        %v2098 = vunpack.c.0.s8 %v1980
        %v2099 = vunpack.c.1.s8 %v1980
        %v2100 = vunpack.c.2.s8 %v1980
        %v2101 = vunpack.c.3.s8 %v1980
        %v2102 = vunpack.c.0.s8 %v1981
        %v2103 = vunpack.c.1.s8 %v1981
        %v2104 = vunpack.c.2.s8 %v1981
        %v2105 = vunpack.c.3.s8 %v1981
        %v2106 = vunpack.c.0.s8 %v1982
        %v2107 = vunpack.c.1.s8 %v1982
        %v2108 = vunpack.c.2.s8 %v1982
        %v2109 = vunpack.c.3.s8 %v1982
        %v2110 = vunpack.c.0.s8 %v1983
        %v2111 = vunpack.c.1.s8 %v1983
        %v2112 = vunpack.c.2.s8 %v1983
        %v2113 = vunpack.c.3.s8 %v1983
        %v2114 = vunpack.c.0.s8 %v1984
        %v2115 = vunpack.c.1.s8 %v1984
        %v2116 = vunpack.c.2.s8 %v1984
        %v2117 = vunpack.c.3.s8 %v1984
        %v2118 = vunpack.c.0.s8 %v1985
        %v2119 = vunpack.c.1.s8 %v1985
        %v2120 = vunpack.c.2.s8 %v1985
        %v2121 = vunpack.c.3.s8 %v1985
        %v2122 = vunpack.c.0.s8 %v1986
        %v2123 = vunpack.c.1.s8 %v1986
        %v2124 = vunpack.c.2.s8 %v1986
        %v2125 = vunpack.c.3.s8 %v1986
        %v2126 = vunpack.c.0.s8 %v1987
        %v2127 = vunpack.c.1.s8 %v1987
        %v2128 = vunpack.c.2.s8 %v1987
        %v2129 = vunpack.c.3.s8 %v1987
        %v2130 = vunpack.c.0.s8 %v1988
        %v2131 = vunpack.c.1.s8 %v1988
        %v2132 = vunpack.c.2.s8 %v1988
        %v2133 = vunpack.c.3.s8 %v1988
        %v2134 = vunpack.c.0.s8 %v1989
        %v2135 = vunpack.c.1.s8 %v1989
        %v2136 = vunpack.c.2.s8 %v1989
        %v2137 = vunpack.c.3.s8 %v1989
        %v2138 = vunpack.c.0.s8 %v1990
        %v2139 = vunpack.c.1.s8 %v1990
        %v2140 = vunpack.c.2.s8 %v1990
        %v2141 = vunpack.c.3.s8 %v1990
        %v2142 = vunpack.c.0.s8 %v1991
        %v2143 = vunpack.c.1.s8 %v1991
        %v2144 = vunpack.c.2.s8 %v1991
        %v2145 = vunpack.c.3.s8 %v1991
        %v2146 = vunpack.c.0.s8 %v1992
        %v2147 = vunpack.c.1.s8 %v1992
        %v2148 = vunpack.c.2.s8 %v1992
        %v2149 = vunpack.c.3.s8 %v1992
        %v2150 = vunpack.c.0.s8 %v1993
        %v2151 = vunpack.c.1.s8 %v1993
        %v2152 = vunpack.c.2.s8 %v1993
        %v2153 = vunpack.c.3.s8 %v1993
        %v2154 = vunpack.c.0.s8 %v1994
        %v2155 = vunpack.c.1.s8 %v1994
        %v2156 = vunpack.c.2.s8 %v1994
        %v2157 = vunpack.c.3.s8 %v1994
        %v2158 = vunpack.c.0.s8 %v1995
        %v2159 = vunpack.c.1.s8 %v1995
        %v2160 = vunpack.c.2.s8 %v1995
        %v2161 = vunpack.c.3.s8 %v1995
        %v2162 = vunpack.c.0.s8 %v1996
        %v2163 = vunpack.c.1.s8 %v1996
        %v2164 = vunpack.c.2.s8 %v1996
        %v2165 = vunpack.c.3.s8 %v1996
        %v2166 = vunpack.c.0.s8 %v1997
        %v2167 = vunpack.c.1.s8 %v1997
        %v2168 = vunpack.c.2.s8 %v1997
        %v2169 = vunpack.c.3.s8 %v1997
        %v2170 = vunpack.c.0.s8 %v1998
        %v2171 = vunpack.c.1.s8 %v1998
        %v2172 = vunpack.c.2.s8 %v1998
        %v2173 = vunpack.c.3.s8 %v1998
        %v2174 = vunpack.c.0.s8 %v1999
        %v2175 = vunpack.c.1.s8 %v1999
        %v2176 = vunpack.c.2.s8 %v1999
        %v2177 = vunpack.c.3.s8 %v1999
        %v2178 = vunpack.c.0.s8 %v2000
        %v2179 = vunpack.c.1.s8 %v2000
        %v2180 = vunpack.c.2.s8 %v2000
        %v2181 = vunpack.c.3.s8 %v2000
        %v2182 = vunpack.c.0.s8 %v2001
        %v2183 = vunpack.c.1.s8 %v2001
        %v2184 = vunpack.c.2.s8 %v2001
        %v2185 = vunpack.c.3.s8 %v2001
        %v2186 = vunpack.c.0.s8 %v2002
        %v2187 = vunpack.c.1.s8 %v2002
        %v2188 = vunpack.c.2.s8 %v2002
        %v2189 = vunpack.c.3.s8 %v2002
        %v2190 = vunpack.c.0.s8 %v2003
        %v2191 = vunpack.c.1.s8 %v2003
        %v2192 = vunpack.c.2.s8 %v2003
        %v2193 = vunpack.c.3.s8 %v2003
        %v2194 = vunpack.c.0.s8 %v2004
        %v2195 = vunpack.c.1.s8 %v2004
        %v2196 = vunpack.c.2.s8 %v2004
        %v2197 = vunpack.c.3.s8 %v2004
        %v2198 = vunpack.c.0.s8 %v2005
        %v2199 = vunpack.c.1.s8 %v2005
        %v2200 = vunpack.c.2.s8 %v2005
        %v2201 = vunpack.c.3.s8 %v2005
        %v2202 = vunpack.c.0.s8 %v2006
        %v2203 = vunpack.c.1.s8 %v2006
        %v2204 = vunpack.c.2.s8 %v2006
        %v2205 = vunpack.c.3.s8 %v2006
        %v2206 = vunpack.c.0.s8 %v2007
        %v2207 = vunpack.c.1.s8 %v2007
        %v2208 = vunpack.c.2.s8 %v2007
        %v2209 = vunpack.c.3.s8 %v2007
        %v2210 = vunpack.c.0.s8 %v2008
        %v2211 = vunpack.c.1.s8 %v2008
        %v2212 = vunpack.c.2.s8 %v2008
        %v2213 = vunpack.c.3.s8 %v2008
        %v2214 = vunpack.c.0.s8 %v2009
        %v2215 = vunpack.c.1.s8 %v2009
        %v2216 = vunpack.c.2.s8 %v2009
        %v2217 = vunpack.c.3.s8 %v2009
        %v2218 = vunpack.c.0.s8 %v2010
        %v2219 = vunpack.c.1.s8 %v2010
        %v2220 = vunpack.c.2.s8 %v2010
        %v2221 = vunpack.c.3.s8 %v2010
        %v2222 = vunpack.c.0.s8 %v2011
        %v2223 = vunpack.c.1.s8 %v2011
        %v2224 = vunpack.c.2.s8 %v2011
        %v2225 = vunpack.c.3.s8 %v2011
        %v2226 = vunpack.c.0.s8 %v2012
        %v2227 = vunpack.c.1.s8 %v2012
        %v2228 = vunpack.c.2.s8 %v2012
        %v2229 = vunpack.c.3.s8 %v2012
        %v2230 = vunpack.c.0.s8 %v2013
        %v2231 = vunpack.c.1.s8 %v2013
        %v2232 = vunpack.c.2.s8 %v2013
        %v2233 = vunpack.c.3.s8 %v2013
        %v2234 = vunpack.c.0.s8 %v2014
        %v2235 = vunpack.c.1.s8 %v2014
        %v2236 = vunpack.c.2.s8 %v2014
        %v2237 = vunpack.c.3.s8 %v2014
        %v2238 = vunpack.c.0.s8 %v2015
        %v2239 = vunpack.c.1.s8 %v2015
        %v2240 = vunpack.c.2.s8 %v2015
        %v2241 = vunpack.c.3.s8 %v2015
        %v2242 = vunpack.c.0.s8 %v2016
        %v2243 = vunpack.c.1.s8 %v2016
        %v2244 = vunpack.c.2.s8 %v2016
        %v2245 = vunpack.c.3.s8 %v2016
        %v2246 = vunpack.c.0.s8 %v2017
        %v2247 = vunpack.c.1.s8 %v2017
        %v2248 = vunpack.c.2.s8 %v2017
        %v2249 = vunpack.c.3.s8 %v2017
        %v2250 = vunpack.c.0.s8 %v2018
        %v2251 = vunpack.c.1.s8 %v2018
        %v2252 = vunpack.c.2.s8 %v2018
        %v2253 = vunpack.c.3.s8 %v2018
        %v2254 = vunpack.c.0.s8 %v2019
        %v2255 = vunpack.c.1.s8 %v2019
        %v2256 = vunpack.c.2.s8 %v2019
        %v2257 = vunpack.c.3.s8 %v2019
        %v2258 = vunpack.c.0.s8 %v2020
        %v2259 = vunpack.c.1.s8 %v2020
        %v2260 = vunpack.c.2.s8 %v2020
        %v2261 = vunpack.c.3.s8 %v2020
        %v2262 = vunpack.c.0.s8 %v2021
        %v2263 = vunpack.c.1.s8 %v2021
        %v2264 = vunpack.c.2.s8 %v2021
        %v2265 = vunpack.c.3.s8 %v2021
        %v2266 = vunpack.c.0.s8 %v2022
        %v2267 = vunpack.c.1.s8 %v2022
        %v2268 = vunpack.c.2.s8 %v2022
        %v2269 = vunpack.c.3.s8 %v2022
        %v2270 = vunpack.c.0.s8 %v2023
        %v2271 = vunpack.c.1.s8 %v2023
        %v2272 = vunpack.c.2.s8 %v2023
        %v2273 = vunpack.c.3.s8 %v2023
        %v2274 = vunpack.c.0.s8 %v2024
        %v2275 = vunpack.c.1.s8 %v2024
        %v2276 = vunpack.c.2.s8 %v2024
        %v2277 = vunpack.c.3.s8 %v2024
        %v2278 = vunpack.c.0.s8 %v2025
        %v2279 = vunpack.c.1.s8 %v2025
        %v2280 = vunpack.c.2.s8 %v2025
        %v2281 = vunpack.c.3.s8 %v2025
        %v2282 = vcvt.s32.f32 %v2026
        %v2283 = vcvt.s32.f32 %v2027
        %v2284 = vcvt.s32.f32 %v2028
        %v2285 = vcvt.s32.f32 %v2029
        %v2286 = vcvt.s32.f32 %v2030
        %v2287 = vcvt.s32.f32 %v2031
        %v2288 = vcvt.s32.f32 %v2032
        %v2289 = vcvt.s32.f32 %v2033
        %v2290 = vcvt.s32.f32 %v2034
        %v2291 = vcvt.s32.f32 %v2035
        %v2292 = vcvt.s32.f32 %v2036
        %v2293 = vcvt.s32.f32 %v2037
        %v2294 = vcvt.s32.f32 %v2038
        %v2295 = vcvt.s32.f32 %v2039
        %v2296 = vcvt.s32.f32 %v2040
        %v2297 = vcvt.s32.f32 %v2041
        %v2298 = vcvt.s32.f32 %v2042
        %v2299 = vcvt.s32.f32 %v2043
        %v2300 = vcvt.s32.f32 %v2044
        %v2301 = vcvt.s32.f32 %v2045
        %v2302 = vcvt.s32.f32 %v2046
        %v2303 = vcvt.s32.f32 %v2047
        %v2304 = vcvt.s32.f32 %v2048
        %v2305 = vcvt.s32.f32 %v2049
        %v2306 = vcvt.s32.f32 %v2050
        %v2307 = vcvt.s32.f32 %v2051
        %v2308 = vcvt.s32.f32 %v2052
        %v2309 = vcvt.s32.f32 %v2053
        %v2310 = vcvt.s32.f32 %v2054
        %v2311 = vcvt.s32.f32 %v2055
        %v2312 = vcvt.s32.f32 %v2056
        %v2313 = vcvt.s32.f32 %v2057
        %v2314 = vcvt.s32.f32 %v2058
        %v2315 = vcvt.s32.f32 %v2059
        %v2316 = vcvt.s32.f32 %v2060
        %v2317 = vcvt.s32.f32 %v2061
        %v2318 = vcvt.s32.f32 %v2062
        %v2319 = vcvt.s32.f32 %v2063
        %v2320 = vcvt.s32.f32 %v2064
        %v2321 = vcvt.s32.f32 %v2065
        %v2322 = vcvt.s32.f32 %v2066
        %v2323 = vcvt.s32.f32 %v2067
        %v2324 = vcvt.s32.f32 %v2068
        %v2325 = vcvt.s32.f32 %v2069
        %v2326 = vcvt.s32.f32 %v2070
        %v2327 = vcvt.s32.f32 %v2071
        %v2328 = vcvt.s32.f32 %v2072
        %v2329 = vcvt.s32.f32 %v2073
        %v2330 = vcvt.s32.f32 %v2074
        %v2331 = vcvt.s32.f32 %v2075
        %v2332 = vcvt.s32.f32 %v2076
        %v2333 = vcvt.s32.f32 %v2077
        %v2334 = vcvt.s32.f32 %v2078
        %v2335 = vcvt.s32.f32 %v2079
        %v2336 = vcvt.s32.f32 %v2080
        %v2337 = vcvt.s32.f32 %v2081
        %v2338 = vcvt.s32.f32 %v2082
        %v2339 = vcvt.s32.f32 %v2083
        %v2340 = vcvt.s32.f32 %v2084
        %v2341 = vcvt.s32.f32 %v2085
        %v2342 = vcvt.s32.f32 %v2086
        %v2343 = vcvt.s32.f32 %v2087
        %v2344 = vcvt.s32.f32 %v2088
        %v2345 = vcvt.s32.f32 %v2089
        %v2346 = vcvt.s32.f32 %v2090
        %v2347 = vcvt.s32.f32 %v2091
        %v2348 = vcvt.s32.f32 %v2092
        %v2349 = vcvt.s32.f32 %v2093
        %v2350 = vcvt.s32.f32 %v2094
        %v2351 = vcvt.s32.f32 %v2095
        %v2352 = vcvt.s32.f32 %v2096
        %v2353 = vcvt.s32.f32 %v2097
        %v2354 = vcvt.s32.f32 %v2098
        %v2355 = vcvt.s32.f32 %v2099
        %v2356 = vcvt.s32.f32 %v2100
        %v2357 = vcvt.s32.f32 %v2101
        %v2358 = vcvt.s32.f32 %v2102
        %v2359 = vcvt.s32.f32 %v2103
        %v2360 = vcvt.s32.f32 %v2104
        %v2361 = vcvt.s32.f32 %v2105
        %v2362 = vcvt.s32.f32 %v2106
        %v2363 = vcvt.s32.f32 %v2107
        %v2364 = vcvt.s32.f32 %v2108
        %v2365 = vcvt.s32.f32 %v2109
        %v2366 = vcvt.s32.f32 %v2110
        %v2367 = vcvt.s32.f32 %v2111
        %v2368 = vcvt.s32.f32 %v2112
        %v2369 = vcvt.s32.f32 %v2113
        %v2370 = vcvt.s32.f32 %v2114
        %v2371 = vcvt.s32.f32 %v2115
        %v2372 = vcvt.s32.f32 %v2116
        %v2373 = vcvt.s32.f32 %v2117
        %v2374 = vcvt.s32.f32 %v2118
        %v2375 = vcvt.s32.f32 %v2119
        %v2376 = vcvt.s32.f32 %v2120
        %v2377 = vcvt.s32.f32 %v2121
        %v2378 = vcvt.s32.f32 %v2122
        %v2379 = vcvt.s32.f32 %v2123
        %v2380 = vcvt.s32.f32 %v2124
        %v2381 = vcvt.s32.f32 %v2125
        %v2382 = vcvt.s32.f32 %v2126
        %v2383 = vcvt.s32.f32 %v2127
        %v2384 = vcvt.s32.f32 %v2128
        %v2385 = vcvt.s32.f32 %v2129
        %v2386 = vcvt.s32.f32 %v2130
        %v2387 = vcvt.s32.f32 %v2131
        %v2388 = vcvt.s32.f32 %v2132
        %v2389 = vcvt.s32.f32 %v2133
        %v2390 = vcvt.s32.f32 %v2134
        %v2391 = vcvt.s32.f32 %v2135
        %v2392 = vcvt.s32.f32 %v2136
        %v2393 = vcvt.s32.f32 %v2137
        %v2394 = vcvt.s32.f32 %v2138
        %v2395 = vcvt.s32.f32 %v2139
        %v2396 = vcvt.s32.f32 %v2140
        %v2397 = vcvt.s32.f32 %v2141
        %v2398 = vcvt.s32.f32 %v2142
        %v2399 = vcvt.s32.f32 %v2143
        %v2400 = vcvt.s32.f32 %v2144
        %v2401 = vcvt.s32.f32 %v2145
        %v2402 = vcvt.s32.f32 %v2146
        %v2403 = vcvt.s32.f32 %v2147
        %v2404 = vcvt.s32.f32 %v2148
        %v2405 = vcvt.s32.f32 %v2149
        %v2406 = vcvt.s32.f32 %v2150
        %v2407 = vcvt.s32.f32 %v2151
        %v2408 = vcvt.s32.f32 %v2152
        %v2409 = vcvt.s32.f32 %v2153
        %v2410 = vcvt.s32.f32 %v2154
        %v2411 = vcvt.s32.f32 %v2155
        %v2412 = vcvt.s32.f32 %v2156
        %v2413 = vcvt.s32.f32 %v2157
        %v2414 = vcvt.s32.f32 %v2158
        %v2415 = vcvt.s32.f32 %v2159
        %v2416 = vcvt.s32.f32 %v2160
        %v2417 = vcvt.s32.f32 %v2161
        %v2418 = vcvt.s32.f32 %v2162
        %v2419 = vcvt.s32.f32 %v2163
        %v2420 = vcvt.s32.f32 %v2164
        %v2421 = vcvt.s32.f32 %v2165
        %v2422 = vcvt.s32.f32 %v2166
        %v2423 = vcvt.s32.f32 %v2167
        %v2424 = vcvt.s32.f32 %v2168
        %v2425 = vcvt.s32.f32 %v2169
        %v2426 = vcvt.s32.f32 %v2170
        %v2427 = vcvt.s32.f32 %v2171
        %v2428 = vcvt.s32.f32 %v2172
        %v2429 = vcvt.s32.f32 %v2173
        %v2430 = vcvt.s32.f32 %v2174
        %v2431 = vcvt.s32.f32 %v2175
        %v2432 = vcvt.s32.f32 %v2176
        %v2433 = vcvt.s32.f32 %v2177
        %v2434 = vcvt.s32.f32 %v2178
        %v2435 = vcvt.s32.f32 %v2179
        %v2436 = vcvt.s32.f32 %v2180
        %v2437 = vcvt.s32.f32 %v2181
        %v2438 = vcvt.s32.f32 %v2182
        %v2439 = vcvt.s32.f32 %v2183
        %v2440 = vcvt.s32.f32 %v2184
        %v2441 = vcvt.s32.f32 %v2185
        %v2442 = vcvt.s32.f32 %v2186
        %v2443 = vcvt.s32.f32 %v2187
        %v2444 = vcvt.s32.f32 %v2188
        %v2445 = vcvt.s32.f32 %v2189
        %v2446 = vcvt.s32.f32 %v2190
        %v2447 = vcvt.s32.f32 %v2191
        %v2448 = vcvt.s32.f32 %v2192
        %v2449 = vcvt.s32.f32 %v2193
        %v2450 = vcvt.s32.f32 %v2194
        %v2451 = vcvt.s32.f32 %v2195
        %v2452 = vcvt.s32.f32 %v2196
        %v2453 = vcvt.s32.f32 %v2197
        %v2454 = vcvt.s32.f32 %v2198
        %v2455 = vcvt.s32.f32 %v2199
        %v2456 = vcvt.s32.f32 %v2200
        %v2457 = vcvt.s32.f32 %v2201
        %v2458 = vcvt.s32.f32 %v2202
        %v2459 = vcvt.s32.f32 %v2203
        %v2460 = vcvt.s32.f32 %v2204
        %v2461 = vcvt.s32.f32 %v2205
        %v2462 = vcvt.s32.f32 %v2206
        %v2463 = vcvt.s32.f32 %v2207
        %v2464 = vcvt.s32.f32 %v2208
        %v2465 = vcvt.s32.f32 %v2209
        %v2466 = vcvt.s32.f32 %v2210
        %v2467 = vcvt.s32.f32 %v2211
        %v2468 = vcvt.s32.f32 %v2212
        %v2469 = vcvt.s32.f32 %v2213
        %v2470 = vcvt.s32.f32 %v2214
        %v2471 = vcvt.s32.f32 %v2215
        %v2472 = vcvt.s32.f32 %v2216
        %v2473 = vcvt.s32.f32 %v2217
        %v2474 = vcvt.s32.f32 %v2218
        %v2475 = vcvt.s32.f32 %v2219
        %v2476 = vcvt.s32.f32 %v2220
        %v2477 = vcvt.s32.f32 %v2221
        %v2478 = vcvt.s32.f32 %v2222
        %v2479 = vcvt.s32.f32 %v2223
        %v2480 = vcvt.s32.f32 %v2224
        %v2481 = vcvt.s32.f32 %v2225
        %v2482 = vcvt.s32.f32 %v2226
        %v2483 = vcvt.s32.f32 %v2227
        %v2484 = vcvt.s32.f32 %v2228
        %v2485 = vcvt.s32.f32 %v2229
        %v2486 = vcvt.s32.f32 %v2230
        %v2487 = vcvt.s32.f32 %v2231
        %v2488 = vcvt.s32.f32 %v2232
        %v2489 = vcvt.s32.f32 %v2233
        %v2490 = vcvt.s32.f32 %v2234
        %v2491 = vcvt.s32.f32 %v2235
        %v2492 = vcvt.s32.f32 %v2236
        %v2493 = vcvt.s32.f32 %v2237
        %v2494 = vcvt.s32.f32 %v2238
        %v2495 = vcvt.s32.f32 %v2239
        %v2496 = vcvt.s32.f32 %v2240
        %v2497 = vcvt.s32.f32 %v2241
        %v2498 = vcvt.s32.f32 %v2242
        %v2499 = vcvt.s32.f32 %v2243
        %v2500 = vcvt.s32.f32 %v2244
        %v2501 = vcvt.s32.f32 %v2245
        %v2502 = vcvt.s32.f32 %v2246
        %v2503 = vcvt.s32.f32 %v2247
        %v2504 = vcvt.s32.f32 %v2248
        %v2505 = vcvt.s32.f32 %v2249
        %v2506 = vcvt.s32.f32 %v2250
        %v2507 = vcvt.s32.f32 %v2251
        %v2508 = vcvt.s32.f32 %v2252
        %v2509 = vcvt.s32.f32 %v2253
        %v2510 = vcvt.s32.f32 %v2254
        %v2511 = vcvt.s32.f32 %v2255
        %v2512 = vcvt.s32.f32 %v2256
        %v2513 = vcvt.s32.f32 %v2257
        %v2514 = vcvt.s32.f32 %v2258
        %v2515 = vcvt.s32.f32 %v2259
        %v2516 = vcvt.s32.f32 %v2260
        %v2517 = vcvt.s32.f32 %v2261
        %v2518 = vcvt.s32.f32 %v2262
        %v2519 = vcvt.s32.f32 %v2263
        %v2520 = vcvt.s32.f32 %v2264
        %v2521 = vcvt.s32.f32 %v2265
        %v2522 = vcvt.s32.f32 %v2266
        %v2523 = vcvt.s32.f32 %v2267
        %v2524 = vcvt.s32.f32 %v2268
        %v2525 = vcvt.s32.f32 %v2269
        %v2526 = vcvt.s32.f32 %v2270
        %v2527 = vcvt.s32.f32 %v2271
        %v2528 = vcvt.s32.f32 %v2272
        %v2529 = vcvt.s32.f32 %v2273
        %v2530 = vcvt.s32.f32 %v2274
        %v2531 = vcvt.s32.f32 %v2275
        %v2532 = vcvt.s32.f32 %v2276
        %v2533 = vcvt.s32.f32 %v2277
        %v2534 = vcvt.s32.f32 %v2278
        %v2535 = vcvt.s32.f32 %v2279
        %v2536 = vcvt.s32.f32 %v2280
        %v2537 = vcvt.s32.f32 %v2281
        %2538 = vmatprep.subr.mxu0 0.0
        %2539 = vmatpush1.msra.mxu0 %v2282
        %2540 = vmatprep.subr.mxu0 0.0
        %2541 = vmatpush1.msra.mxu0 %v2283
        %2542 = vmatprep.subr.mxu0 0.0
        %2543 = vmatpush1.msra.mxu0 %v2284
        %2544 = vmatprep.subr.mxu0 0.0
        %2545 = vmatpush1.msra.mxu0 %v2285
        %2546 = vmatprep.subr.mxu0 0.0
        %2547 = vmatpush1.msra.mxu0 %v2286
        %2548 = vmatprep.subr.mxu0 0.0
        %2549 = vmatpush1.msra.mxu0 %v2287
        %2550 = vmatprep.subr.mxu0 0.0
        %2551 = vmatpush1.msra.mxu0 %v2288
        %2552 = vmatprep.subr.mxu0 0.0
        %2553 = vmatpush1.msra.mxu0 %v2289
        %2554 = vmatprep.subr.mxu0 0.0
        %2555 = vmatpush1.msra.mxu0 %v2290
        %2556 = vmatprep.subr.mxu0 0.0
        %2557 = vmatpush1.msra.mxu0 %v2291
        %2558 = vmatprep.subr.mxu0 0.0
        %2559 = vmatpush1.msra.mxu0 %v2292
        %2560 = vmatprep.subr.mxu0 0.0
        %2561 = vmatpush1.msra.mxu0 %v2293
        %2562 = vmatprep.subr.mxu0 0.0
        %2563 = vmatpush1.msra.mxu0 %v2294
        %2564 = vmatprep.subr.mxu0 0.0
        %2565 = vmatpush1.msra.mxu0 %v2295
        %2566 = vmatprep.subr.mxu0 0.0
        %2567 = vmatpush1.msra.mxu0 %v2296
        %2568 = vmatprep.subr.mxu0 0.0
        %2569 = vmatpush1.msra.mxu0 %v2297
        %2570 = vmatprep.subr.mxu0 0.0
        %2571 = vmatpush1.msra.mxu0 %v2298
        %2572 = vmatprep.subr.mxu0 0.0
        %2573 = vmatpush1.msra.mxu0 %v2299
        %2574 = vmatprep.subr.mxu0 0.0
        %2575 = vmatpush1.msra.mxu0 %v2300
        %2576 = vmatprep.subr.mxu0 0.0
        %2577 = vmatpush1.msra.mxu0 %v2301
        %2578 = vmatprep.subr.mxu0 0.0
        %2579 = vmatpush1.msra.mxu0 %v2302
        %2580 = vmatprep.subr.mxu0 0.0
        %2581 = vmatpush1.msra.mxu0 %v2303
        %2582 = vmatprep.subr.mxu0 0.0
        %2583 = vmatpush1.msra.mxu0 %v2304
        %2584 = vmatprep.subr.mxu0 0.0
        %2585 = vmatpush1.msra.mxu0 %v2305
        %2586 = vmatprep.subr.mxu0 0.0
        %2587 = vmatpush1.msra.mxu0 %v2306
        %2588 = vmatprep.subr.mxu0 0.0
        %2589 = vmatpush1.msra.mxu0 %v2307
        %2590 = vmatprep.subr.mxu0 0.0
        %2591 = vmatpush1.msra.mxu0 %v2308
        %2592 = vmatprep.subr.mxu0 0.0
        %2593 = vmatpush1.msra.mxu0 %v2309
        %2594 = vmatprep.subr.mxu0 0.0
        %2595 = vmatpush1.msra.mxu0 %v2310
        %2596 = vmatprep.subr.mxu0 0.0
        %2597 = vmatpush1.msra.mxu0 %v2311
        %2598 = vmatprep.subr.mxu0 0.0
        %2599 = vmatpush1.msra.mxu0 %v2312
        %2600 = vmatprep.subr.mxu0 0.0
        %2601 = vmatpush1.msra.mxu0 %v2313
        %2602 = vmatprep.mubr.f32.mxu0 %v1947
        %2603 = vmatmul.mubr.f32.gmra.mrb[0].mxu0 %v1946
        %v2604 = vpop.f32.mrb[0].mxu0
        %v2605 = vadd.f32 0.0, %v2604
        %v2606 = vpop.f32.mrb[0].mxu0
        %2607 = vdwg.mxu0
        %2608 = vmatprep.subr.mxu0 0.0
        %2609 = vmatpush1.msra.mxu0 %v2314
        %2610 = vmatprep.subr.mxu0 0.0
        %2611 = vmatpush1.msra.mxu0 %v2315
        %2612 = vmatprep.subr.mxu0 0.0
        %2613 = vmatpush1.msra.mxu0 %v2316
        %2614 = vmatprep.subr.mxu0 0.0
        %2615 = vmatpush1.msra.mxu0 %v2317
        %2616 = vmatprep.subr.mxu0 0.0
        %2617 = vmatpush1.msra.mxu0 %v2318
        %2618 = vmatprep.subr.mxu0 0.0
        %2619 = vmatpush1.msra.mxu0 %v2319
        %2620 = vmatprep.subr.mxu0 0.0
        %2621 = vmatpush1.msra.mxu0 %v2320
        %2622 = vmatprep.subr.mxu0 0.0
        %2623 = vmatpush1.msra.mxu0 %v2321
        %2624 = vmatprep.subr.mxu0 0.0
        %2625 = vmatpush1.msra.mxu0 %v2322
        %2626 = vmatprep.subr.mxu0 0.0
        %2627 = vmatpush1.msra.mxu0 %v2323
        %2628 = vmatprep.subr.mxu0 0.0
        %2629 = vmatpush1.msra.mxu0 %v2324
        %2630 = vmatprep.subr.mxu0 0.0
        %2631 = vmatpush1.msra.mxu0 %v2325
        %2632 = vmatprep.subr.mxu0 0.0
        %2633 = vmatpush1.msra.mxu0 %v2326
        %2634 = vmatprep.subr.mxu0 0.0
        %2635 = vmatpush1.msra.mxu0 %v2327
        %2636 = vmatprep.subr.mxu0 0.0
        %2637 = vmatpush1.msra.mxu0 %v2328
        %2638 = vmatprep.subr.mxu0 0.0
        %2639 = vmatpush1.msra.mxu0 %v2329
        %2640 = vmatprep.subr.mxu0 0.0
        %2641 = vmatpush1.msra.mxu0 %v2330
        %2642 = vmatprep.subr.mxu0 0.0
        %2643 = vmatpush1.msra.mxu0 %v2331
        %2644 = vmatprep.subr.mxu0 0.0
        %2645 = vmatpush1.msra.mxu0 %v2332
        %2646 = vmatprep.subr.mxu0 0.0
        %2647 = vmatpush1.msra.mxu0 %v2333
        %2648 = vmatprep.subr.mxu0 0.0
        %2649 = vmatpush1.msra.mxu0 %v2334
        %2650 = vmatprep.subr.mxu0 0.0
        %2651 = vmatpush1.msra.mxu0 %v2335
        %2652 = vmatprep.subr.mxu0 0.0
        %2653 = vmatpush1.msra.mxu0 %v2336
        %2654 = vmatprep.subr.mxu0 0.0
        %2655 = vmatpush1.msra.mxu0 %v2337
        %2656 = vmatprep.subr.mxu0 0.0
        %2657 = vmatpush1.msra.mxu0 %v2338
        %2658 = vmatprep.subr.mxu0 0.0
        %2659 = vmatpush1.msra.mxu0 %v2339
        %2660 = vmatprep.subr.mxu0 0.0
        %2661 = vmatpush1.msra.mxu0 %v2340
        %2662 = vmatprep.subr.mxu0 0.0
        %2663 = vmatpush1.msra.mxu0 %v2341
        %2664 = vmatprep.subr.mxu0 0.0
        %2665 = vmatpush1.msra.mxu0 %v2342
        %2666 = vmatprep.subr.mxu0 0.0
        %2667 = vmatpush1.msra.mxu0 %v2343
        %2668 = vmatprep.subr.mxu0 0.0
        %2669 = vmatpush1.msra.mxu0 %v2344
        %2670 = vmatprep.subr.mxu0 0.0
        %2671 = vmatpush1.msra.mxu0 %v2345
        %2672 = vmatprep.mubr.f32.mxu0 %v1949
        %2673 = vmatmul.mubr.f32.gmra.mrb[0].mxu0 %v1948
        %v2674 = vpop.f32.mrb[0].mxu0
        %v2675 = vadd.f32 %v2605, %v2674
        %v2676 = vpop.f32.mrb[0].mxu0
        %2677 = vdwg.mxu0
        %2678 = vmatprep.subr.mxu0 0.0
        %2679 = vmatpush1.msra.mxu0 %v2346
        %2680 = vmatprep.subr.mxu0 0.0
        %2681 = vmatpush1.msra.mxu0 %v2347
        %2682 = vmatprep.subr.mxu0 0.0
        %2683 = vmatpush1.msra.mxu0 %v2348
        %2684 = vmatprep.subr.mxu0 0.0
        %2685 = vmatpush1.msra.mxu0 %v2349
        %2686 = vmatprep.subr.mxu0 0.0
        %2687 = vmatpush1.msra.mxu0 %v2350
        %2688 = vmatprep.subr.mxu0 0.0
        %2689 = vmatpush1.msra.mxu0 %v2351
        %2690 = vmatprep.subr.mxu0 0.0
        %2691 = vmatpush1.msra.mxu0 %v2352
        %2692 = vmatprep.subr.mxu0 0.0
        %2693 = vmatpush1.msra.mxu0 %v2353
        %2694 = vmatprep.subr.mxu0 0.0
        %2695 = vmatpush1.msra.mxu0 %v2354
        %2696 = vmatprep.subr.mxu0 0.0
        %2697 = vmatpush1.msra.mxu0 %v2355
        %2698 = vmatprep.subr.mxu0 0.0
        %2699 = vmatpush1.msra.mxu0 %v2356
        %2700 = vmatprep.subr.mxu0 0.0
        %2701 = vmatpush1.msra.mxu0 %v2357
        %2702 = vmatprep.subr.mxu0 0.0
        %2703 = vmatpush1.msra.mxu0 %v2358
        %2704 = vmatprep.subr.mxu0 0.0
        %2705 = vmatpush1.msra.mxu0 %v2359
        %2706 = vmatprep.subr.mxu0 0.0
        %2707 = vmatpush1.msra.mxu0 %v2360
        %2708 = vmatprep.subr.mxu0 0.0
        %2709 = vmatpush1.msra.mxu0 %v2361
        %2710 = vmatprep.subr.mxu0 0.0
        %2711 = vmatpush1.msra.mxu0 %v2362
        %2712 = vmatprep.subr.mxu0 0.0
        %2713 = vmatpush1.msra.mxu0 %v2363
        %2714 = vmatprep.subr.mxu0 0.0
        %2715 = vmatpush1.msra.mxu0 %v2364
        %2716 = vmatprep.subr.mxu0 0.0
        %2717 = vmatpush1.msra.mxu0 %v2365
        %2718 = vmatprep.subr.mxu0 0.0
        %2719 = vmatpush1.msra.mxu0 %v2366
        %2720 = vmatprep.subr.mxu0 0.0
        %2721 = vmatpush1.msra.mxu0 %v2367
        %2722 = vmatprep.subr.mxu0 0.0
        %2723 = vmatpush1.msra.mxu0 %v2368
        %2724 = vmatprep.subr.mxu0 0.0
        %2725 = vmatpush1.msra.mxu0 %v2369
        %2726 = vmatprep.subr.mxu0 0.0
        %2727 = vmatpush1.msra.mxu0 %v2370
        %2728 = vmatprep.subr.mxu0 0.0
        %2729 = vmatpush1.msra.mxu0 %v2371
        %2730 = vmatprep.subr.mxu0 0.0
        %2731 = vmatpush1.msra.mxu0 %v2372
        %2732 = vmatprep.subr.mxu0 0.0
        %2733 = vmatpush1.msra.mxu0 %v2373
        %2734 = vmatprep.subr.mxu0 0.0
        %2735 = vmatpush1.msra.mxu0 %v2374
        %2736 = vmatprep.subr.mxu0 0.0
        %2737 = vmatpush1.msra.mxu0 %v2375
        %2738 = vmatprep.subr.mxu0 0.0
        %2739 = vmatpush1.msra.mxu0 %v2376
        %2740 = vmatprep.subr.mxu0 0.0
        %2741 = vmatpush1.msra.mxu0 %v2377
        %2742 = vmatprep.mubr.f32.mxu0 %v1951
        %2743 = vmatmul.mubr.f32.gmra.mrb[0].mxu0 %v1950
        %v2744 = vpop.f32.mrb[0].mxu0
        %v2745 = vadd.f32 %v2675, %v2744
        %v2746 = vpop.f32.mrb[0].mxu0
        %2747 = vdwg.mxu0
        %2748 = vmatprep.subr.mxu0 0.0
        %2749 = vmatpush1.msra.mxu0 %v2378
        %2750 = vmatprep.subr.mxu0 0.0
        %2751 = vmatpush1.msra.mxu0 %v2379
        %2752 = vmatprep.subr.mxu0 0.0
        %2753 = vmatpush1.msra.mxu0 %v2380
        %2754 = vmatprep.subr.mxu0 0.0
        %2755 = vmatpush1.msra.mxu0 %v2381
        %2756 = vmatprep.subr.mxu0 0.0
        %2757 = vmatpush1.msra.mxu0 %v2382
        %2758 = vmatprep.subr.mxu0 0.0
        %2759 = vmatpush1.msra.mxu0 %v2383
        %2760 = vmatprep.subr.mxu0 0.0
        %2761 = vmatpush1.msra.mxu0 %v2384
        %2762 = vmatprep.subr.mxu0 0.0
        %2763 = vmatpush1.msra.mxu0 %v2385
        %2764 = vmatprep.subr.mxu0 0.0
        %2765 = vmatpush1.msra.mxu0 %v2386
        %2766 = vmatprep.subr.mxu0 0.0
        %2767 = vmatpush1.msra.mxu0 %v2387
        %2768 = vmatprep.subr.mxu0 0.0
        %2769 = vmatpush1.msra.mxu0 %v2388
        %2770 = vmatprep.subr.mxu0 0.0
        %2771 = vmatpush1.msra.mxu0 %v2389
        %2772 = vmatprep.subr.mxu0 0.0
        %2773 = vmatpush1.msra.mxu0 %v2390
        %2774 = vmatprep.subr.mxu0 0.0
        %2775 = vmatpush1.msra.mxu0 %v2391
        %2776 = vmatprep.subr.mxu0 0.0
        %2777 = vmatpush1.msra.mxu0 %v2392
        %2778 = vmatprep.subr.mxu0 0.0
        %2779 = vmatpush1.msra.mxu0 %v2393
        %2780 = vmatprep.subr.mxu0 0.0
        %2781 = vmatpush1.msra.mxu0 %v2394
        %2782 = vmatprep.subr.mxu0 0.0
        %2783 = vmatpush1.msra.mxu0 %v2395
        %2784 = vmatprep.subr.mxu0 0.0
        %2785 = vmatpush1.msra.mxu0 %v2396
        %2786 = vmatprep.subr.mxu0 0.0
        %2787 = vmatpush1.msra.mxu0 %v2397
        %2788 = vmatprep.subr.mxu0 0.0
        %2789 = vmatpush1.msra.mxu0 %v2398
        %2790 = vmatprep.subr.mxu0 0.0
        %2791 = vmatpush1.msra.mxu0 %v2399
        %2792 = vmatprep.subr.mxu0 0.0
        %2793 = vmatpush1.msra.mxu0 %v2400
        %2794 = vmatprep.subr.mxu0 0.0
        %2795 = vmatpush1.msra.mxu0 %v2401
        %2796 = vmatprep.subr.mxu0 0.0
        %2797 = vmatpush1.msra.mxu0 %v2402
        %2798 = vmatprep.subr.mxu0 0.0
        %2799 = vmatpush1.msra.mxu0 %v2403
        %2800 = vmatprep.subr.mxu0 0.0
        %2801 = vmatpush1.msra.mxu0 %v2404
        %2802 = vmatprep.subr.mxu0 0.0
        %2803 = vmatpush1.msra.mxu0 %v2405
        %2804 = vmatprep.subr.mxu0 0.0
        %2805 = vmatpush1.msra.mxu0 %v2406
        %2806 = vmatprep.subr.mxu0 0.0
        %2807 = vmatpush1.msra.mxu0 %v2407
        %2808 = vmatprep.subr.mxu0 0.0
        %2809 = vmatpush1.msra.mxu0 %v2408
        %2810 = vmatprep.subr.mxu0 0.0
        %2811 = vmatpush1.msra.mxu0 %v2409
        %2812 = vmatprep.mubr.f32.mxu0 %v1953
        %2813 = vmatmul.mubr.f32.gmra.mrb[0].mxu0 %v1952
        %v2814 = vpop.f32.mrb[0].mxu0
        %v2815 = vadd.f32 %v2745, %v2814
        %v2816 = vpop.f32.mrb[0].mxu0
        %2817 = vdwg.mxu0
        %2818 = vmatprep.subr.mxu0 0.0
        %2819 = vmatpush1.msra.mxu0 %v2410
        %2820 = vmatprep.subr.mxu0 0.0
        %2821 = vmatpush1.msra.mxu0 %v2411
        %2822 = vmatprep.subr.mxu0 0.0
        %2823 = vmatpush1.msra.mxu0 %v2412
        %2824 = vmatprep.subr.mxu0 0.0
        %2825 = vmatpush1.msra.mxu0 %v2413
        %2826 = vmatprep.subr.mxu0 0.0
        %2827 = vmatpush1.msra.mxu0 %v2414
        %2828 = vmatprep.subr.mxu0 0.0
        %2829 = vmatpush1.msra.mxu0 %v2415
        %2830 = vmatprep.subr.mxu0 0.0
        %2831 = vmatpush1.msra.mxu0 %v2416
        %2832 = vmatprep.subr.mxu0 0.0
        %2833 = vmatpush1.msra.mxu0 %v2417
        %2834 = vmatprep.subr.mxu0 0.0
        %2835 = vmatpush1.msra.mxu0 %v2418
        %2836 = vmatprep.subr.mxu0 0.0
        %2837 = vmatpush1.msra.mxu0 %v2419
        %2838 = vmatprep.subr.mxu0 0.0
        %2839 = vmatpush1.msra.mxu0 %v2420
        %2840 = vmatprep.subr.mxu0 0.0
        %2841 = vmatpush1.msra.mxu0 %v2421
        %2842 = vmatprep.subr.mxu0 0.0
        %2843 = vmatpush1.msra.mxu0 %v2422
        %2844 = vmatprep.subr.mxu0 0.0
        %2845 = vmatpush1.msra.mxu0 %v2423
        %2846 = vmatprep.subr.mxu0 0.0
        %2847 = vmatpush1.msra.mxu0 %v2424
        %2848 = vmatprep.subr.mxu0 0.0
        %2849 = vmatpush1.msra.mxu0 %v2425
        %2850 = vmatprep.subr.mxu0 0.0
        %2851 = vmatpush1.msra.mxu0 %v2426
        %2852 = vmatprep.subr.mxu0 0.0
        %2853 = vmatpush1.msra.mxu0 %v2427
        %2854 = vmatprep.subr.mxu0 0.0
        %2855 = vmatpush1.msra.mxu0 %v2428
        %2856 = vmatprep.subr.mxu0 0.0
        %2857 = vmatpush1.msra.mxu0 %v2429
        %2858 = vmatprep.subr.mxu0 0.0
        %2859 = vmatpush1.msra.mxu0 %v2430
        %2860 = vmatprep.subr.mxu0 0.0
        %2861 = vmatpush1.msra.mxu0 %v2431
        %2862 = vmatprep.subr.mxu0 0.0
        %2863 = vmatpush1.msra.mxu0 %v2432
        %2864 = vmatprep.subr.mxu0 0.0
        %2865 = vmatpush1.msra.mxu0 %v2433
        %2866 = vmatprep.subr.mxu0 0.0
        %2867 = vmatpush1.msra.mxu0 %v2434
        %2868 = vmatprep.subr.mxu0 0.0
        %2869 = vmatpush1.msra.mxu0 %v2435
        %2870 = vmatprep.subr.mxu0 0.0
        %2871 = vmatpush1.msra.mxu0 %v2436
        %2872 = vmatprep.subr.mxu0 0.0
        %2873 = vmatpush1.msra.mxu0 %v2437
        %2874 = vmatprep.subr.mxu0 0.0
        %2875 = vmatpush1.msra.mxu0 %v2438
        %2876 = vmatprep.subr.mxu0 0.0
        %2877 = vmatpush1.msra.mxu0 %v2439
        %2878 = vmatprep.subr.mxu0 0.0
        %2879 = vmatpush1.msra.mxu0 %v2440
        %2880 = vmatprep.subr.mxu0 0.0
        %2881 = vmatpush1.msra.mxu0 %v2441
        %2882 = vmatprep.mubr.f32.mxu0 %v1955
        %2883 = vmatmul.mubr.f32.gmra.mrb[0].mxu0 %v1954
        %v2884 = vpop.f32.mrb[0].mxu0
        %v2885 = vadd.f32 %v2815, %v2884
        %v2886 = vpop.f32.mrb[0].mxu0
        %2887 = vdwg.mxu0
        %2888 = vmatprep.subr.mxu0 0.0
        %2889 = vmatpush1.msra.mxu0 %v2442
        %2890 = vmatprep.subr.mxu0 0.0
        %2891 = vmatpush1.msra.mxu0 %v2443
        %2892 = vmatprep.subr.mxu0 0.0
        %2893 = vmatpush1.msra.mxu0 %v2444
        %2894 = vmatprep.subr.mxu0 0.0
        %2895 = vmatpush1.msra.mxu0 %v2445
        %2896 = vmatprep.subr.mxu0 0.0
        %2897 = vmatpush1.msra.mxu0 %v2446
        %2898 = vmatprep.subr.mxu0 0.0
        %2899 = vmatpush1.msra.mxu0 %v2447
        %2900 = vmatprep.subr.mxu0 0.0
        %2901 = vmatpush1.msra.mxu0 %v2448
        %2902 = vmatprep.subr.mxu0 0.0
        %2903 = vmatpush1.msra.mxu0 %v2449
        %2904 = vmatprep.subr.mxu0 0.0
        %2905 = vmatpush1.msra.mxu0 %v2450
        %2906 = vmatprep.subr.mxu0 0.0
        %2907 = vmatpush1.msra.mxu0 %v2451
        %2908 = vmatprep.subr.mxu0 0.0
        %2909 = vmatpush1.msra.mxu0 %v2452
        %2910 = vmatprep.subr.mxu0 0.0
        %2911 = vmatpush1.msra.mxu0 %v2453
        %2912 = vmatprep.subr.mxu0 0.0
        %2913 = vmatpush1.msra.mxu0 %v2454
        %2914 = vmatprep.subr.mxu0 0.0
        %2915 = vmatpush1.msra.mxu0 %v2455
        %2916 = vmatprep.subr.mxu0 0.0
        %2917 = vmatpush1.msra.mxu0 %v2456
        %2918 = vmatprep.subr.mxu0 0.0
        %2919 = vmatpush1.msra.mxu0 %v2457
        %2920 = vmatprep.subr.mxu0 0.0
        %2921 = vmatpush1.msra.mxu0 %v2458
        %2922 = vmatprep.subr.mxu0 0.0
        %2923 = vmatpush1.msra.mxu0 %v2459
        %2924 = vmatprep.subr.mxu0 0.0
        %2925 = vmatpush1.msra.mxu0 %v2460
        %2926 = vmatprep.subr.mxu0 0.0
        %2927 = vmatpush1.msra.mxu0 %v2461
        %2928 = vmatprep.subr.mxu0 0.0
        %2929 = vmatpush1.msra.mxu0 %v2462
        %2930 = vmatprep.subr.mxu0 0.0
        %2931 = vmatpush1.msra.mxu0 %v2463
        %2932 = vmatprep.subr.mxu0 0.0
        %2933 = vmatpush1.msra.mxu0 %v2464
        %2934 = vmatprep.subr.mxu0 0.0
        %2935 = vmatpush1.msra.mxu0 %v2465
        %2936 = vmatprep.subr.mxu0 0.0
        %2937 = vmatpush1.msra.mxu0 %v2466
        %2938 = vmatprep.subr.mxu0 0.0
        %2939 = vmatpush1.msra.mxu0 %v2467
        %2940 = vmatprep.subr.mxu0 0.0
        %2941 = vmatpush1.msra.mxu0 %v2468
        %2942 = vmatprep.subr.mxu0 0.0
        %2943 = vmatpush1.msra.mxu0 %v2469
        %2944 = vmatprep.subr.mxu0 0.0
        %2945 = vmatpush1.msra.mxu0 %v2470
        %2946 = vmatprep.subr.mxu0 0.0
        %2947 = vmatpush1.msra.mxu0 %v2471
        %2948 = vmatprep.subr.mxu0 0.0
        %2949 = vmatpush1.msra.mxu0 %v2472
        %2950 = vmatprep.subr.mxu0 0.0
        %2951 = vmatpush1.msra.mxu0 %v2473
        %2952 = vmatprep.mubr.f32.mxu0 %v1957
        %2953 = vmatmul.mubr.f32.gmra.mrb[0].mxu0 %v1956
        %v2954 = vpop.f32.mrb[0].mxu0
        %v2955 = vadd.f32 %v2885, %v2954
        %v2956 = vpop.f32.mrb[0].mxu0
        %2957 = vdwg.mxu0
        %2958 = vmatprep.subr.mxu0 0.0
        %2959 = vmatpush1.msra.mxu0 %v2474
        %2960 = vmatprep.subr.mxu0 0.0
        %2961 = vmatpush1.msra.mxu0 %v2475
        %2962 = vmatprep.subr.mxu0 0.0
        %2963 = vmatpush1.msra.mxu0 %v2476
        %2964 = vmatprep.subr.mxu0 0.0
        %2965 = vmatpush1.msra.mxu0 %v2477
        %2966 = vmatprep.subr.mxu0 0.0
        %2967 = vmatpush1.msra.mxu0 %v2478
        %2968 = vmatprep.subr.mxu0 0.0
        %2969 = vmatpush1.msra.mxu0 %v2479
        %2970 = vmatprep.subr.mxu0 0.0
        %2971 = vmatpush1.msra.mxu0 %v2480
        %2972 = vmatprep.subr.mxu0 0.0
        %2973 = vmatpush1.msra.mxu0 %v2481
        %2974 = vmatprep.subr.mxu0 0.0
        %2975 = vmatpush1.msra.mxu0 %v2482
        %2976 = vmatprep.subr.mxu0 0.0
        %2977 = vmatpush1.msra.mxu0 %v2483
        %2978 = vmatprep.subr.mxu0 0.0
        %2979 = vmatpush1.msra.mxu0 %v2484
        %2980 = vmatprep.subr.mxu0 0.0
        %2981 = vmatpush1.msra.mxu0 %v2485
        %2982 = vmatprep.subr.mxu0 0.0
        %2983 = vmatpush1.msra.mxu0 %v2486
        %2984 = vmatprep.subr.mxu0 0.0
        %2985 = vmatpush1.msra.mxu0 %v2487
        %2986 = vmatprep.subr.mxu0 0.0
        %2987 = vmatpush1.msra.mxu0 %v2488
        %2988 = vmatprep.subr.mxu0 0.0
        %2989 = vmatpush1.msra.mxu0 %v2489
        %2990 = vmatprep.subr.mxu0 0.0
        %2991 = vmatpush1.msra.mxu0 %v2490
        %2992 = vmatprep.subr.mxu0 0.0
        %2993 = vmatpush1.msra.mxu0 %v2491
        %2994 = vmatprep.subr.mxu0 0.0
        %2995 = vmatpush1.msra.mxu0 %v2492
        %2996 = vmatprep.subr.mxu0 0.0
        %2997 = vmatpush1.msra.mxu0 %v2493
        %2998 = vmatprep.subr.mxu0 0.0
        %2999 = vmatpush1.msra.mxu0 %v2494
        %3000 = vmatprep.subr.mxu0 0.0
        %3001 = vmatpush1.msra.mxu0 %v2495
        %3002 = vmatprep.subr.mxu0 0.0
        %3003 = vmatpush1.msra.mxu0 %v2496
        %3004 = vmatprep.subr.mxu0 0.0
        %3005 = vmatpush1.msra.mxu0 %v2497
        %3006 = vmatprep.subr.mxu0 0.0
        %3007 = vmatpush1.msra.mxu0 %v2498
        %3008 = vmatprep.subr.mxu0 0.0
        %3009 = vmatpush1.msra.mxu0 %v2499
        %3010 = vmatprep.subr.mxu0 0.0
        %3011 = vmatpush1.msra.mxu0 %v2500
        %3012 = vmatprep.subr.mxu0 0.0
        %3013 = vmatpush1.msra.mxu0 %v2501
        %3014 = vmatprep.subr.mxu0 0.0
        %3015 = vmatpush1.msra.mxu0 %v2502
        %3016 = vmatprep.subr.mxu0 0.0
        %3017 = vmatpush1.msra.mxu0 %v2503
        %3018 = vmatprep.subr.mxu0 0.0
        %3019 = vmatpush1.msra.mxu0 %v2504
        %3020 = vmatprep.subr.mxu0 0.0
        %3021 = vmatpush1.msra.mxu0 %v2505
        %3022 = vmatprep.mubr.f32.mxu0 %v1959
        %3023 = vmatmul.mubr.f32.gmra.mrb[0].mxu0 %v1958
        %v3024 = vpop.f32.mrb[0].mxu0
        %v3025 = vadd.f32 %v2955, %v3024
        %v3026 = vpop.f32.mrb[0].mxu0
        %3027 = vdwg.mxu0
        %3028 = vmatprep.subr.mxu0 0.0
        %3029 = vmatpush1.msra.mxu0 %v2506
        %3030 = vmatprep.subr.mxu0 0.0
        %3031 = vmatpush1.msra.mxu0 %v2507
        %3032 = vmatprep.subr.mxu0 0.0
        %3033 = vmatpush1.msra.mxu0 %v2508
        %3034 = vmatprep.subr.mxu0 0.0
        %3035 = vmatpush1.msra.mxu0 %v2509
        %3036 = vmatprep.subr.mxu0 0.0
        %3037 = vmatpush1.msra.mxu0 %v2510
        %3038 = vmatprep.subr.mxu0 0.0
        %3039 = vmatpush1.msra.mxu0 %v2511
        %3040 = vmatprep.subr.mxu0 0.0
        %3041 = vmatpush1.msra.mxu0 %v2512
        %3042 = vmatprep.subr.mxu0 0.0
        %3043 = vmatpush1.msra.mxu0 %v2513
        %3044 = vmatprep.subr.mxu0 0.0
        %3045 = vmatpush1.msra.mxu0 %v2514
        %3046 = vmatprep.subr.mxu0 0.0
        %3047 = vmatpush1.msra.mxu0 %v2515
        %3048 = vmatprep.subr.mxu0 0.0
        %3049 = vmatpush1.msra.mxu0 %v2516
        %3050 = vmatprep.subr.mxu0 0.0
        %3051 = vmatpush1.msra.mxu0 %v2517
        %3052 = vmatprep.subr.mxu0 0.0
        %3053 = vmatpush1.msra.mxu0 %v2518
        %3054 = vmatprep.subr.mxu0 0.0
        %3055 = vmatpush1.msra.mxu0 %v2519
        %3056 = vmatprep.subr.mxu0 0.0
        %3057 = vmatpush1.msra.mxu0 %v2520
        %3058 = vmatprep.subr.mxu0 0.0
        %3059 = vmatpush1.msra.mxu0 %v2521
        %3060 = vmatprep.subr.mxu0 0.0
        %3061 = vmatpush1.msra.mxu0 %v2522
        %3062 = vmatprep.subr.mxu0 0.0
        %3063 = vmatpush1.msra.mxu0 %v2523
        %3064 = vmatprep.subr.mxu0 0.0
        %3065 = vmatpush1.msra.mxu0 %v2524
        %3066 = vmatprep.subr.mxu0 0.0
        %3067 = vmatpush1.msra.mxu0 %v2525
        %3068 = vmatprep.subr.mxu0 0.0
        %3069 = vmatpush1.msra.mxu0 %v2526
        %3070 = vmatprep.subr.mxu0 0.0
        %3071 = vmatpush1.msra.mxu0 %v2527
        %3072 = vmatprep.subr.mxu0 0.0
        %3073 = vmatpush1.msra.mxu0 %v2528
        %3074 = vmatprep.subr.mxu0 0.0
        %3075 = vmatpush1.msra.mxu0 %v2529
        %3076 = vmatprep.subr.mxu0 0.0
        %3077 = vmatpush1.msra.mxu0 %v2530
        %3078 = vmatprep.subr.mxu0 0.0
        %3079 = vmatpush1.msra.mxu0 %v2531
        %3080 = vmatprep.subr.mxu0 0.0
        %3081 = vmatpush1.msra.mxu0 %v2532
        %3082 = vmatprep.subr.mxu0 0.0
        %3083 = vmatpush1.msra.mxu0 %v2533
        %3084 = vmatprep.subr.mxu0 0.0
        %3085 = vmatpush1.msra.mxu0 %v2534
        %3086 = vmatprep.subr.mxu0 0.0
        %3087 = vmatpush1.msra.mxu0 %v2535
        %3088 = vmatprep.subr.mxu0 0.0
        %3089 = vmatpush1.msra.mxu0 %v2536
        %3090 = vmatprep.subr.mxu0 0.0
        %3091 = vmatpush1.msra.mxu0 %v2537
        %3092 = vmatprep.mubr.f32.mxu0 %v1961
        %3093 = vmatmul.mubr.f32.gmra.mrb[0].mxu0 %v1960
        %v3094 = vpop.f32.mrb[0].mxu0
        %v3095 = vadd.f32 %v3025, %v3094
        %v3096 = vpop.f32.mrb[0].mxu0
        %3097 = vdwg.mxu0
        %v3098 = vlaneseq
        %v3099 = vshrl.u32 %v3098, 7
        %v3100 = vsub.s32 6, %v3099
        %v3101 = vrot.slane %v651, %v3100
        %v3102 = vmul.f32 %v3095, %v3101
        %v3103 = vlaneseq
        %v3104 = vshrl.u32 %v3103, 7
        %v3105 = vsub.s32 1, %v3104
        %v3106 = vrot.slane %v651, %v3105
        %v3107 = vadd.f32 %v3102, %v3106
        %v3108 = vadd.f32 %v762, %v3107
        %v3109 = vsel %vm694, %v3108, 0.0
        %3110 = vadd.xlane.f32.xlu0 %v3109
        %v3111 = vpop.xlane.xlu0 %3110
        %v3112 = vmul.f32 %v3111, %v742
        %v3113 = vsub.f32 %v3108, %v3112
        %v3114 = vmul.f32 %v3113, %v3113
        %v3115 = vsel %vm694, %v3114, 0.0
        %3116 = vadd.xlane.f32.xlu0 %v3115
        %v3117 = vpop.xlane.xlu0 %3116
        %v3118 = vmul.f32 %v3117, %v742
        %v3119 = vadd.f32 %v3118, 1e-05
        %v3120 = vrsqrt.pop %v3119
        %v3121 = vmul.f32 %v3113, %v3120
        %v3122 = vlaneseq
        %v3123 = vshrl.u32 %v3122, 7
        %v3124 = vsub.s32 4, %v3123
        %v3125 = vrot.slane %v651, %v3124
        %v3126 = vmul.f32 %v3121, %v3125
        %v3127 = vlaneseq
        %v3128 = vshrl.u32 %v3127, 7
        %v3129 = vsub.s32 5, %v3128
        %v3130 = vrot.slane %v651, %v3129
        %v3131 = vadd.f32 %v3126, %v3130
        %3132 = vst.msk [vmem:[#allocation2] sm:$0xff] %vm694, %v3131
        %p3133 = scmp.eq.s32.totalorder %s34, 2
        // Predicated region
        $region65: #{tpu_custom_call.1} parent=59 // pred_check
          %p3134 = pneg %p3133
        $region66: #{tpu_custom_call.1} parent=59 // pred_check_branch
          %3136 = sbr.rel (%p3134) target = $region68
        $region67: #{tpu_custom_call.1} parent=59 // pred_region
          %v3137 = vpack.c.bf16 %v3131, %v3131
          %v3138 = vld [vmem:[%s8] sm:$0xf]
          %v3139 = vld [vmem:[%s8 + $0x4] sm:$0xf]
          %v3140 = vld [vmem:[%s8 + $0x8] sm:$0xf]
          %v3141 = vld [vmem:[%s8 + $0xc] sm:$0xf]
          %v3142 = vld [vmem:[%s8 + $0x10] sm:$0xf]
          %v3143 = vld [vmem:[%s8 + $0x14] sm:$0xf]
          %v3144 = vld [vmem:[%s8 + $0x18] sm:$0xf]
          %v3145 = vld [vmem:[%s8 + $0x1c] sm:$0xf]
          %v3146 = vld [vmem:[%s9] sm:$0x1]
          %v3148 = vlaneseq
          %v3149 = vshrl.u32 %v3148, 7
          %v3150 = vsub.s32 0, %v3149
          %v3151 = vrot.slane %v3146, %v3150
          %v3161 = vunpack.c.l.b16 %v3138
          %v3162 = vunpack.c.l.b16 %v3139
          %v3163 = vunpack.c.l.b16 %v3140
          %v3164 = vunpack.c.l.b16 %v3141
          %v3165 = vunpack.c.l.b16 %v3142
          %v3166 = vunpack.c.l.b16 %v3143
          %v3167 = vunpack.c.l.b16 %v3144
          %v3168 = vunpack.c.l.b16 %v3145
          %v3169 = vpack.c.b16 %v3162, %v3161
          %v3170 = vpack.c.b16 %v3164, %v3163
          %v3171 = vpack.c.b16 %v3166, %v3165
          %v3172 = vpack.c.b16 %v3168, %v3167
          %v3178 = vsel %vm694, %v3137, 0
          %3180 = vmatprep.subr.bf16.mxu0 0
          %3181 = vmatpush1.bf16.msra.mxu0 %v3169
          %3182 = vmatprep.subr.bf16.mxu0 0
          %3183 = vmatpush1.bf16.msra.mxu0 %v3170
          %3184 = vmatprep.subr.bf16.mxu0 0
          %3185 = vmatpush1.bf16.msra.mxu0 %v3171
          %3186 = vmatprep.subr.bf16.mxu0 0
          %3187 = vmatpush1.bf16.msra.mxu0 %v3172
          %3188 = vmatprep.subr.bf16.mxu0 0
          %3189 = vmatpush1.bf16.msra.mxu0 0
          %3190 = vmatprep.subr.bf16.mxu0 0
          %3191 = vmatpush1.bf16.msra.mxu0 0
          %3192 = vmatprep.subr.bf16.mxu0 0
          %3193 = vmatpush1.bf16.msra.mxu0 0
          %3194 = vmatprep.subr.bf16.mxu0 0
          %3195 = vmatpush1.bf16.msra.mxu0 0
          %3196 = vmatprep.subr.bf16.mxu0 0
          %3197 = vmatpush1.bf16.msra.mxu0 0
          %3198 = vmatprep.subr.bf16.mxu0 0
          %3199 = vmatpush1.bf16.msra.mxu0 0
          %3200 = vmatprep.subr.bf16.mxu0 0
          %3201 = vmatpush1.bf16.msra.mxu0 0
          %3202 = vmatprep.subr.bf16.mxu0 0
          %3203 = vmatpush1.bf16.msra.mxu0 0
          %3204 = vmatprep.subr.bf16.mxu0 0
          %3205 = vmatpush1.bf16.msra.mxu0 0
          %3206 = vmatprep.subr.bf16.mxu0 0
          %3207 = vmatpush1.bf16.msra.mxu0 0
          %3208 = vmatprep.subr.bf16.mxu0 0
          %3209 = vmatpush1.bf16.msra.mxu0 0
          %3210 = vmatprep.subr.bf16.mxu0 0
          %3211 = vmatpush1.bf16.msra.mxu0 0
          %3212 = vmatprep.mubr.bf16.mxu0 0
          %3213 = vmatmul.mubr.bf16.gmra.mrb[0].mxu0 %v3178
          %v3214 = vpop.f32.mrb[0].mxu0
          %v3215 = vadd.f32 %v3151, %v3214
          %v3216 = vpop.f32.mrb[0].mxu0
          %v3217 = vpop.f32.mrb[0].mxu0
          %v3218 = vpop.f32.mrb[0].mxu0
          %3219 = vdwg.mxu0
          %vm3220 = vcmask 64512
          %3221 = vst.msk [vmem:[#allocation3] sm:$0xff] %vm3220, %v3215
          %3223 = vrot.lane.b32.xlu0 %v3215, 120
          %v3224 = vpop.permute.xlu0 %3223
          %3226 = vst.msk [vmem:[#allocation5] sm:$0xff] %vm3220, %v3224
          %3227 = vrot.lane.b32.xlu0 %v3215, 112
          %v3228 = vpop.permute.xlu0 %3227
          %3230 = vst.msk [vmem:[#allocation7] sm:$0xff] %vm3220, %v3228
          %v3231 = vmul.f32 %v3215, 1.442695
          %v3232 = vpow.pop %v3231
          %3234 = vrot.lane.b32.xlu0 %v3232, 120
          %v3235 = vpop.permute.xlu0 %3234
          %3237 = vst.msk [vmem:[#allocation8] sm:$0xff] %vm3220, %v3235
          %v3238 = vxor.u32 %v3215, 2147483648
          %v3239 = vmul.f32 %v3238, 1.442695
          %v3240 = vpow.pop %v3239
          %v3241 = vadd.f32 %v3240, 1.0
          %v3242 = vrcp.pop %v3241
          %v3243 = vmul.f32 1.0, %v3242
          %v3244 = vmul.f32 %v3243, 27.0
          %v3245 = vadd.f32 %v3244, 3.0
          %3247 = vrot.lane.b32.xlu0 %v3245, 112
          %v3248 = vpop.permute.xlu0 %3247
          %3250 = vst.msk [vmem:[#allocation10] sm:$0xff] %vm3220, %v3248
        $region68: #{tpu_custom_call.1} parent=59 // pred_fallthru
          _
        // Predicated region
        $region69: #{tpu_custom_call.1} parent=59 // pred_check
          %p3251 = pneg %p299
        $region70: #{tpu_custom_call.1} parent=59 // pred_check_branch
          %3253 = sbr.rel (%p3251) target = $region72
        $region71: #{tpu_custom_call.1} parent=59 // pred_region
          %s3255 = ssub.s32 128, 128
          %3256 = vsyncadd [#allocation4], %s3255
          %s3257 = smul.addr %s33, 128
          %s3258 = scalar_lea.hbm %s10, %s3257
          %s3260 = sshll.u32 [#allocation3], 4
          %s3261 = int_to_ptr.vmem [resolvable:$true] %s3260
          %3263 = dma.vmem_to_hbm [thread:$0]  %s3261, 128, %s3258, [#allocation4]
        $region72: #{tpu_custom_call.1} parent=59 // pred_fallthru
          _
        // Predicated region
        $region73: #{tpu_custom_call.1} parent=59 // pred_check
          %p3264 = pneg %p325
        $region74: #{tpu_custom_call.1} parent=59 // pred_check_branch
          %3266 = sbr.rel (%p3264) target = $region76
        $region75: #{tpu_custom_call.1} parent=59 // pred_region
          %s3268 = ssub.s32 128, 128
          %3269 = vsyncadd [#allocation6], %s3268
          %s3270 = smul.addr %s33, 128
          %s3271 = scalar_lea.hbm %s11, %s3270
          %s3273 = sshll.u32 [#allocation5], 4
          %s3274 = int_to_ptr.vmem [resolvable:$true] %s3273
          %3276 = dma.vmem_to_hbm [thread:$0]  %s3274, 128, %s3271, [#allocation6]
        $region76: #{tpu_custom_call.1} parent=59 // pred_fallthru
          _
        // Predicated region
        $region77: #{tpu_custom_call.1} parent=59 // pred_check
          %p3277 = pneg %p351
        $region78: #{tpu_custom_call.1} parent=59 // pred_check_branch
          %3279 = sbr.rel (%p3277) target = $region80
        $region79: #{tpu_custom_call.1} parent=59 // pred_region
          %s3281 = ssub.s32 128, 128
          %3282 = vsyncadd [#allocation6], %s3281
          %s3283 = smul.addr %s33, 128
          %s3284 = scalar_lea.hbm %s12, %s3283
          %s3286 = sshll.u32 [#allocation7], 4
          %s3287 = int_to_ptr.vmem [resolvable:$true] %s3286
          %3289 = dma.vmem_to_hbm [thread:$0]  %s3287, 128, %s3284, [#allocation6]
        $region80: #{tpu_custom_call.1} parent=59 // pred_fallthru
          _
        // Predicated region
        $region81: #{tpu_custom_call.1} parent=59 // pred_check
          %p3290 = pneg %p377
        $region82: #{tpu_custom_call.1} parent=59 // pred_check_branch
          %3292 = sbr.rel (%p3290) target = $region84
        $region83: #{tpu_custom_call.1} parent=59 // pred_region
          %s3294 = ssub.s32 128, 128
          %3295 = vsyncadd [#allocation9], %s3294
          %s3296 = smul.addr %s33, 128
          %s3297 = scalar_lea.hbm %s13, %s3296
          %s3299 = sshll.u32 [#allocation8], 4
          %s3300 = int_to_ptr.vmem [resolvable:$true] %s3299
          %3302 = dma.vmem_to_hbm [thread:$0]  %s3300, 128, %s3297, [#allocation9]
        $region84: #{tpu_custom_call.1} parent=59 // pred_fallthru
          _
        // Predicated region
        $region85: #{tpu_custom_call.1} parent=59 // pred_check
          %p3303 = pneg %p403
        $region86: #{tpu_custom_call.1} parent=59 // pred_check_branch
          %3305 = sbr.rel (%p3303) target = $region88
        $region87: #{tpu_custom_call.1} parent=59 // pred_region
          %s3307 = ssub.s32 128, 128
          %3308 = vsyncadd [#allocation9], %s3307
          %s3309 = smul.addr %s33, 128
          %s3310 = scalar_lea.hbm %s14, %s3309
          %s3312 = sshll.u32 [#allocation10], 4
          %s3313 = int_to_ptr.vmem [resolvable:$true] %s3312
          %3315 = dma.vmem_to_hbm [thread:$0]  %s3313, 128, %s3310, [#allocation9]
        $region88: #{tpu_custom_call.1} parent=59 // pred_fallthru
          _
        // Predicated region
        $region89: #{tpu_custom_call.1} parent=59 // pred_check
          %p3316 = pneg %p299
        $region90: #{tpu_custom_call.1} parent=59 // pred_check_branch
          %3318 = sbr.rel (%p3316) target = $region92
        $region91: #{tpu_custom_call.1} parent=59 // pred_region
          %3319 = dma.done [#allocation4], 128
        $region92: #{tpu_custom_call.1} parent=59 // pred_fallthru
          _
        // Predicated region
        $region93: #{tpu_custom_call.1} parent=59 // pred_check
          %p3320 = pneg %p325
        $region94: #{tpu_custom_call.1} parent=59 // pred_check_branch
          %3322 = sbr.rel (%p3320) target = $region96
        $region95: #{tpu_custom_call.1} parent=59 // pred_region
          %3323 = dma.done [#allocation6], 128
        $region96: #{tpu_custom_call.1} parent=59 // pred_fallthru
          _
        // Predicated region
        $region97: #{tpu_custom_call.1} parent=59 // pred_check
          %p3324 = pneg %p351
        $region98: #{tpu_custom_call.1} parent=59 // pred_check_branch
          %3326 = sbr.rel (%p3324) target = $region100
        $region99: #{tpu_custom_call.1} parent=59 // pred_region
          %3327 = dma.done [#allocation6], 128
        $region100: #{tpu_custom_call.1} parent=59 // pred_fallthru
          _
        // Predicated region
        $region101: #{tpu_custom_call.1} parent=59 // pred_check
          %p3328 = pneg %p377
        $region102: #{tpu_custom_call.1} parent=59 // pred_check_branch
          %3330 = sbr.rel (%p3328) target = $region104
        $region103: #{tpu_custom_call.1} parent=59 // pred_region
          %3331 = dma.done [#allocation9], 128
        $region104: #{tpu_custom_call.1} parent=59 // pred_fallthru
          _
        // Predicated region
        $region105: #{tpu_custom_call.1} parent=59 // pred_check
          %p3332 = pneg %p403
        $region106: #{tpu_custom_call.1} parent=59 // pred_check_branch
          %3334 = sbr.rel (%p3332) target = $region108
        $region107: #{tpu_custom_call.1} parent=59 // pred_region
          %3335 = dma.done [#allocation9], 128
        $region108: #{tpu_custom_call.1} parent=59 // pred_fallthru
          _
      $region60: #{tpu_custom_call.1} parent=5 // pred_fallthru
        _
      %p3336 = scmp.le.s32.totalorder 2, %s24
      // Predicated region
      $region109: #{tpu_custom_call.1} parent=5 // pred_check
        %p3337 = pneg %p3336
      $region110: #{tpu_custom_call.1} parent=5 // pred_check_branch
        %3339 = sbr.rel (%p3337) target = $region112
      $region111: #{tpu_custom_call.1} parent=5 // pred_region
        %s3340 = ssub.s32 %s24, 2
      $region112: #{tpu_custom_call.1} parent=5 // pred_fallthru
        _
    $region6: #{tpu_custom_call.1} parent=1 // loop_footer
      %s28 = sadd.s32 1, %s24
    $region7: #{tpu_custom_call.1} parent=1 // loop_footer_branch
      %23 = sbr.rel target = $region3
    $region8: #{tpu_custom_call.1} parent=1 // loop_exit
      _
    %3341 = vsyncpa [#allocation4], 1
    %s3342 = scalar_lea.sflag [#allocation4], 1
    %3343 = vsyncpa %s3342, 1
    %3344 = vsyncpa [#allocation6], 1
    %3345 = vsyncpa [#allocation9], 1

</llo_original>
